<compile_context>
chip_gen: v7x
topology: tpu7x:2x2x1
jax: 0.10.0
libtpu: 0.0.40
codegen_flags: <defaults>
</compile_context>

<pallas_src>
import functools
import math

import jax
import jax.numpy as jnp
from jax.experimental import pallas as pl
from jax.experimental.pallas import tpu as pltpu


def encoder_layer_kernel(x_q_ref, x_kv_ref, mask_ref,
                         wq_ref, bq_ref, wk_ref, bk_ref, wv_ref, bv_ref,
                         wo_ref, bo_ref,
                         w1_ref, b1_ref, w2_ref, b2_ref,
                         ln1_g_ref, ln1_b_ref, ln2_g_ref, ln2_b_ref,
                         o_ref, *, num_heads, eps):
    xq = x_q_ref[0].astype(jnp.float32)     # (TQ, D) query / residual rows
    xkv = x_kv_ref[0].astype(jnp.float32)   # (S, D) full sequence for K/V
    mask = mask_ref[0]                      # (1, S) key mask, broadcasts over query rows

    TQ, D = xq.shape
    dk = D // num_heads
    scale = 1.0 / math.sqrt(dk)

    def layer_norm(v, g_ref, b_ref):
        mean = jnp.mean(v, axis=-1, keepdims=True)
        # torch .std() is unbiased (N-1); eps is added to std (not var).
        var = jnp.sum((v - mean) ** 2, axis=-1, keepdims=True) * (1.0 / (D - 1))
        std = jnp.sqrt(var)
        return g_ref[:] * (v - mean) * pl.reciprocal(std + eps) + b_ref[:]

    # ---------------- sublayer 0: x + self_attn(LN(x)) ----------------
    xn_q = layer_norm(xq, ln1_g_ref, ln1_b_ref).astype(jnp.bfloat16)     # (TQ, D)
    xn_kv = layer_norm(xkv, ln1_g_ref, ln1_b_ref).astype(jnp.bfloat16)   # (S, D)

    # Hoisted out of the head loop: additive mask bias computed once.
    mask_bias = jnp.where(mask == 0.0, jnp.float32(-1e9), jnp.float32(0.0))  # (1, S)

    attn_out = jnp.zeros((TQ, D), jnp.float32)
    for h in range(num_heads):   # static unroll; single live accumulator bounds vreg pressure
        lo, hi = h * dk, (h + 1) * dk
        # Per-head slices taken from the weight Refs (free static slices, no activation relayout).
        qh = (jnp.dot(xn_q, wq_ref[:, lo:hi], preferred_element_type=jnp.float32)
              + bq_ref[:, lo:hi]) * scale                                   # (TQ, dk)
        kh = (jnp.dot(xn_kv, wk_ref[:, lo:hi], preferred_element_type=jnp.float32)
              + bk_ref[:, lo:hi])                                           # (S, dk)
        vh = (jnp.dot(xn_kv, wv_ref[:, lo:hi], preferred_element_type=jnp.float32)
              + bv_ref[:, lo:hi])                                           # (S, dk)

        scores = jnp.dot(qh.astype(jnp.bfloat16), kh.astype(jnp.bfloat16).T,
                         preferred_element_type=jnp.float32) + mask_bias    # (TQ, S)
        m = jnp.max(scores, axis=-1, keepdims=True)
        e = jnp.exp(scores - m)
        p = e * pl.reciprocal(jnp.sum(e, axis=-1, keepdims=True), approx=True)

        ctx_h = jnp.dot(p.astype(jnp.bfloat16), vh.astype(jnp.bfloat16),
                        preferred_element_type=jnp.float32)                 # (TQ, dk)
        # Accumulate the output projection per head instead of concatenating heads.
        attn_out = attn_out + jnp.dot(ctx_h.astype(jnp.bfloat16), wo_ref[lo:hi, :],
                                      preferred_element_type=jnp.float32)   # (TQ, D)

    x1 = xq + attn_out + bo_ref[:]          # dropout == identity (eval)

    # ---------------- sublayer 1: x + ffn(LN(x)) ----------------
    xn2 = layer_norm(x1, ln2_g_ref, ln2_b_ref).astype(jnp.bfloat16)
    h1 = jnp.dot(xn2, w1_ref[...], preferred_element_type=jnp.float32) + b1_ref[:]
    h1 = jnp.maximum(h1, 0.0)
    ff = jnp.dot(h1.astype(jnp.bfloat16), w2_ref[...],
                 preferred_element_type=jnp.float32) + b2_ref[:]
    o_ref[0] = (x1 + ff).astype(o_ref.dtype)


def encoder_layer_pallas(x, mask, params, *, num_heads, eps=1e-6, tq=None):
    B, S, D = x.shape
    assert D % num_heads == 0
    if tq is None:
        tq = min(S, 128)
    assert S % tq == 0
    DFF = params["w1"].shape[-1]

    def as2d(p):
        return p.reshape(1, -1) if p.ndim == 1 else p

    # Weights in bf16 (MXU-native, halves weight DMA/VMEM); biases & LN params stay f32.
    bf16_names = {"wq", "wk", "wv", "wo", "w1", "w2"}
    param_order = ["wq", "bq", "wk", "bk", "wv", "bv", "wo", "bo",
                   "w1", "b1", "w2", "b2",
                   "ln1_g", "ln1_b", "ln2_g", "ln2_b"]
    plist = [as2d(params[n]).astype(jnp.bfloat16 if n in bf16_names else jnp.float32)
             for n in param_order]

    grid = (B, S // tq)
    in_specs = [
        pl.BlockSpec((1, tq, D), lambda b, q: (b, q, 0)),   # query / residual tile
        pl.BlockSpec((1, S, D), lambda b, q: (b, 0, 0)),    # full sequence for K/V
        pl.BlockSpec((1, 1, S), lambda b, q: (b, 0, 0)),    # key mask
    ] + [pl.BlockSpec(p.shape, lambda b, q: (0, 0)) for p in plist]

    # Advisory cost estimate so XLA schedules surrounding ops around the fused layer.
    flops = int(2 * B * S * D * (4 * D + 2 * S + 2 * DFF))
    transcendentals = int(B * num_heads * S * S)
    bytes_accessed = int(2 * x.size * x.dtype.itemsize
                         + mask.size * mask.dtype.itemsize
                         + sum(int(p.size) * p.dtype.itemsize for p in plist))

    kernel = functools.partial(encoder_layer_kernel, num_heads=num_heads, eps=eps)
    return pl.pallas_call(
        kernel,
        out_shape=jax.ShapeDtypeStruct((B, S, D), x.dtype),
        grid=grid,
        in_specs=in_specs,
        out_specs=pl.BlockSpec((1, tq, D), lambda b, q: (b, q, 0)),
        compiler_params=pltpu.CompilerParams(
            dimension_semantics=("parallel", "parallel"),
            vmem_limit_bytes=32 * 1024 * 1024),
        cost_estimate=pl.CostEstimate(flops=flops,
                                      transcendentals=transcendentals,
                                      bytes_accessed=bytes_accessed),
    )(x, x, mask, *plist)


def encoder_layer_ref(x, mask, p, *, num_heads, eps=1e-6):
    """Pure-JAX f32 reference mirroring the PyTorch module (eval mode)."""
    B, S, D = x.shape
    dk = D // num_heads

    def ln(v, g, b):
        mean = v.mean(-1, keepdims=True)
        std = jnp.sqrt(((v - mean) ** 2).sum(-1, keepdims=True) / (D - 1))
        return g * (v - mean) / (std + eps) + b

    xn = ln(x, p["ln1_g"], p["ln1_b"])
    q = xn @ p["wq"] + p["bq"]
    k = xn @ p["wk"] + p["bk"]
    v = xn @ p["wv"] + p["bv"]

    def split(t):
        return t.reshape(B, S, num_heads, dk).transpose(0, 2, 1, 3)

    qh, kh, vh = split(q), split(k), split(v)
    scores = jnp.einsum("bhqd,bhkd->bhqk", qh, kh) / math.sqrt(dk)
    scores = jnp.where(mask[:, None, :, :] == 0, -1e9, scores)
    attn = jax.nn.softmax(scores, axis=-1)
    ctx = jnp.einsum("bhqk,bhkd->bhqd", attn, vh).transpose(0, 2, 1, 3).reshape(B, S, D)
    x1 = x + (ctx @ p["wo"] + p["bo"])

    xn2 = ln(x1, p["ln2_g"], p["ln2_b"])
    ff = jnp.maximum(xn2 @ p["w1"] + p["b1"], 0.0) @ p["w2"] + p["b2"]
    return x1 + ff


if __name__ == "__main__":
    # Lane-dense small shapes: D multiple of 128, S multiple of the query tile.
    B, S, D, H, DFF, TQ = 2, 128, 128, 4, 256, 64

    key = jax.random.PRNGKey(0)
    ks = jax.random.split(key, 16)

    def w(k, shape, scale):
        return jax.random.normal(k, shape, jnp.float32) * scale

    params = {
        "wq": w(ks[0], (D, D), 1.0 / math.sqrt(D)),
        "bq": w(ks[1], (D,), 0.02),
        "wk": w(ks[2], (D, D), 1.0 / math.sqrt(D)),
        "bk": w(ks[3], (D,), 0.02),
        "wv": w(ks[4], (D, D), 1.0 / math.sqrt(D)),
        "bv": w(ks[5], (D,), 0.02),
        "wo": w(ks[6], (D, D), 1.0 / math.sqrt(D)),
        "bo": w(ks[7], (D,), 0.02),
        "w1": w(ks[8], (D, DFF), 1.0 / math.sqrt(D)),
        "b1": w(ks[9], (DFF,), 0.02),
        "w2": w(ks[10], (DFF, D), 1.0 / math.sqrt(DFF)),
        "b2": w(ks[11], (D,), 0.02),
        "ln1_g": jnp.ones((D,), jnp.float32),
        "ln1_b": jnp.zeros((D,), jnp.float32),
        "ln2_g": jnp.ones((D,), jnp.float32),
        "ln2_b": jnp.zeros((D,), jnp.float32),
    }

    x = jax.random.normal(ks[12], (B, S, D), jnp.float32)
    mask = jnp.ones((B, 1, S), jnp.float32)
    mask = mask.at[1, 0, 96:].set(0.0)   # second batch element attends to first 96 tokens only

    out = encoder_layer_pallas(x, mask, params, num_heads=H, tq=TQ)
    out = jax.block_until_ready(out)

    ref = encoder_layer_ref(x, mask, params, num_heads=H)
    assert out.shape == (B, S, D)
    max_err = float(jnp.max(jnp.abs(out - ref)))
    # bf16 MXU operands + approx softmax reciprocal => slightly looser tolerance than pure-f32.
    assert jnp.allclose(out, ref, atol=5e-2, rtol=5e-2), max_err

    print("KERNEL_OK")
</pallas_src>

<mosaic_0001>
module attributes {stable_mosaic.version = 11 : i64} {
  func.func @encoder_layer_kernel(%arg0: i32, %arg1: i32, %arg2: memref<1x64x128xf32, #tpu.memory_space<vmem>>, %arg3: memref<1x128x128xf32, #tpu.memory_space<vmem>>, %arg4: memref<1x1x128xf32, #tpu.memory_space<vmem>>, %arg5: memref<128x128xbf16, #tpu.memory_space<vmem>>, %arg6: memref<1x128xf32, #tpu.memory_space<vmem>>, %arg7: memref<128x128xbf16, #tpu.memory_space<vmem>>, %arg8: memref<1x128xf32, #tpu.memory_space<vmem>>, %arg9: memref<128x128xbf16, #tpu.memory_space<vmem>>, %arg10: memref<1x128xf32, #tpu.memory_space<vmem>>, %arg11: memref<128x128xbf16, #tpu.memory_space<vmem>>, %arg12: memref<1x128xf32, #tpu.memory_space<vmem>>, %arg13: memref<128x256xbf16, #tpu.memory_space<vmem>>, %arg14: memref<1x256xf32, #tpu.memory_space<vmem>>, %arg15: memref<256x128xbf16, #tpu.memory_space<vmem>>, %arg16: memref<1x128xf32, #tpu.memory_space<vmem>>, %arg17: memref<1x128xf32, #tpu.memory_space<vmem>>, %arg18: memref<1x128xf32, #tpu.memory_space<vmem>>, %arg19: memref<1x128xf32, #tpu.memory_space<vmem>>, %arg20: memref<1x128xf32, #tpu.memory_space<vmem>>, %arg21: memref<1x64x128xf32, #tpu.memory_space<vmem>>) attributes {dimension_semantics = [#tpu.dimension_semantics<parallel>, #tpu.dimension_semantics<parallel>], iteration_bounds = array<i64: 2, 2>, scalar_prefetch = 0 : i64, scratch_operands = 0 : i64, tpu.core_type = #tpu.core_type<tc>, window_params = [{transform_indices = @transform_0, window_bounds = array<i64: 1, 64, 128>}, {transform_indices = @transform_1, window_bounds = array<i64: 1, 128, 128>}, {transform_indices = @transform_2, window_bounds = array<i64: 1, 1, 128>}, {pipeline_mode = #tpu.pipeline_mode<synchronous>, transform_indices = @transform_3, window_bounds = array<i64: 128, 128>}, {pipeline_mode = #tpu.pipeline_mode<synchronous>, transform_indices = @transform_4, window_bounds = array<i64: 1, 128>}, {pipeline_mode = #tpu.pipeline_mode<synchronous>, transform_indices = @transform_5, window_bounds = array<i64: 128, 128>}, {pipeline_mode = #tpu.pipeline_mode<synchronous>, transform_indices = @transform_6, window_bounds = array<i64: 1, 128>}, {pipeline_mode = #tpu.pipeline_mode<synchronous>, transform_indices = @transform_7, window_bounds = array<i64: 128, 128>}, {pipeline_mode = #tpu.pipeline_mode<synchronous>, transform_indices = @transform_8, window_bounds = array<i64: 1, 128>}, {pipeline_mode = #tpu.pipeline_mode<synchronous>, transform_indices = @transform_9, window_bounds = array<i64: 128, 128>}, {pipeline_mode = #tpu.pipeline_mode<synchronous>, transform_indices = @transform_10, window_bounds = array<i64: 1, 128>}, {pipeline_mode = #tpu.pipeline_mode<synchronous>, transform_indices = @transform_11, window_bounds = array<i64: 128, 256>}, {pipeline_mode = #tpu.pipeline_mode<synchronous>, transform_indices = @transform_12, window_bounds = array<i64: 1, 256>}, {pipeline_mode = #tpu.pipeline_mode<synchronous>, transform_indices = @transform_13, window_bounds = array<i64: 256, 128>}, {pipeline_mode = #tpu.pipeline_mode<synchronous>, transform_indices = @transform_14, window_bounds = array<i64: 1, 128>}, {pipeline_mode = #tpu.pipeline_mode<synchronous>, transform_indices = @transform_15, window_bounds = array<i64: 1, 128>}, {pipeline_mode = #tpu.pipeline_mode<synchronous>, transform_indices = @transform_16, window_bounds = array<i64: 1, 128>}, {pipeline_mode = #tpu.pipeline_mode<synchronous>, transform_indices = @transform_17, window_bounds = array<i64: 1, 128>}, {pipeline_mode = #tpu.pipeline_mode<synchronous>, transform_indices = @transform_18, window_bounds = array<i64: 1, 128>}, {transform_indices = @transform_19, window_bounds = array<i64: 1, 64, 128>}]} {
    %c0 = arith.constant 0 : index
    %c0_0 = arith.constant 0 : index
    %c0_1 = arith.constant 0 : index
    %0 = vector.load %arg2[%c0, %c0_0, %c0_1] : memref<1x64x128xf32, #tpu.memory_space<vmem>>, vector<1x64x128xf32>
    %1 = vector.shape_cast %0 : vector<1x64x128xf32> to vector<64x128xf32>
    %c0_2 = arith.constant 0 : index
    %c0_3 = arith.constant 0 : index
    %c0_4 = arith.constant 0 : index
    %2 = vector.load %arg3[%c0_2, %c0_3, %c0_4] : memref<1x128x128xf32, #tpu.memory_space<vmem>>, vector<1x128x128xf32>
    %3 = vector.shape_cast %2 : vector<1x128x128xf32> to vector<128x128xf32>
    %c0_5 = arith.constant 0 : index
    %c0_6 = arith.constant 0 : index
    %c0_7 = arith.constant 0 : index
    %4 = vector.load %arg4[%c0_5, %c0_6, %c0_7] : memref<1x1x128xf32, #tpu.memory_space<vmem>>, vector<1x1x128xf32>
    %5 = vector.shape_cast %4 : vector<1x1x128xf32> to vector<1x128xf32>
    %cst = arith.constant dense<0.000000e+00> : vector<64xf32>
    %6 = vector.multi_reduction <add>, %1, %cst [1] : vector<64x128xf32> to vector<64xf32>
    %7 = vector.shape_cast %6 : vector<64xf32> to vector<64x1xf32>
    %cst_8 = arith.constant 1.280000e+02 : f32
    %8 = vector.broadcast %cst_8 : f32 to vector<64x1xf32>
    %9 = arith.divf %7, %8 : vector<64x1xf32>
    %10 = vector.broadcast %9 : vector<64x1xf32> to vector<64x128xf32>
    %11 = arith.subf %1, %10 : vector<64x128xf32>
    %12 = arith.mulf %11, %11 : vector<64x128xf32>
    %cst_9 = arith.constant dense<0.000000e+00> : vector<64xf32>
    %13 = vector.multi_reduction <add>, %12, %cst_9 [1] : vector<64x128xf32> to vector<64xf32>
    %14 = vector.shape_cast %13 : vector<64xf32> to vector<64x1xf32>
    %cst_10 = arith.constant 0.00787401571 : f32
    %15 = vector.broadcast %cst_10 : f32 to vector<64x1xf32>
    %16 = arith.mulf %14, %15 : vector<64x1xf32>
    %17 = math.sqrt %16 : vector<64x1xf32>
    %c0_11 = arith.constant 0 : index
    %c0_12 = arith.constant 0 : index
    %18 = vector.load %arg17[%c0_11, %c0_12] : memref<1x128xf32, #tpu.memory_space<vmem>>, vector<1x128xf32>
    %19 = vector.broadcast %9 : vector<64x1xf32> to vector<64x128xf32>
    %20 = arith.subf %1, %19 : vector<64x128xf32>
    %21 = vector.broadcast %18 : vector<1x128xf32> to vector<64x128xf32>
    %22 = arith.mulf %21, %20 : vector<64x128xf32>
    %cst_13 = arith.constant 9.99999997E-7 : f32
    %23 = vector.broadcast %cst_13 : f32 to vector<64x1xf32>
    %24 = arith.addf %17, %23 : vector<64x1xf32>
    %25 = tpu.reciprocal %24 : vector<64x1xf32> -> vector<64x1xf32>
    %26 = vector.broadcast %25 : vector<64x1xf32> to vector<64x128xf32>
    %27 = arith.mulf %22, %26 : vector<64x128xf32>
    %c0_14 = arith.constant 0 : index
    %c0_15 = arith.constant 0 : index
    %28 = vector.load %arg18[%c0_14, %c0_15] : memref<1x128xf32, #tpu.memory_space<vmem>>, vector<1x128xf32>
    %29 = vector.broadcast %28 : vector<1x128xf32> to vector<64x128xf32>
    %30 = arith.addf %27, %29 : vector<64x128xf32>
    %31 = arith.truncf %30 : vector<64x128xf32> to vector<64x128xbf16>
    %cst_16 = arith.constant dense<0.000000e+00> : vector<128xf32>
    %32 = vector.multi_reduction <add>, %3, %cst_16 [1] : vector<128x128xf32> to vector<128xf32>
    %33 = vector.shape_cast %32 : vector<128xf32> to vector<128x1xf32>
    %cst_17 = arith.constant 1.280000e+02 : f32
    %34 = vector.broadcast %cst_17 : f32 to vector<128x1xf32>
    %35 = arith.divf %33, %34 : vector<128x1xf32>
    %36 = vector.broadcast %35 : vector<128x1xf32> to vector<128x128xf32>
    %37 = arith.subf %3, %36 : vector<128x128xf32>
    %38 = arith.mulf %37, %37 : vector<128x128xf32>
    %cst_18 = arith.constant dense<0.000000e+00> : vector<128xf32>
    %39 = vector.multi_reduction <add>, %38, %cst_18 [1] : vector<128x128xf32> to vector<128xf32>
    %40 = vector.shape_cast %39 : vector<128xf32> to vector<128x1xf32>
    %cst_19 = arith.constant 0.00787401571 : f32
    %41 = vector.broadcast %cst_19 : f32 to vector<128x1xf32>
    %42 = arith.mulf %40, %41 : vector<128x1xf32>
    %43 = math.sqrt %42 : vector<128x1xf32>
    %c0_20 = arith.constant 0 : index
    %c0_21 = arith.constant 0 : index
    %44 = vector.load %arg17[%c0_20, %c0_21] : memref<1x128xf32, #tpu.memory_space<vmem>>, vector<1x128xf32>
    %45 = vector.broadcast %35 : vector<128x1xf32> to vector<128x128xf32>
    %46 = arith.subf %3, %45 : vector<128x128xf32>
    %47 = vector.broadcast %44 : vector<1x128xf32> to vector<128x128xf32>
    %48 = arith.mulf %47, %46 : vector<128x128xf32>
    %cst_22 = arith.constant 9.99999997E-7 : f32
    %49 = vector.broadcast %cst_22 : f32 to vector<128x1xf32>
    %50 = arith.addf %43, %49 : vector<128x1xf32>
    %51 = tpu.reciprocal %50 : vector<128x1xf32> -> vector<128x1xf32>
    %52 = vector.broadcast %51 : vector<128x1xf32> to vector<128x128xf32>
    %53 = arith.mulf %48, %52 : vector<128x128xf32>
    %c0_23 = arith.constant 0 : index
    %c0_24 = arith.constant 0 : index
    %54 = vector.load %arg18[%c0_23, %c0_24] : memref<1x128xf32, #tpu.memory_space<vmem>>, vector<1x128xf32>
    %55 = vector.broadcast %54 : vector<1x128xf32> to vector<128x128xf32>
    %56 = arith.addf %53, %55 : vector<128x128xf32>
    %57 = arith.truncf %56 : vector<128x128xf32> to vector<128x128xbf16>
    %cst_25 = arith.constant 0.000000e+00 : f32
    %58 = vector.broadcast %cst_25 : f32 to vector<1x128xf32>
    %59 = arith.cmpf oeq, %5, %58 : vector<1x128xf32>
    %cst_26 = arith.constant -1.000000e+09 : f32
    %cst_27 = arith.constant 0.000000e+00 : f32
    %60 = vector.broadcast %cst_26 : f32 to vector<1x128xf32>
    %61 = vector.broadcast %cst_27 : f32 to vector<1x128xf32>
    %62 = arith.select %59, %60, %61 : vector<1x128xi1>, vector<1x128xf32>
    %cst_28 = arith.constant 0.000000e+00 : f32
    %63 = vector.broadcast %cst_28 : f32 to vector<64x128xf32>
    %c0_29 = arith.constant 0 : index
    %c0_30 = arith.constant 0 : index
    %64 = vector.load %arg5[%c0_29, %c0_30] : memref<128x128xbf16, #tpu.memory_space<vmem>>, vector<128x32xbf16>
    %cst_31 = arith.constant dense<0.000000e+00> : vector<64x32xf32>
    %65 = tpu.matmul %31, %64, %cst_31 {dimension_numbers = #tpu.dot_dimension_numbers<[1], [0], [0], [1], [0, 0, 1, 1], [], []>} : vector<64x128xbf16>, vector<128x32xbf16>, vector<64x32xf32> -> vector<64x32xf32>
    %c0_32 = arith.constant 0 : index
    %c0_33 = arith.constant 0 : index
    %66 = vector.load %arg6[%c0_32, %c0_33] : memref<1x128xf32, #tpu.memory_space<vmem>>, vector<1x32xf32>
    %67 = vector.broadcast %66 : vector<1x32xf32> to vector<64x32xf32>
    %68 = arith.addf %65, %67 : vector<64x32xf32>
    %cst_34 = arith.constant 0.176776692 : f32
    %69 = vector.broadcast %cst_34 : f32 to vector<64x32xf32>
    %70 = arith.mulf %68, %69 : vector<64x32xf32>
    %c0_35 = arith.constant 0 : index
    %c0_36 = arith.constant 0 : index
    %71 = vector.load %arg7[%c0_35, %c0_36] : memref<128x128xbf16, #tpu.memory_space<vmem>>, vector<128x32xbf16>
    %cst_37 = arith.constant dense<0.000000e+00> : vector<128x32xf32>
    %72 = tpu.matmul %57, %71, %cst_37 {dimension_numbers = #tpu.dot_dimension_numbers<[1], [0], [0], [1], [0, 0, 1, 1], [], []>} : vector<128x128xbf16>, vector<128x32xbf16>, vector<128x32xf32> -> vector<128x32xf32>
    %c0_38 = arith.constant 0 : index
    %c0_39 = arith.constant 0 : index
    %73 = vector.load %arg8[%c0_38, %c0_39] : memref<1x128xf32, #tpu.memory_space<vmem>>, vector<1x32xf32>
    %74 = vector.broadcast %73 : vector<1x32xf32> to vector<128x32xf32>
    %75 = arith.addf %72, %74 : vector<128x32xf32>
    %c0_40 = arith.constant 0 : index
    %c0_41 = arith.constant 0 : index
    %76 = vector.load %arg9[%c0_40, %c0_41] : memref<128x128xbf16, #tpu.memory_space<vmem>>, vector<128x32xbf16>
    %cst_42 = arith.constant dense<0.000000e+00> : vector<128x32xf32>
    %77 = tpu.matmul %57, %76, %cst_42 {dimension_numbers = #tpu.dot_dimension_numbers<[1], [0], [0], [1], [0, 0, 1, 1], [], []>} : vector<128x128xbf16>, vector<128x32xbf16>, vector<128x32xf32> -> vector<128x32xf32>
    %c0_43 = arith.constant 0 : index
    %c0_44 = arith.constant 0 : index
    %78 = vector.load %arg10[%c0_43, %c0_44] : memref<1x128xf32, #tpu.memory_space<vmem>>, vector<1x32xf32>
    %79 = vector.broadcast %78 : vector<1x32xf32> to vector<128x32xf32>
    %80 = arith.addf %77, %79 : vector<128x32xf32>
    %81 = arith.truncf %70 : vector<64x32xf32> to vector<64x32xbf16>
    %82 = arith.truncf %75 : vector<128x32xf32> to vector<128x32xbf16>
    %83 = tpu.transpose %82, [1, 0] : vector<128x32xbf16> -> vector<32x128xbf16>
    %cst_45 = arith.constant dense<0.000000e+00> : vector<64x128xf32>
    %84 = tpu.matmul %81, %83, %cst_45 {dimension_numbers = #tpu.dot_dimension_numbers<[1], [0], [0], [1], [0, 0, 1, 1], [], []>} : vector<64x32xbf16>, vector<32x128xbf16>, vector<64x128xf32> -> vector<64x128xf32>
    %85 = vector.broadcast %62 : vector<1x128xf32> to vector<64x128xf32>
    %86 = arith.addf %84, %85 : vector<64x128xf32>
    %cst_46 = arith.constant dense<0xFF800000> : vector<64xf32>
    %87 = vector.multi_reduction <maximumf>, %86, %cst_46 [1] : vector<64x128xf32> to vector<64xf32>
    %88 = vector.shape_cast %87 : vector<64xf32> to vector<64x1xf32>
    %89 = vector.broadcast %88 : vector<64x1xf32> to vector<64x128xf32>
    %90 = arith.subf %86, %89 : vector<64x128xf32>
    %91 = math.exp %90 : vector<64x128xf32>
    %cst_47 = arith.constant dense<0.000000e+00> : vector<64xf32>
    %92 = vector.multi_reduction <add>, %91, %cst_47 [1] : vector<64x128xf32> to vector<64xf32>
    %93 = vector.shape_cast %92 : vector<64xf32> to vector<64x1xf32>
    %94 = tpu.reciprocal %93 {approx = true} : vector<64x1xf32> -> vector<64x1xf32>
    %95 = vector.broadcast %94 : vector<64x1xf32> to vector<64x128xf32>
    %96 = arith.mulf %91, %95 : vector<64x128xf32>
    %97 = arith.truncf %96 : vector<64x128xf32> to vector<64x128xbf16>
    %98 = arith.truncf %80 : vector<128x32xf32> to vector<128x32xbf16>
    %cst_48 = arith.constant dense<0.000000e+00> : vector<64x32xf32>
    %99 = tpu.matmul %97, %98, %cst_48 {dimension_numbers = #tpu.dot_dimension_numbers<[1], [0], [0], [1], [0, 0, 1, 1], [], []>} : vector<64x128xbf16>, vector<128x32xbf16>, vector<64x32xf32> -> vector<64x32xf32>
    %100 = arith.truncf %99 : vector<64x32xf32> to vector<64x32xbf16>
    %c0_49 = arith.constant 0 : index
    %c0_50 = arith.constant 0 : index
    %101 = vector.load %arg11[%c0_49, %c0_50] : memref<128x128xbf16, #tpu.memory_space<vmem>>, vector<32x128xbf16>
    %cst_51 = arith.constant dense<0.000000e+00> : vector<64x128xf32>
    %102 = tpu.matmul %100, %101, %cst_51 {dimension_numbers = #tpu.dot_dimension_numbers<[1], [0], [0], [1], [0, 0, 1, 1], [], []>} : vector<64x32xbf16>, vector<32x128xbf16>, vector<64x128xf32> -> vector<64x128xf32>
    %103 = arith.addf %63, %102 : vector<64x128xf32>
    %c0_52 = arith.constant 0 : index
    %c32 = arith.constant 32 : index
    %104 = vector.load %arg5[%c0_52, %c32] : memref<128x128xbf16, #tpu.memory_space<vmem>>, vector<128x32xbf16>
    %cst_53 = arith.constant dense<0.000000e+00> : vector<64x32xf32>
    %105 = tpu.matmul %31, %104, %cst_53 {dimension_numbers = #tpu.dot_dimension_numbers<[1], [0], [0], [1], [0, 0, 1, 1], [], []>} : vector<64x128xbf16>, vector<128x32xbf16>, vector<64x32xf32> -> vector<64x32xf32>
    %c0_54 = arith.constant 0 : index
    %c32_55 = arith.constant 32 : index
    %106 = vector.load %arg6[%c0_54, %c32_55] : memref<1x128xf32, #tpu.memory_space<vmem>>, vector<1x32xf32>
    %107 = vector.broadcast %106 : vector<1x32xf32> to vector<64x32xf32>
    %108 = arith.addf %105, %107 : vector<64x32xf32>
    %cst_56 = arith.constant 0.176776692 : f32
    %109 = vector.broadcast %cst_56 : f32 to vector<64x32xf32>
    %110 = arith.mulf %108, %109 : vector<64x32xf32>
    %c0_57 = arith.constant 0 : index
    %c32_58 = arith.constant 32 : index
    %111 = vector.load %arg7[%c0_57, %c32_58] : memref<128x128xbf16, #tpu.memory_space<vmem>>, vector<128x32xbf16>
    %cst_59 = arith.constant dense<0.000000e+00> : vector<128x32xf32>
    %112 = tpu.matmul %57, %111, %cst_59 {dimension_numbers = #tpu.dot_dimension_numbers<[1], [0], [0], [1], [0, 0, 1, 1], [], []>} : vector<128x128xbf16>, vector<128x32xbf16>, vector<128x32xf32> -> vector<128x32xf32>
    %c0_60 = arith.constant 0 : index
    %c32_61 = arith.constant 32 : index
    %113 = vector.load %arg8[%c0_60, %c32_61] : memref<1x128xf32, #tpu.memory_space<vmem>>, vector<1x32xf32>
    %114 = vector.broadcast %113 : vector<1x32xf32> to vector<128x32xf32>
    %115 = arith.addf %112, %114 : vector<128x32xf32>
    %c0_62 = arith.constant 0 : index
    %c32_63 = arith.constant 32 : index
    %116 = vector.load %arg9[%c0_62, %c32_63] : memref<128x128xbf16, #tpu.memory_space<vmem>>, vector<128x32xbf16>
    %cst_64 = arith.constant dense<0.000000e+00> : vector<128x32xf32>
    %117 = tpu.matmul %57, %116, %cst_64 {dimension_numbers = #tpu.dot_dimension_numbers<[1], [0], [0], [1], [0, 0, 1, 1], [], []>} : vector<128x128xbf16>, vector<128x32xbf16>, vector<128x32xf32> -> vector<128x32xf32>
    %c0_65 = arith.constant 0 : index
    %c32_66 = arith.constant 32 : index
    %118 = vector.load %arg10[%c0_65, %c32_66] : memref<1x128xf32, #tpu.memory_space<vmem>>, vector<1x32xf32>
    %119 = vector.broadcast %118 : vector<1x32xf32> to vector<128x32xf32>
    %120 = arith.addf %117, %119 : vector<128x32xf32>
    %121 = arith.truncf %110 : vector<64x32xf32> to vector<64x32xbf16>
    %122 = arith.truncf %115 : vector<128x32xf32> to vector<128x32xbf16>
    %123 = tpu.transpose %122, [1, 0] : vector<128x32xbf16> -> vector<32x128xbf16>
    %cst_67 = arith.constant dense<0.000000e+00> : vector<64x128xf32>
    %124 = tpu.matmul %121, %123, %cst_67 {dimension_numbers = #tpu.dot_dimension_numbers<[1], [0], [0], [1], [0, 0, 1, 1], [], []>} : vector<64x32xbf16>, vector<32x128xbf16>, vector<64x128xf32> -> vector<64x128xf32>
    %125 = vector.broadcast %62 : vector<1x128xf32> to vector<64x128xf32>
    %126 = arith.addf %124, %125 : vector<64x128xf32>
    %cst_68 = arith.constant dense<0xFF800000> : vector<64xf32>
    %127 = vector.multi_reduction <maximumf>, %126, %cst_68 [1] : vector<64x128xf32> to vector<64xf32>
    %128 = vector.shape_cast %127 : vector<64xf32> to vector<64x1xf32>
    %129 = vector.broadcast %128 : vector<64x1xf32> to vector<64x128xf32>
    %130 = arith.subf %126, %129 : vector<64x128xf32>
    %131 = math.exp %130 : vector<64x128xf32>
    %cst_69 = arith.constant dense<0.000000e+00> : vector<64xf32>
    %132 = vector.multi_reduction <add>, %131, %cst_69 [1] : vector<64x128xf32> to vector<64xf32>
    %133 = vector.shape_cast %132 : vector<64xf32> to vector<64x1xf32>
    %134 = tpu.reciprocal %133 {approx = true} : vector<64x1xf32> -> vector<64x1xf32>
    %135 = vector.broadcast %134 : vector<64x1xf32> to vector<64x128xf32>
    %136 = arith.mulf %131, %135 : vector<64x128xf32>
    %137 = arith.truncf %136 : vector<64x128xf32> to vector<64x128xbf16>
    %138 = arith.truncf %120 : vector<128x32xf32> to vector<128x32xbf16>
    %cst_70 = arith.constant dense<0.000000e+00> : vector<64x32xf32>
    %139 = tpu.matmul %137, %138, %cst_70 {dimension_numbers = #tpu.dot_dimension_numbers<[1], [0], [0], [1], [0, 0, 1, 1], [], []>} : vector<64x128xbf16>, vector<128x32xbf16>, vector<64x32xf32> -> vector<64x32xf32>
    %140 = arith.truncf %139 : vector<64x32xf32> to vector<64x32xbf16>
    %c32_71 = arith.constant 32 : index
    %c0_72 = arith.constant 0 : index
    %141 = vector.load %arg11[%c32_71, %c0_72] : memref<128x128xbf16, #tpu.memory_space<vmem>>, vector<32x128xbf16>
    %cst_73 = arith.constant dense<0.000000e+00> : vector<64x128xf32>
    %142 = tpu.matmul %140, %141, %cst_73 {dimension_numbers = #tpu.dot_dimension_numbers<[1], [0], [0], [1], [0, 0, 1, 1], [], []>} : vector<64x32xbf16>, vector<32x128xbf16>, vector<64x128xf32> -> vector<64x128xf32>
    %143 = arith.addf %103, %142 : vector<64x128xf32>
    %c0_74 = arith.constant 0 : index
    %c64 = arith.constant 64 : index
    %144 = vector.load %arg5[%c0_74, %c64] : memref<128x128xbf16, #tpu.memory_space<vmem>>, vector<128x32xbf16>
    %cst_75 = arith.constant dense<0.000000e+00> : vector<64x32xf32>
    %145 = tpu.matmul %31, %144, %cst_75 {dimension_numbers = #tpu.dot_dimension_numbers<[1], [0], [0], [1], [0, 0, 1, 1], [], []>} : vector<64x128xbf16>, vector<128x32xbf16>, vector<64x32xf32> -> vector<64x32xf32>
    %c0_76 = arith.constant 0 : index
    %c64_77 = arith.constant 64 : index
    %146 = vector.load %arg6[%c0_76, %c64_77] : memref<1x128xf32, #tpu.memory_space<vmem>>, vector<1x32xf32>
    %147 = vector.broadcast %146 : vector<1x32xf32> to vector<64x32xf32>
    %148 = arith.addf %145, %147 : vector<64x32xf32>
    %cst_78 = arith.constant 0.176776692 : f32
    %149 = vector.broadcast %cst_78 : f32 to vector<64x32xf32>
    %150 = arith.mulf %148, %149 : vector<64x32xf32>
    %c0_79 = arith.constant 0 : index
    %c64_80 = arith.constant 64 : index
    %151 = vector.load %arg7[%c0_79, %c64_80] : memref<128x128xbf16, #tpu.memory_space<vmem>>, vector<128x32xbf16>
    %cst_81 = arith.constant dense<0.000000e+00> : vector<128x32xf32>
    %152 = tpu.matmul %57, %151, %cst_81 {dimension_numbers = #tpu.dot_dimension_numbers<[1], [0], [0], [1], [0, 0, 1, 1], [], []>} : vector<128x128xbf16>, vector<128x32xbf16>, vector<128x32xf32> -> vector<128x32xf32>
    %c0_82 = arith.constant 0 : index
    %c64_83 = arith.constant 64 : index
    %153 = vector.load %arg8[%c0_82, %c64_83] : memref<1x128xf32, #tpu.memory_space<vmem>>, vector<1x32xf32>
    %154 = vector.broadcast %153 : vector<1x32xf32> to vector<128x32xf32>
    %155 = arith.addf %152, %154 : vector<128x32xf32>
    %c0_84 = arith.constant 0 : index
    %c64_85 = arith.constant 64 : index
    %156 = vector.load %arg9[%c0_84, %c64_85] : memref<128x128xbf16, #tpu.memory_space<vmem>>, vector<128x32xbf16>
    %cst_86 = arith.constant dense<0.000000e+00> : vector<128x32xf32>
    %157 = tpu.matmul %57, %156, %cst_86 {dimension_numbers = #tpu.dot_dimension_numbers<[1], [0], [0], [1], [0, 0, 1, 1], [], []>} : vector<128x128xbf16>, vector<128x32xbf16>, vector<128x32xf32> -> vector<128x32xf32>
    %c0_87 = arith.constant 0 : index
    %c64_88 = arith.constant 64 : index
    %158 = vector.load %arg10[%c0_87, %c64_88] : memref<1x128xf32, #tpu.memory_space<vmem>>, vector<1x32xf32>
    %159 = vector.broadcast %158 : vector<1x32xf32> to vector<128x32xf32>
    %160 = arith.addf %157, %159 : vector<128x32xf32>
    %161 = arith.truncf %150 : vector<64x32xf32> to vector<64x32xbf16>
    %162 = arith.truncf %155 : vector<128x32xf32> to vector<128x32xbf16>
    %163 = tpu.transpose %162, [1, 0] : vector<128x32xbf16> -> vector<32x128xbf16>
    %cst_89 = arith.constant dense<0.000000e+00> : vector<64x128xf32>
    %164 = tpu.matmul %161, %163, %cst_89 {dimension_numbers = #tpu.dot_dimension_numbers<[1], [0], [0], [1], [0, 0, 1, 1], [], []>} : vector<64x32xbf16>, vector<32x128xbf16>, vector<64x128xf32> -> vector<64x128xf32>
    %165 = vector.broadcast %62 : vector<1x128xf32> to vector<64x128xf32>
    %166 = arith.addf %164, %165 : vector<64x128xf32>
    %cst_90 = arith.constant dense<0xFF800000> : vector<64xf32>
    %167 = vector.multi_reduction <maximumf>, %166, %cst_90 [1] : vector<64x128xf32> to vector<64xf32>
    %168 = vector.shape_cast %167 : vector<64xf32> to vector<64x1xf32>
    %169 = vector.broadcast %168 : vector<64x1xf32> to vector<64x128xf32>
    %170 = arith.subf %166, %169 : vector<64x128xf32>
    %171 = math.exp %170 : vector<64x128xf32>
    %cst_91 = arith.constant dense<0.000000e+00> : vector<64xf32>
    %172 = vector.multi_reduction <add>, %171, %cst_91 [1] : vector<64x128xf32> to vector<64xf32>
    %173 = vector.shape_cast %172 : vector<64xf32> to vector<64x1xf32>
    %174 = tpu.reciprocal %173 {approx = true} : vector<64x1xf32> -> vector<64x1xf32>
    %175 = vector.broadcast %174 : vector<64x1xf32> to vector<64x128xf32>
    %176 = arith.mulf %171, %175 : vector<64x128xf32>
    %177 = arith.truncf %176 : vector<64x128xf32> to vector<64x128xbf16>
    %178 = arith.truncf %160 : vector<128x32xf32> to vector<128x32xbf16>
    %cst_92 = arith.constant dense<0.000000e+00> : vector<64x32xf32>
    %179 = tpu.matmul %177, %178, %cst_92 {dimension_numbers = #tpu.dot_dimension_numbers<[1], [0], [0], [1], [0, 0, 1, 1], [], []>} : vector<64x128xbf16>, vector<128x32xbf16>, vector<64x32xf32> -> vector<64x32xf32>
    %180 = arith.truncf %179 : vector<64x32xf32> to vector<64x32xbf16>
    %c64_93 = arith.constant 64 : index
    %c0_94 = arith.constant 0 : index
    %181 = vector.load %arg11[%c64_93, %c0_94] : memref<128x128xbf16, #tpu.memory_space<vmem>>, vector<32x128xbf16>
    %cst_95 = arith.constant dense<0.000000e+00> : vector<64x128xf32>
    %182 = tpu.matmul %180, %181, %cst_95 {dimension_numbers = #tpu.dot_dimension_numbers<[1], [0], [0], [1], [0, 0, 1, 1], [], []>} : vector<64x32xbf16>, vector<32x128xbf16>, vector<64x128xf32> -> vector<64x128xf32>
    %183 = arith.addf %143, %182 : vector<64x128xf32>
    %c0_96 = arith.constant 0 : index
    %c96 = arith.constant 96 : index
    %184 = vector.load %arg5[%c0_96, %c96] : memref<128x128xbf16, #tpu.memory_space<vmem>>, vector<128x32xbf16>
    %cst_97 = arith.constant dense<0.000000e+00> : vector<64x32xf32>
    %185 = tpu.matmul %31, %184, %cst_97 {dimension_numbers = #tpu.dot_dimension_numbers<[1], [0], [0], [1], [0, 0, 1, 1], [], []>} : vector<64x128xbf16>, vector<128x32xbf16>, vector<64x32xf32> -> vector<64x32xf32>
    %c0_98 = arith.constant 0 : index
    %c96_99 = arith.constant 96 : index
    %186 = vector.load %arg6[%c0_98, %c96_99] : memref<1x128xf32, #tpu.memory_space<vmem>>, vector<1x32xf32>
    %187 = vector.broadcast %186 : vector<1x32xf32> to vector<64x32xf32>
    %188 = arith.addf %185, %187 : vector<64x32xf32>
    %cst_100 = arith.constant 0.176776692 : f32
    %189 = vector.broadcast %cst_100 : f32 to vector<64x32xf32>
    %190 = arith.mulf %188, %189 : vector<64x32xf32>
    %c0_101 = arith.constant 0 : index
    %c96_102 = arith.constant 96 : index
    %191 = vector.load %arg7[%c0_101, %c96_102] : memref<128x128xbf16, #tpu.memory_space<vmem>>, vector<128x32xbf16>
    %cst_103 = arith.constant dense<0.000000e+00> : vector<128x32xf32>
    %192 = tpu.matmul %57, %191, %cst_103 {dimension_numbers = #tpu.dot_dimension_numbers<[1], [0], [0], [1], [0, 0, 1, 1], [], []>} : vector<128x128xbf16>, vector<128x32xbf16>, vector<128x32xf32> -> vector<128x32xf32>
    %c0_104 = arith.constant 0 : index
    %c96_105 = arith.constant 96 : index
    %193 = vector.load %arg8[%c0_104, %c96_105] : memref<1x128xf32, #tpu.memory_space<vmem>>, vector<1x32xf32>
    %194 = vector.broadcast %193 : vector<1x32xf32> to vector<128x32xf32>
    %195 = arith.addf %192, %194 : vector<128x32xf32>
    %c0_106 = arith.constant 0 : index
    %c96_107 = arith.constant 96 : index
    %196 = vector.load %arg9[%c0_106, %c96_107] : memref<128x128xbf16, #tpu.memory_space<vmem>>, vector<128x32xbf16>
    %cst_108 = arith.constant dense<0.000000e+00> : vector<128x32xf32>
    %197 = tpu.matmul %57, %196, %cst_108 {dimension_numbers = #tpu.dot_dimension_numbers<[1], [0], [0], [1], [0, 0, 1, 1], [], []>} : vector<128x128xbf16>, vector<128x32xbf16>, vector<128x32xf32> -> vector<128x32xf32>
    %c0_109 = arith.constant 0 : index
    %c96_110 = arith.constant 96 : index
    %198 = vector.load %arg10[%c0_109, %c96_110] : memref<1x128xf32, #tpu.memory_space<vmem>>, vector<1x32xf32>
    %199 = vector.broadcast %198 : vector<1x32xf32> to vector<128x32xf32>
    %200 = arith.addf %197, %199 : vector<128x32xf32>
    %201 = arith.truncf %190 : vector<64x32xf32> to vector<64x32xbf16>
    %202 = arith.truncf %195 : vector<128x32xf32> to vector<128x32xbf16>
    %203 = tpu.transpose %202, [1, 0] : vector<128x32xbf16> -> vector<32x128xbf16>
    %cst_111 = arith.constant dense<0.000000e+00> : vector<64x128xf32>
    %204 = tpu.matmul %201, %203, %cst_111 {dimension_numbers = #tpu.dot_dimension_numbers<[1], [0], [0], [1], [0, 0, 1, 1], [], []>} : vector<64x32xbf16>, vector<32x128xbf16>, vector<64x128xf32> -> vector<64x128xf32>
    %205 = vector.broadcast %62 : vector<1x128xf32> to vector<64x128xf32>
    %206 = arith.addf %204, %205 : vector<64x128xf32>
    %cst_112 = arith.constant dense<0xFF800000> : vector<64xf32>
    %207 = vector.multi_reduction <maximumf>, %206, %cst_112 [1] : vector<64x128xf32> to vector<64xf32>
    %208 = vector.shape_cast %207 : vector<64xf32> to vector<64x1xf32>
    %209 = vector.broadcast %208 : vector<64x1xf32> to vector<64x128xf32>
    %210 = arith.subf %206, %209 : vector<64x128xf32>
    %211 = math.exp %210 : vector<64x128xf32>
    %cst_113 = arith.constant dense<0.000000e+00> : vector<64xf32>
    %212 = vector.multi_reduction <add>, %211, %cst_113 [1] : vector<64x128xf32> to vector<64xf32>
    %213 = vector.shape_cast %212 : vector<64xf32> to vector<64x1xf32>
    %214 = tpu.reciprocal %213 {approx = true} : vector<64x1xf32> -> vector<64x1xf32>
    %215 = vector.broadcast %214 : vector<64x1xf32> to vector<64x128xf32>
    %216 = arith.mulf %211, %215 : vector<64x128xf32>
    %217 = arith.truncf %216 : vector<64x128xf32> to vector<64x128xbf16>
    %218 = arith.truncf %200 : vector<128x32xf32> to vector<128x32xbf16>
    %cst_114 = arith.constant dense<0.000000e+00> : vector<64x32xf32>
    %219 = tpu.matmul %217, %218, %cst_114 {dimension_numbers = #tpu.dot_dimension_numbers<[1], [0], [0], [1], [0, 0, 1, 1], [], []>} : vector<64x128xbf16>, vector<128x32xbf16>, vector<64x32xf32> -> vector<64x32xf32>
    %220 = arith.truncf %219 : vector<64x32xf32> to vector<64x32xbf16>
    %c96_115 = arith.constant 96 : index
    %c0_116 = arith.constant 0 : index
    %221 = vector.load %arg11[%c96_115, %c0_116] : memref<128x128xbf16, #tpu.memory_space<vmem>>, vector<32x128xbf16>
    %cst_117 = arith.constant dense<0.000000e+00> : vector<64x128xf32>
    %222 = tpu.matmul %220, %221, %cst_117 {dimension_numbers = #tpu.dot_dimension_numbers<[1], [0], [0], [1], [0, 0, 1, 1], [], []>} : vector<64x32xbf16>, vector<32x128xbf16>, vector<64x128xf32> -> vector<64x128xf32>
    %223 = arith.addf %183, %222 : vector<64x128xf32>
    %224 = arith.addf %1, %223 : vector<64x128xf32>
    %c0_118 = arith.constant 0 : index
    %c0_119 = arith.constant 0 : index
    %225 = vector.load %arg12[%c0_118, %c0_119] : memref<1x128xf32, #tpu.memory_space<vmem>>, vector<1x128xf32>
    %226 = vector.broadcast %225 : vector<1x128xf32> to vector<64x128xf32>
    %227 = arith.addf %224, %226 : vector<64x128xf32>
    %cst_120 = arith.constant dense<0.000000e+00> : vector<64xf32>
    %228 = vector.multi_reduction <add>, %227, %cst_120 [1] : vector<64x128xf32> to vector<64xf32>
    %229 = vector.shape_cast %228 : vector<64xf32> to vector<64x1xf32>
    %cst_121 = arith.constant 1.280000e+02 : f32
    %230 = vector.broadcast %cst_121 : f32 to vector<64x1xf32>
    %231 = arith.divf %229, %230 : vector<64x1xf32>
    %232 = vector.broadcast %231 : vector<64x1xf32> to vector<64x128xf32>
    %233 = arith.subf %227, %232 : vector<64x128xf32>
    %234 = arith.mulf %233, %233 : vector<64x128xf32>
    %cst_122 = arith.constant dense<0.000000e+00> : vector<64xf32>
    %235 = vector.multi_reduction <add>, %234, %cst_122 [1] : vector<64x128xf32> to vector<64xf32>
    %236 = vector.shape_cast %235 : vector<64xf32> to vector<64x1xf32>
    %cst_123 = arith.constant 0.00787401571 : f32
    %237 = vector.broadcast %cst_123 : f32 to vector<64x1xf32>
    %238 = arith.mulf %236, %237 : vector<64x1xf32>
    %239 = math.sqrt %238 : vector<64x1xf32>
    %c0_124 = arith.constant 0 : index
    %c0_125 = arith.constant 0 : index
    %240 = vector.load %arg19[%c0_124, %c0_125] : memref<1x128xf32, #tpu.memory_space<vmem>>, vector<1x128xf32>
    %241 = vector.broadcast %231 : vector<64x1xf32> to vector<64x128xf32>
    %242 = arith.subf %227, %241 : vector<64x128xf32>
    %243 = vector.broadcast %240 : vector<1x128xf32> to vector<64x128xf32>
    %244 = arith.mulf %243, %242 : vector<64x128xf32>
    %cst_126 = arith.constant 9.99999997E-7 : f32
    %245 = vector.broadcast %cst_126 : f32 to vector<64x1xf32>
    %246 = arith.addf %239, %245 : vector<64x1xf32>
    %247 = tpu.reciprocal %246 : vector<64x1xf32> -> vector<64x1xf32>
    %248 = vector.broadcast %247 : vector<64x1xf32> to vector<64x128xf32>
    %249 = arith.mulf %244, %248 : vector<64x128xf32>
    %c0_127 = arith.constant 0 : index
    %c0_128 = arith.constant 0 : index
    %250 = vector.load %arg20[%c0_127, %c0_128] : memref<1x128xf32, #tpu.memory_space<vmem>>, vector<1x128xf32>
    %251 = vector.broadcast %250 : vector<1x128xf32> to vector<64x128xf32>
    %252 = arith.addf %249, %251 : vector<64x128xf32>
    %253 = arith.truncf %252 : vector<64x128xf32> to vector<64x128xbf16>
    %c0_129 = arith.constant 0 : index
    %c0_130 = arith.constant 0 : index
    %254 = vector.load %arg13[%c0_129, %c0_130] : memref<128x256xbf16, #tpu.memory_space<vmem>>, vector<128x256xbf16>
    %cst_131 = arith.constant dense<0.000000e+00> : vector<64x256xf32>
    %255 = tpu.matmul %253, %254, %cst_131 {dimension_numbers = #tpu.dot_dimension_numbers<[1], [0], [0], [1], [0, 0, 1, 1], [], []>} : vector<64x128xbf16>, vector<128x256xbf16>, vector<64x256xf32> -> vector<64x256xf32>
    %c0_132 = arith.constant 0 : index
    %c0_133 = arith.constant 0 : index
    %256 = vector.load %arg14[%c0_132, %c0_133] : memref<1x256xf32, #tpu.memory_space<vmem>>, vector<1x256xf32>
    %257 = vector.broadcast %256 : vector<1x256xf32> to vector<64x256xf32>
    %258 = arith.addf %255, %257 : vector<64x256xf32>
    %cst_134 = arith.constant 0.000000e+00 : f32
    %259 = vector.broadcast %cst_134 : f32 to vector<64x256xf32>
    %260 = arith.maximumf %258, %259 : vector<64x256xf32>
    %261 = arith.truncf %260 : vector<64x256xf32> to vector<64x256xbf16>
    %c0_135 = arith.constant 0 : index
    %c0_136 = arith.constant 0 : index
    %262 = vector.load %arg15[%c0_135, %c0_136] : memref<256x128xbf16, #tpu.memory_space<vmem>>, vector<256x128xbf16>
    %cst_137 = arith.constant dense<0.000000e+00> : vector<64x128xf32>
    %263 = tpu.matmul %261, %262, %cst_137 {dimension_numbers = #tpu.dot_dimension_numbers<[1], [0], [0], [1], [0, 0, 1, 1], [], []>} : vector<64x256xbf16>, vector<256x128xbf16>, vector<64x128xf32> -> vector<64x128xf32>
    %c0_138 = arith.constant 0 : index
    %c0_139 = arith.constant 0 : index
    %264 = vector.load %arg16[%c0_138, %c0_139] : memref<1x128xf32, #tpu.memory_space<vmem>>, vector<1x128xf32>
    %265 = vector.broadcast %264 : vector<1x128xf32> to vector<64x128xf32>
    %266 = arith.addf %263, %265 : vector<64x128xf32>
    %267 = arith.addf %227, %266 : vector<64x128xf32>
    %c0_140 = arith.constant 0 : index
    %c0_141 = arith.constant 0 : index
    %c0_142 = arith.constant 0 : index
    %268 = vector.load %arg21[%c0_140, %c0_141, %c0_142] : memref<1x64x128xf32, #tpu.memory_space<vmem>>, vector<1x64x128xf32>
    %269 = vector.shape_cast %268 : vector<1x64x128xf32> to vector<64x128xf32>
    %270 = vector.shape_cast %267 : vector<64x128xf32> to vector<1x64x128xf32>
    tpu.vector_store %arg21[%c0_140, %c0_141, %c0_142], %270 {strides = array<i32>} : memref<1x64x128xf32, #tpu.memory_space<vmem>>, vector<1x64x128xf32>,
    return
  }
  func.func @transform_0(%arg0: i32, %arg1: i32) -> (i32, i32, i32) {
    %c0_i32 = arith.constant 0 : i32
    %c0_i32_0 = arith.constant 0 : i32
    return %arg0, %arg1, %c0_i32 : i32, i32, i32
  }
  func.func @transform_1(%arg0: i32, %arg1: i32) -> (i32, i32, i32) {
    %c0_i32 = arith.constant 0 : i32
    %c0_i32_0 = arith.constant 0 : i32
    %c0_i32_1 = arith.constant 0 : i32
    return %arg0, %c0_i32, %c0_i32_0 : i32, i32, i32
  }
  func.func @transform_2(%arg0: i32, %arg1: i32) -> (i32, i32, i32) {
    %c0_i32 = arith.constant 0 : i32
    %c0_i32_0 = arith.constant 0 : i32
    %c0_i32_1 = arith.constant 0 : i32
    return %arg0, %c0_i32, %c0_i32_0 : i32, i32, i32
  }
  func.func @transform_3(%arg0: i32, %arg1: i32) -> (i32, i32) {
    %c0_i32 = arith.constant 0 : i32
    %c0_i32_0 = arith.constant 0 : i32
    %c0_i32_1 = arith.constant 0 : i32
    return %c0_i32, %c0_i32_0 : i32, i32
  }
  func.func @transform_4(%arg0: i32, %arg1: i32) -> (i32, i32) {
    %c0_i32 = arith.constant 0 : i32
    %c0_i32_0 = arith.constant 0 : i32
    %c0_i32_1 = arith.constant 0 : i32
    return %c0_i32, %c0_i32_0 : i32, i32
  }
  func.func @transform_5(%arg0: i32, %arg1: i32) -> (i32, i32) {
    %c0_i32 = arith.constant 0 : i32
    %c0_i32_0 = arith.constant 0 : i32
    %c0_i32_1 = arith.constant 0 : i32
    return %c0_i32, %c0_i32_0 : i32, i32
  }
  func.func @transform_6(%arg0: i32, %arg1: i32) -> (i32, i32) {
    %c0_i32 = arith.constant 0 : i32
    %c0_i32_0 = arith.constant 0 : i32
    %c0_i32_1 = arith.constant 0 : i32
    return %c0_i32, %c0_i32_0 : i32, i32
  }
  func.func @transform_7(%arg0: i32, %arg1: i32) -> (i32, i32) {
    %c0_i32 = arith.constant 0 : i32
    %c0_i32_0 = arith.constant 0 : i32
    %c0_i32_1 = arith.constant 0 : i32
    return %c0_i32, %c0_i32_0 : i32, i32
  }
  func.func @transform_8(%arg0: i32, %arg1: i32) -> (i32, i32) {
    %c0_i32 = arith.constant 0 : i32
    %c0_i32_0 = arith.constant 0 : i32
    %c0_i32_1 = arith.constant 0 : i32
    return %c0_i32, %c0_i32_0 : i32, i32
  }
  func.func @transform_9(%arg0: i32, %arg1: i32) -> (i32, i32) {
    %c0_i32 = arith.constant 0 : i32
    %c0_i32_0 = arith.constant 0 : i32
    %c0_i32_1 = arith.constant 0 : i32
    return %c0_i32, %c0_i32_0 : i32, i32
  }
  func.func @transform_10(%arg0: i32, %arg1: i32) -> (i32, i32) {
    %c0_i32 = arith.constant 0 : i32
    %c0_i32_0 = arith.constant 0 : i32
    %c0_i32_1 = arith.constant 0 : i32
    return %c0_i32, %c0_i32_0 : i32, i32
  }
  func.func @transform_11(%arg0: i32, %arg1: i32) -> (i32, i32) {
    %c0_i32 = arith.constant 0 : i32
    %c0_i32_0 = arith.constant 0 : i32
    %c0_i32_1 = arith.constant 0 : i32
    return %c0_i32, %c0_i32_0 : i32, i32
  }
  func.func @transform_12(%arg0: i32, %arg1: i32) -> (i32, i32) {
    %c0_i32 = arith.constant 0 : i32
    %c0_i32_0 = arith.constant 0 : i32
    %c0_i32_1 = arith.constant 0 : i32
    return %c0_i32, %c0_i32_0 : i32, i32
  }
  func.func @transform_13(%arg0: i32, %arg1: i32) -> (i32, i32) {
    %c0_i32 = arith.constant 0 : i32
    %c0_i32_0 = arith.constant 0 : i32
    %c0_i32_1 = arith.constant 0 : i32
    return %c0_i32, %c0_i32_0 : i32, i32
  }
  func.func @transform_14(%arg0: i32, %arg1: i32) -> (i32, i32) {
    %c0_i32 = arith.constant 0 : i32
    %c0_i32_0 = arith.constant 0 : i32
    %c0_i32_1 = arith.constant 0 : i32
    return %c0_i32, %c0_i32_0 : i32, i32
  }
  func.func @transform_15(%arg0: i32, %arg1: i32) -> (i32, i32) {
    %c0_i32 = arith.constant 0 : i32
    %c0_i32_0 = arith.constant 0 : i32
    %c0_i32_1 = arith.constant 0 : i32
    return %c0_i32, %c0_i32_0 : i32, i32
  }
  func.func @transform_16(%arg0: i32, %arg1: i32) -> (i32, i32) {
    %c0_i32 = arith.constant 0 : i32
    %c0_i32_0 = arith.constant 0 : i32
    %c0_i32_1 = arith.constant 0 : i32
    return %c0_i32, %c0_i32_0 : i32, i32
  }
  func.func @transform_17(%arg0: i32, %arg1: i32) -> (i32, i32) {
    %c0_i32 = arith.constant 0 : i32
    %c0_i32_0 = arith.constant 0 : i32
    %c0_i32_1 = arith.constant 0 : i32
    return %c0_i32, %c0_i32_0 : i32, i32
  }
  func.func @transform_18(%arg0: i32, %arg1: i32) -> (i32, i32) {
    %c0_i32 = arith.constant 0 : i32
    %c0_i32_0 = arith.constant 0 : i32
    %c0_i32_1 = arith.constant 0 : i32
    return %c0_i32, %c0_i32_0 : i32, i32
  }
  func.func @transform_19(%arg0: i32, %arg1: i32) -> (i32, i32, i32) {
    %c0_i32 = arith.constant 0 : i32
    %c0_i32_0 = arith.constant 0 : i32
    return %arg0, %arg1, %c0_i32 : i32, i32, i32
  }
}

</mosaic_0001>

<llo_original>
// kernel: tpu_custom_call.1
$region0: #{tpu_custom_call.1}
  #allocation0 [shape = 'u32[]', space=smem, size = 0x4, offset = 0x4, fixed_abs, tag = 'smem constant byte address 0x4 - core index']
  #allocation1 [shape = 'u32[144,128]{1,0:T(1,128)}', space=vmem, size = 0x12000, scoped, tag = 'internal scratch']
  %s0 = inlined_call_operand.hbm [shape: f32[2,128,128], index: 0, kind: input, shape index: {}]
  %s1 = inlined_call_operand.hbm [shape: f32[2,128,128], index: 1, kind: input, shape index: {}]
  %s2 = inlined_call_operand.vmem [shape: f32[2,1,128], index: 2, kind: input, shape index: {}]
  %s3 = inlined_call_operand.hbm [shape: bf16[128,128], index: 3, kind: input, shape index: {}]
  %s4 = inlined_call_operand.vmem [shape: f32[1,128], index: 4, kind: input, shape index: {}]
  %s5 = inlined_call_operand.hbm [shape: bf16[128,128], index: 5, kind: input, shape index: {}]
  %s6 = inlined_call_operand.vmem [shape: f32[1,128], index: 6, kind: input, shape index: {}]
  %s7 = inlined_call_operand.hbm [shape: bf16[128,128], index: 7, kind: input, shape index: {}]
  %s8 = inlined_call_operand.vmem [shape: f32[1,128], index: 8, kind: input, shape index: {}]
  %s9 = inlined_call_operand.hbm [shape: bf16[128,128], index: 9, kind: input, shape index: {}]
  %s10 = inlined_call_operand.vmem [shape: f32[1,128], index: 10, kind: input, shape index: {}]
  %s11 = inlined_call_operand.hbm [shape: bf16[128,256], index: 11, kind: input, shape index: {}]
  %s12 = inlined_call_operand.vmem [shape: f32[1,256], index: 12, kind: input, shape index: {}]
  %s13 = inlined_call_operand.hbm [shape: bf16[256,128], index: 13, kind: input, shape index: {}]
  %s14 = inlined_call_operand.vmem [shape: f32[1,128], index: 14, kind: input, shape index: {}]
  %s15 = inlined_call_operand.vmem [shape: f32[1,128], index: 15, kind: input, shape index: {}]
  %s16 = inlined_call_operand.vmem [shape: f32[1,128], index: 16, kind: input, shape index: {}]
  %s17 = inlined_call_operand.vmem [shape: f32[1,128], index: 17, kind: input, shape index: {}]
  %s18 = inlined_call_operand.vmem [shape: f32[1,128], index: 18, kind: input, shape index: {}]
  %s19 = inlined_call_operand.hbm [shape: f32[2,128,128], index: 19, kind: output, shape index: {}]
  %s20 = sld [smem:[#allocation0]]
  $region141: #{tpu_custom_call.1} parent=0
    _
  %s22 = ssub.s32 1, %s20
  %s23 = scalar_select 0, %s22, %s20
  $region1: #{tpu_custom_call.1} parent=0
    #allocation2 [shape = 'u8[65536]{0}', space=vmem, size = 0x10000, scoped, tag = 'input window, operand 0']
    #allocation3 [shape = 's32[2]{0}', space=sflag, size = 0x8, scoped, tag = 'scoped memory for tpu_custom_call.1']
    #allocation4 [shape = 's32[2]{0}', space=sflag, size = 0x8, scoped, tag = 'scoped memory for tpu_custom_call.1']
    #allocation5 [shape = 'u8[131072]{0}', space=vmem, size = 0x20000, scoped, tag = 'input window, operand 1']
    #allocation6 [shape = 's32[2]{0}', space=sflag, size = 0x8, scoped, tag = 'scoped memory for tpu_custom_call.1']
    #allocation7 [shape = 'u8[32768]{0}', space=vmem, size = 0x8000, scoped, tag = 'input window, operand 3, single buffered']
    #allocation8 [shape = 'u8[32768]{0}', space=vmem, size = 0x8000, scoped, tag = 'input window, operand 5, single buffered']
    #allocation9 [shape = 's32[1]{0}', space=sflag, size = 0x4, scoped, tag = 'scoped memory for tpu_custom_call.1']
    #allocation10 [shape = 'u8[32768]{0}', space=vmem, size = 0x8000, scoped, tag = 'input window, operand 7, single buffered']
    #allocation11 [shape = 'u8[32768]{0}', space=vmem, size = 0x8000, scoped, tag = 'input window, operand 9, single buffered']
    #allocation12 [shape = 's32[1]{0}', space=sflag, size = 0x4, scoped, tag = 'scoped memory for tpu_custom_call.1']
    #allocation13 [shape = 'u8[65536]{0}', space=vmem, size = 0x10000, scoped, tag = 'input window, operand 11, single buffered']
    #allocation14 [shape = 'u8[65536]{0}', space=vmem, size = 0x10000, scoped, tag = 'input window, operand 13, single buffered']
    #allocation15 [shape = 's32[1]{0}', space=sflag, size = 0x4, scoped, tag = 'scoped memory for tpu_custom_call.1']
    #allocation16 [shape = 'u8[65536]{0}', space=vmem, size = 0x10000, scoped, tag = 'output window, operand 0']
    %24 = vsyncpa [#allocation3], 0
    %s25 = scalar_lea.sflag [#allocation3], 1
    %26 = vsyncpa %s25, 0
    %27 = vsyncpa [#allocation6], 0
    %s28 = scalar_lea.sflag [#allocation6], 1
    %29 = vsyncpa %s28, 0
    %30 = vsyncpa [#allocation9], 0
    %31 = vsyncpa [#allocation12], 0
    %32 = vsyncpa [#allocation15], 0
    %33 = vsyncpa [#allocation4], 0
    %s34 = scalar_lea.sflag [#allocation4], 1
    %35 = vsyncpa %s34, 0
    loop: start=0, step=1, limit=6
    $region2: #{tpu_custom_call.1} parent=1 // loop_pre_header
      _
    $region3: #{tpu_custom_call.1} parent=1 // loop_header
      %s37 = sphi 0, %s41
      %p38 = scmp.ge.s32.totalorder %s37, 6
      %s44 = sphi 0, %s56
      %s45 = sphi 0, %s52
      %s46 = sphi 0, %s44
      %s47 = sphi 0, %s45
      %s48 = sphi 0, %s46
      %s49 = sphi 0, %s47
      %s61 = sphi 0, %s63
      %s64 = sphi 0, %s61
      %s65 = sphi 0, %s64
      %s81 = sphi 0, %s65
      %s87 = sphi 0, %s89
      %s90 = sphi 0, %s87
      %s91 = sphi 0, %s90
      %s107 = sphi 0, %s91
      %s113 = sphi 0, %s115
      %s116 = sphi 0, %s113
      %s117 = sphi 0, %s116
      %s133 = sphi 0, %s117
      %s137 = sphi 0, %s137
      %s139 = sphi 0, %s137
      %s140 = sphi 0, %s139
      %s154 = sphi 0, %s140
      %s158 = sphi 0, %s158
      %s160 = sphi 0, %s158
      %s161 = sphi 0, %s160
      %s175 = sphi 0, %s161
      %s179 = sphi 0, %s179
      %s181 = sphi 0, %s179
      %s182 = sphi 0, %s181
      %s196 = sphi 0, %s182
      %s200 = sphi 0, %s200
      %s202 = sphi 0, %s200
      %s203 = sphi 0, %s202
      %s217 = sphi 0, %s203
      %s221 = sphi 0, %s221
      %s223 = sphi 0, %s221
      %s224 = sphi 0, %s223
      %s238 = sphi 0, %s224
      %s242 = sphi 0, %s242
      %s244 = sphi 0, %s242
      %s245 = sphi 0, %s244
      %s259 = sphi 0, %s245
      %s263 = sphi 0, %s263
      %s265 = sphi 0, %s263
      %s266 = sphi 0, %s265
      %s280 = sphi 0, %s266
      %s284 = sphi 0, %s284
      %s286 = sphi 0, %s284
      %s287 = sphi 0, %s286
      %s301 = sphi 0, %s287
      %s305 = sphi 0, %s305
      %s307 = sphi 0, %s305
      %s308 = sphi 0, %s307
      %s322 = sphi 0, %s308
      %s326 = sphi 0, %s326
      %s328 = sphi 0, %s326
      %s329 = sphi 0, %s328
      %s343 = sphi 0, %s329
      %s347 = sphi 0, %s347
      %s349 = sphi 0, %s347
      %s350 = sphi 0, %s349
      %s364 = sphi 0, %s350
      %s368 = sphi 0, %s368
      %s370 = sphi 0, %s368
      %s371 = sphi 0, %s370
      %s385 = sphi 0, %s371
      %s389 = sphi 0, %s389
      %s391 = sphi 0, %s389
      %s392 = sphi 0, %s391
      %s406 = sphi 0, %s392
      %s410 = sphi 0, %s410
      %s412 = sphi 0, %s410
      %s413 = sphi 0, %s412
      %s427 = sphi 0, %s413
      %s431 = sphi 0, %s431
      %s433 = sphi 0, %s431
      %s434 = sphi 0, %s433
      %s448 = sphi 0, %s434
      %s452 = sphi 0, %s452
      %s454 = sphi 0, %s452
      %s455 = sphi 0, %s454
      %s469 = sphi 0, %s455
      %s477 = sphi 0, %s479
      %s480 = sphi 0, %s477
      %s481 = sphi 0, %s480
      %s497 = sphi 0, %s481
    $region4: #{tpu_custom_call.1} parent=1 // loop_header_branch
      %40 = sbr.rel (%p38) target = $region8
    $region5: #{tpu_custom_call.1} parent=1 // loop_body
      %s42 = ssub.s32 %s37, 1
      %s43 = ssub.s32 %s37, 2
      %s50 = sadd.s32 1, %s45
      %p51 = scmp.ge.s32.totalorder %s50, 2
      %s52 = scalar_select %p51, 0, %s50
      %s53 = sadd.s32 1, %s44
      %s54 = scalar_select %p51, %s53, %s44
      %p55 = scmp.ge.s32.totalorder %s54, 2
      %s56 = scalar_select %p55, 0, %s54
      %s57 = ssub.s32 %s44, %s56
      %s58 = ssub.s32 %s45, %s52
      %s59 = sor.u32 %s57, %s58
      %p60 = scmp.eq.s32.totalorder %s59, 0
      %s62 = sadd.s32 %s61, 1
      %s63 = scalar_select %p60, %s61, %s62
      %p66 = pneg %p60
      %p67 = scmp.eq.s32.totalorder %s37, 3
      %p68 = por %p66, %p67
      %p69 = scmp.ne.s32.totalorder %s61, %s64
      %p70 = scmp.eq.s32.totalorder %s37, 0
      %p71 = por %p69, %p70
      %p72 = scmp.ne.s32.totalorder %s61, %s64
      %p73 = scmp.eq.s32.totalorder %s42, 3
      %p74 = por %p72, %p73
      %p75 = scmp.ne.s32.totalorder %s64, %s65
      %p76 = scmp.eq.s32.totalorder %s42, 0
      %p77 = por %p75, %p76
      %p78 = scmp.ne.s32.totalorder %s64, %s65
      %p79 = scmp.eq.s32.totalorder %s43, 3
      %p80 = por %p78, %p79
      %p82 = scmp.ne.s32.totalorder %s65, %s81
      %p83 = scmp.eq.s32.totalorder %s43, 0
      %p84 = por %p82, %p83
      %s85 = ssub.s32 %s44, %s56
      %p86 = scmp.eq.s32.totalorder %s85, 0
      %s88 = sadd.s32 %s87, 1
      %s89 = scalar_select %p86, %s87, %s88
      %p92 = pneg %p86
      %p93 = scmp.eq.s32.totalorder %s37, 3
      %p94 = por %p92, %p93
      %p95 = scmp.ne.s32.totalorder %s87, %s90
      %p96 = scmp.eq.s32.totalorder %s37, 0
      %p97 = por %p95, %p96
      %p98 = scmp.ne.s32.totalorder %s87, %s90
      %p99 = scmp.eq.s32.totalorder %s42, 3
      %p100 = por %p98, %p99
      %p101 = scmp.ne.s32.totalorder %s90, %s91
      %p102 = scmp.eq.s32.totalorder %s42, 0
      %p103 = por %p101, %p102
      %p104 = scmp.ne.s32.totalorder %s90, %s91
      %p105 = scmp.eq.s32.totalorder %s43, 3
      %p106 = por %p104, %p105
      %p108 = scmp.ne.s32.totalorder %s91, %s107
      %p109 = scmp.eq.s32.totalorder %s43, 0
      %p110 = por %p108, %p109
      %s111 = ssub.s32 %s44, %s56
      %p112 = scmp.eq.s32.totalorder %s111, 0
      %s114 = sadd.s32 %s113, 1
      %s115 = scalar_select %p112, %s113, %s114
      %p118 = pneg %p112
      %p119 = scmp.eq.s32.totalorder %s37, 3
      %p120 = por %p118, %p119
      %p121 = scmp.ne.s32.totalorder %s113, %s116
      %p122 = scmp.eq.s32.totalorder %s37, 0
      %p123 = por %p121, %p122
      %p124 = scmp.ne.s32.totalorder %s113, %s116
      %p125 = scmp.eq.s32.totalorder %s42, 3
      %p126 = por %p124, %p125
      %p127 = scmp.ne.s32.totalorder %s116, %s117
      %p128 = scmp.eq.s32.totalorder %s42, 0
      %p129 = por %p127, %p128
      %p130 = scmp.ne.s32.totalorder %s116, %s117
      %p131 = scmp.eq.s32.totalorder %s43, 3
      %p132 = por %p130, %p131
      %p134 = scmp.ne.s32.totalorder %s117, %s133
      %p135 = scmp.eq.s32.totalorder %s43, 0
      %p136 = por %p134, %p135
      %s138 = sadd.s32 %s137, 1
      %p141 = scmp.eq.s32.totalorder %s37, 3
      %p142 = scmp.ne.s32.totalorder %s137, %s139
      %p143 = scmp.eq.s32.totalorder %s37, 0
      %p144 = por %p142, %p143
      %p145 = scmp.ne.s32.totalorder %s137, %s139
      %p146 = scmp.eq.s32.totalorder %s42, 3
      %p147 = por %p145, %p146
      %p148 = scmp.ne.s32.totalorder %s139, %s140
      %p149 = scmp.eq.s32.totalorder %s42, 0
      %p150 = por %p148, %p149
      %p151 = scmp.ne.s32.totalorder %s139, %s140
      %p152 = scmp.eq.s32.totalorder %s43, 3
      %p153 = por %p151, %p152
      %p155 = scmp.ne.s32.totalorder %s140, %s154
      %p156 = scmp.eq.s32.totalorder %s43, 0
      %p157 = por %p155, %p156
      %s159 = sadd.s32 %s158, 1
      %p162 = scmp.eq.s32.totalorder %s37, 3
      %p163 = scmp.ne.s32.totalorder %s158, %s160
      %p164 = scmp.eq.s32.totalorder %s37, 0
      %p165 = por %p163, %p164
      %p166 = scmp.ne.s32.totalorder %s158, %s160
      %p167 = scmp.eq.s32.totalorder %s42, 3
      %p168 = por %p166, %p167
      %p169 = scmp.ne.s32.totalorder %s160, %s161
      %p170 = scmp.eq.s32.totalorder %s42, 0
      %p171 = por %p169, %p170
      %p172 = scmp.ne.s32.totalorder %s160, %s161
      %p173 = scmp.eq.s32.totalorder %s43, 3
      %p174 = por %p172, %p173
      %p176 = scmp.ne.s32.totalorder %s161, %s175
      %p177 = scmp.eq.s32.totalorder %s43, 0
      %p178 = por %p176, %p177
      %s180 = sadd.s32 %s179, 1
      %p183 = scmp.eq.s32.totalorder %s37, 3
      %p184 = scmp.ne.s32.totalorder %s179, %s181
      %p185 = scmp.eq.s32.totalorder %s37, 0
      %p186 = por %p184, %p185
      %p187 = scmp.ne.s32.totalorder %s179, %s181
      %p188 = scmp.eq.s32.totalorder %s42, 3
      %p189 = por %p187, %p188
      %p190 = scmp.ne.s32.totalorder %s181, %s182
      %p191 = scmp.eq.s32.totalorder %s42, 0
      %p192 = por %p190, %p191
      %p193 = scmp.ne.s32.totalorder %s181, %s182
      %p194 = scmp.eq.s32.totalorder %s43, 3
      %p195 = por %p193, %p194
      %p197 = scmp.ne.s32.totalorder %s182, %s196
      %p198 = scmp.eq.s32.totalorder %s43, 0
      %p199 = por %p197, %p198
      %s201 = sadd.s32 %s200, 1
      %p204 = scmp.eq.s32.totalorder %s37, 3
      %p205 = scmp.ne.s32.totalorder %s200, %s202
      %p206 = scmp.eq.s32.totalorder %s37, 0
      %p207 = por %p205, %p206
      %p208 = scmp.ne.s32.totalorder %s200, %s202
      %p209 = scmp.eq.s32.totalorder %s42, 3
      %p210 = por %p208, %p209
      %p211 = scmp.ne.s32.totalorder %s202, %s203
      %p212 = scmp.eq.s32.totalorder %s42, 0
      %p213 = por %p211, %p212
      %p214 = scmp.ne.s32.totalorder %s202, %s203
      %p215 = scmp.eq.s32.totalorder %s43, 3
      %p216 = por %p214, %p215
      %p218 = scmp.ne.s32.totalorder %s203, %s217
      %p219 = scmp.eq.s32.totalorder %s43, 0
      %p220 = por %p218, %p219
      %s222 = sadd.s32 %s221, 1
      %p225 = scmp.eq.s32.totalorder %s37, 3
      %p226 = scmp.ne.s32.totalorder %s221, %s223
      %p227 = scmp.eq.s32.totalorder %s37, 0
      %p228 = por %p226, %p227
      %p229 = scmp.ne.s32.totalorder %s221, %s223
      %p230 = scmp.eq.s32.totalorder %s42, 3
      %p231 = por %p229, %p230
      %p232 = scmp.ne.s32.totalorder %s223, %s224
      %p233 = scmp.eq.s32.totalorder %s42, 0
      %p234 = por %p232, %p233
      %p235 = scmp.ne.s32.totalorder %s223, %s224
      %p236 = scmp.eq.s32.totalorder %s43, 3
      %p237 = por %p235, %p236
      %p239 = scmp.ne.s32.totalorder %s224, %s238
      %p240 = scmp.eq.s32.totalorder %s43, 0
      %p241 = por %p239, %p240
      %s243 = sadd.s32 %s242, 1
      %p246 = scmp.eq.s32.totalorder %s37, 3
      %p247 = scmp.ne.s32.totalorder %s242, %s244
      %p248 = scmp.eq.s32.totalorder %s37, 0
      %p249 = por %p247, %p248
      %p250 = scmp.ne.s32.totalorder %s242, %s244
      %p251 = scmp.eq.s32.totalorder %s42, 3
      %p252 = por %p250, %p251
      %p253 = scmp.ne.s32.totalorder %s244, %s245
      %p254 = scmp.eq.s32.totalorder %s42, 0
      %p255 = por %p253, %p254
      %p256 = scmp.ne.s32.totalorder %s244, %s245
      %p257 = scmp.eq.s32.totalorder %s43, 3
      %p258 = por %p256, %p257
      %p260 = scmp.ne.s32.totalorder %s245, %s259
      %p261 = scmp.eq.s32.totalorder %s43, 0
      %p262 = por %p260, %p261
      %s264 = sadd.s32 %s263, 1
      %p267 = scmp.eq.s32.totalorder %s37, 3
      %p268 = scmp.ne.s32.totalorder %s263, %s265
      %p269 = scmp.eq.s32.totalorder %s37, 0
      %p270 = por %p268, %p269
      %p271 = scmp.ne.s32.totalorder %s263, %s265
      %p272 = scmp.eq.s32.totalorder %s42, 3
      %p273 = por %p271, %p272
      %p274 = scmp.ne.s32.totalorder %s265, %s266
      %p275 = scmp.eq.s32.totalorder %s42, 0
      %p276 = por %p274, %p275
      %p277 = scmp.ne.s32.totalorder %s265, %s266
      %p278 = scmp.eq.s32.totalorder %s43, 3
      %p279 = por %p277, %p278
      %p281 = scmp.ne.s32.totalorder %s266, %s280
      %p282 = scmp.eq.s32.totalorder %s43, 0
      %p283 = por %p281, %p282
      %s285 = sadd.s32 %s284, 1
      %p288 = scmp.eq.s32.totalorder %s37, 3
      %p289 = scmp.ne.s32.totalorder %s284, %s286
      %p290 = scmp.eq.s32.totalorder %s37, 0
      %p291 = por %p289, %p290
      %p292 = scmp.ne.s32.totalorder %s284, %s286
      %p293 = scmp.eq.s32.totalorder %s42, 3
      %p294 = por %p292, %p293
      %p295 = scmp.ne.s32.totalorder %s286, %s287
      %p296 = scmp.eq.s32.totalorder %s42, 0
      %p297 = por %p295, %p296
      %p298 = scmp.ne.s32.totalorder %s286, %s287
      %p299 = scmp.eq.s32.totalorder %s43, 3
      %p300 = por %p298, %p299
      %p302 = scmp.ne.s32.totalorder %s287, %s301
      %p303 = scmp.eq.s32.totalorder %s43, 0
      %p304 = por %p302, %p303
      %s306 = sadd.s32 %s305, 1
      %p309 = scmp.eq.s32.totalorder %s37, 3
      %p310 = scmp.ne.s32.totalorder %s305, %s307
      %p311 = scmp.eq.s32.totalorder %s37, 0
      %p312 = por %p310, %p311
      %p313 = scmp.ne.s32.totalorder %s305, %s307
      %p314 = scmp.eq.s32.totalorder %s42, 3
      %p315 = por %p313, %p314
      %p316 = scmp.ne.s32.totalorder %s307, %s308
      %p317 = scmp.eq.s32.totalorder %s42, 0
      %p318 = por %p316, %p317
      %p319 = scmp.ne.s32.totalorder %s307, %s308
      %p320 = scmp.eq.s32.totalorder %s43, 3
      %p321 = por %p319, %p320
      %p323 = scmp.ne.s32.totalorder %s308, %s322
      %p324 = scmp.eq.s32.totalorder %s43, 0
      %p325 = por %p323, %p324
      %s327 = sadd.s32 %s326, 1
      %p330 = scmp.eq.s32.totalorder %s37, 3
      %p331 = scmp.ne.s32.totalorder %s326, %s328
      %p332 = scmp.eq.s32.totalorder %s37, 0
      %p333 = por %p331, %p332
      %p334 = scmp.ne.s32.totalorder %s326, %s328
      %p335 = scmp.eq.s32.totalorder %s42, 3
      %p336 = por %p334, %p335
      %p337 = scmp.ne.s32.totalorder %s328, %s329
      %p338 = scmp.eq.s32.totalorder %s42, 0
      %p339 = por %p337, %p338
      %p340 = scmp.ne.s32.totalorder %s328, %s329
      %p341 = scmp.eq.s32.totalorder %s43, 3
      %p342 = por %p340, %p341
      %p344 = scmp.ne.s32.totalorder %s329, %s343
      %p345 = scmp.eq.s32.totalorder %s43, 0
      %p346 = por %p344, %p345
      %s348 = sadd.s32 %s347, 1
      %p351 = scmp.eq.s32.totalorder %s37, 3
      %p352 = scmp.ne.s32.totalorder %s347, %s349
      %p353 = scmp.eq.s32.totalorder %s37, 0
      %p354 = por %p352, %p353
      %p355 = scmp.ne.s32.totalorder %s347, %s349
      %p356 = scmp.eq.s32.totalorder %s42, 3
      %p357 = por %p355, %p356
      %p358 = scmp.ne.s32.totalorder %s349, %s350
      %p359 = scmp.eq.s32.totalorder %s42, 0
      %p360 = por %p358, %p359
      %p361 = scmp.ne.s32.totalorder %s349, %s350
      %p362 = scmp.eq.s32.totalorder %s43, 3
      %p363 = por %p361, %p362
      %p365 = scmp.ne.s32.totalorder %s350, %s364
      %p366 = scmp.eq.s32.totalorder %s43, 0
      %p367 = por %p365, %p366
      %s369 = sadd.s32 %s368, 1
      %p372 = scmp.eq.s32.totalorder %s37, 3
      %p373 = scmp.ne.s32.totalorder %s368, %s370
      %p374 = scmp.eq.s32.totalorder %s37, 0
      %p375 = por %p373, %p374
      %p376 = scmp.ne.s32.totalorder %s368, %s370
      %p377 = scmp.eq.s32.totalorder %s42, 3
      %p378 = por %p376, %p377
      %p379 = scmp.ne.s32.totalorder %s370, %s371
      %p380 = scmp.eq.s32.totalorder %s42, 0
      %p381 = por %p379, %p380
      %p382 = scmp.ne.s32.totalorder %s370, %s371
      %p383 = scmp.eq.s32.totalorder %s43, 3
      %p384 = por %p382, %p383
      %p386 = scmp.ne.s32.totalorder %s371, %s385
      %p387 = scmp.eq.s32.totalorder %s43, 0
      %p388 = por %p386, %p387
      %s390 = sadd.s32 %s389, 1
      %p393 = scmp.eq.s32.totalorder %s37, 3
      %p394 = scmp.ne.s32.totalorder %s389, %s391
      %p395 = scmp.eq.s32.totalorder %s37, 0
      %p396 = por %p394, %p395
      %p397 = scmp.ne.s32.totalorder %s389, %s391
      %p398 = scmp.eq.s32.totalorder %s42, 3
      %p399 = por %p397, %p398
      %p400 = scmp.ne.s32.totalorder %s391, %s392
      %p401 = scmp.eq.s32.totalorder %s42, 0
      %p402 = por %p400, %p401
      %p403 = scmp.ne.s32.totalorder %s391, %s392
      %p404 = scmp.eq.s32.totalorder %s43, 3
      %p405 = por %p403, %p404
      %p407 = scmp.ne.s32.totalorder %s392, %s406
      %p408 = scmp.eq.s32.totalorder %s43, 0
      %p409 = por %p407, %p408
      %s411 = sadd.s32 %s410, 1
      %p414 = scmp.eq.s32.totalorder %s37, 3
      %p415 = scmp.ne.s32.totalorder %s410, %s412
      %p416 = scmp.eq.s32.totalorder %s37, 0
      %p417 = por %p415, %p416
      %p418 = scmp.ne.s32.totalorder %s410, %s412
      %p419 = scmp.eq.s32.totalorder %s42, 3
      %p420 = por %p418, %p419
      %p421 = scmp.ne.s32.totalorder %s412, %s413
      %p422 = scmp.eq.s32.totalorder %s42, 0
      %p423 = por %p421, %p422
      %p424 = scmp.ne.s32.totalorder %s412, %s413
      %p425 = scmp.eq.s32.totalorder %s43, 3
      %p426 = por %p424, %p425
      %p428 = scmp.ne.s32.totalorder %s413, %s427
      %p429 = scmp.eq.s32.totalorder %s43, 0
      %p430 = por %p428, %p429
      %s432 = sadd.s32 %s431, 1
      %p435 = scmp.eq.s32.totalorder %s37, 3
      %p436 = scmp.ne.s32.totalorder %s431, %s433
      %p437 = scmp.eq.s32.totalorder %s37, 0
      %p438 = por %p436, %p437
      %p439 = scmp.ne.s32.totalorder %s431, %s433
      %p440 = scmp.eq.s32.totalorder %s42, 3
      %p441 = por %p439, %p440
      %p442 = scmp.ne.s32.totalorder %s433, %s434
      %p443 = scmp.eq.s32.totalorder %s42, 0
      %p444 = por %p442, %p443
      %p445 = scmp.ne.s32.totalorder %s433, %s434
      %p446 = scmp.eq.s32.totalorder %s43, 3
      %p447 = por %p445, %p446
      %p449 = scmp.ne.s32.totalorder %s434, %s448
      %p450 = scmp.eq.s32.totalorder %s43, 0
      %p451 = por %p449, %p450
      %s453 = sadd.s32 %s452, 1
      %p456 = scmp.eq.s32.totalorder %s37, 3
      %p457 = scmp.ne.s32.totalorder %s452, %s454
      %p458 = scmp.eq.s32.totalorder %s37, 0
      %p459 = por %p457, %p458
      %p460 = scmp.ne.s32.totalorder %s452, %s454
      %p461 = scmp.eq.s32.totalorder %s42, 3
      %p462 = por %p460, %p461
      %p463 = scmp.ne.s32.totalorder %s454, %s455
      %p464 = scmp.eq.s32.totalorder %s42, 0
      %p465 = por %p463, %p464
      %p466 = scmp.ne.s32.totalorder %s454, %s455
      %p467 = scmp.eq.s32.totalorder %s43, 3
      %p468 = por %p466, %p467
      %p470 = scmp.ne.s32.totalorder %s455, %s469
      %p471 = scmp.eq.s32.totalorder %s43, 0
      %p472 = por %p470, %p471
      %s473 = ssub.s32 %s44, %s56
      %s474 = ssub.s32 %s45, %s52
      %s475 = sor.u32 %s473, %s474
      %p476 = scmp.eq.s32.totalorder %s475, 0
      %s478 = sadd.s32 %s477, 1
      %s479 = scalar_select %p476, %s477, %s478
      %p482 = pneg %p476
      %p483 = scmp.eq.s32.totalorder %s37, 3
      %p484 = por %p482, %p483
      %p485 = scmp.ne.s32.totalorder %s477, %s480
      %p486 = scmp.eq.s32.totalorder %s37, 0
      %p487 = por %p485, %p486
      %p488 = scmp.ne.s32.totalorder %s477, %s480
      %p489 = scmp.eq.s32.totalorder %s42, 3
      %p490 = por %p488, %p489
      %p491 = scmp.ne.s32.totalorder %s480, %s481
      %p492 = scmp.eq.s32.totalorder %s42, 0
      %p493 = por %p491, %p492
      %p494 = scmp.ne.s32.totalorder %s480, %s481
      %p495 = scmp.eq.s32.totalorder %s43, 3
      %p496 = por %p494, %p495
      %p498 = scmp.ne.s32.totalorder %s481, %s497
      %p499 = scmp.eq.s32.totalorder %s43, 0
      %p500 = por %p498, %p499
      %p501 = scmp.le.s32.totalorder 1, %s37
      %p502 = scmp.lt.s32.totalorder %s37, 5
      %p503 = pnand %p501, %p502
      %p504 = pneg %p503
      // Predicated region
      $region9: #{tpu_custom_call.1} parent=5 // pred_check
        _
      $region10: #{tpu_custom_call.1} parent=5 // pred_check_branch
        %506 = sbr.rel (%p503) target = $region12
      $region11: #{tpu_custom_call.1} parent=5 // pred_region
        %s507 = ssub.s32 %s37, 1
        // Predicated region
        $region13: #{tpu_custom_call.1} parent=11 // pred_check
          %p508 = pneg %p150
        $region14: #{tpu_custom_call.1} parent=11 // pred_check_branch
          %510 = sbr.rel (%p508) target = $region16
        $region15: #{tpu_custom_call.1} parent=11 // pred_region
          %s512 = ssub.s32 1024, 1024
          %513 = vsyncadd [#allocation6], %s512
          %s514 = sshll.u32 [#allocation7], 4
          %s515 = int_to_ptr.vmem [resolvable:$true] %s514
          %520 = dma.hbm_to_vmem [thread:$0]  %s3, 1024, %s515, [#allocation6], 64, 64, 4
        $region16: #{tpu_custom_call.1} parent=11 // pred_fallthru
          _
        // Predicated region
        $region17: #{tpu_custom_call.1} parent=11 // pred_check
          %p521 = pneg %p171
        $region18: #{tpu_custom_call.1} parent=11 // pred_check_branch
          %523 = sbr.rel (%p521) target = $region20
        $region19: #{tpu_custom_call.1} parent=11 // pred_region
          _
        $region20: #{tpu_custom_call.1} parent=11 // pred_fallthru
          _
        // Predicated region
        $region21: #{tpu_custom_call.1} parent=11 // pred_check
          %p524 = pneg %p192
        $region22: #{tpu_custom_call.1} parent=11 // pred_check_branch
          %526 = sbr.rel (%p524) target = $region24
        $region23: #{tpu_custom_call.1} parent=11 // pred_region
          %s528 = ssub.s32 1024, 1024
          %529 = vsyncadd [#allocation9], %s528
          %s530 = sshll.u32 [#allocation8], 4
          %s531 = int_to_ptr.vmem [resolvable:$true] %s530
          %536 = dma.hbm_to_vmem [thread:$0]  %s5, 1024, %s531, [#allocation9], 64, 64, 4
        $region24: #{tpu_custom_call.1} parent=11 // pred_fallthru
          _
        // Predicated region
        $region25: #{tpu_custom_call.1} parent=11 // pred_check
          %p537 = pneg %p213
        $region26: #{tpu_custom_call.1} parent=11 // pred_check_branch
          %539 = sbr.rel (%p537) target = $region28
        $region27: #{tpu_custom_call.1} parent=11 // pred_region
          _
        $region28: #{tpu_custom_call.1} parent=11 // pred_fallthru
          _
        // Predicated region
        $region29: #{tpu_custom_call.1} parent=11 // pred_check
          %p540 = pneg %p234
        $region30: #{tpu_custom_call.1} parent=11 // pred_check_branch
          %542 = sbr.rel (%p540) target = $region32
        $region31: #{tpu_custom_call.1} parent=11 // pred_region
          %s544 = ssub.s32 1024, 1024
          %545 = vsyncadd [#allocation9], %s544
          %s546 = sshll.u32 [#allocation10], 4
          %s547 = int_to_ptr.vmem [resolvable:$true] %s546
          %552 = dma.hbm_to_vmem [thread:$0]  %s7, 1024, %s547, [#allocation9], 64, 64, 4
        $region32: #{tpu_custom_call.1} parent=11 // pred_fallthru
          _
        // Predicated region
        $region33: #{tpu_custom_call.1} parent=11 // pred_check
          %p553 = pneg %p255
        $region34: #{tpu_custom_call.1} parent=11 // pred_check_branch
          %555 = sbr.rel (%p553) target = $region36
        $region35: #{tpu_custom_call.1} parent=11 // pred_region
          _
        $region36: #{tpu_custom_call.1} parent=11 // pred_fallthru
          _
        // Predicated region
        $region37: #{tpu_custom_call.1} parent=11 // pred_check
          %p556 = pneg %p276
        $region38: #{tpu_custom_call.1} parent=11 // pred_check_branch
          %558 = sbr.rel (%p556) target = $region40
        $region39: #{tpu_custom_call.1} parent=11 // pred_region
          %s560 = ssub.s32 1024, 1024
          %561 = vsyncadd [#allocation12], %s560
          %s562 = sshll.u32 [#allocation11], 4
          %s563 = int_to_ptr.vmem [resolvable:$true] %s562
          %568 = dma.hbm_to_vmem [thread:$0]  %s9, 1024, %s563, [#allocation12], 64, 64, 4
        $region40: #{tpu_custom_call.1} parent=11 // pred_fallthru
          _
        // Predicated region
        $region41: #{tpu_custom_call.1} parent=11 // pred_check
          %p569 = pneg %p297
        $region42: #{tpu_custom_call.1} parent=11 // pred_check_branch
          %571 = sbr.rel (%p569) target = $region44
        $region43: #{tpu_custom_call.1} parent=11 // pred_region
          _
        $region44: #{tpu_custom_call.1} parent=11 // pred_fallthru
          _
        // Predicated region
        $region45: #{tpu_custom_call.1} parent=11 // pred_check
          %p572 = pneg %p318
        $region46: #{tpu_custom_call.1} parent=11 // pred_check_branch
          %574 = sbr.rel (%p572) target = $region48
        $region47: #{tpu_custom_call.1} parent=11 // pred_region
          %s576 = ssub.s32 2048, 2048
          %577 = vsyncadd [#allocation12], %s576
          %s578 = sshll.u32 [#allocation13], 4
          %s579 = int_to_ptr.vmem [resolvable:$true] %s578
          %584 = dma.hbm_to_vmem [thread:$0]  %s11, 2048, %s579, [#allocation12], 128, 128, 8
        $region48: #{tpu_custom_call.1} parent=11 // pred_fallthru
          _
        // Predicated region
        $region49: #{tpu_custom_call.1} parent=11 // pred_check
          %p585 = pneg %p339
        $region50: #{tpu_custom_call.1} parent=11 // pred_check_branch
          %587 = sbr.rel (%p585) target = $region52
        $region51: #{tpu_custom_call.1} parent=11 // pred_region
          _
        $region52: #{tpu_custom_call.1} parent=11 // pred_fallthru
          _
        // Predicated region
        $region53: #{tpu_custom_call.1} parent=11 // pred_check
          %p588 = pneg %p360
        $region54: #{tpu_custom_call.1} parent=11 // pred_check_branch
          %590 = sbr.rel (%p588) target = $region56
        $region55: #{tpu_custom_call.1} parent=11 // pred_region
          %s592 = ssub.s32 2048, 2048
          %593 = vsyncadd [#allocation15], %s592
          %s594 = sshll.u32 [#allocation14], 4
          %s595 = int_to_ptr.vmem [resolvable:$true] %s594
          %600 = dma.hbm_to_vmem [thread:$0]  %s13, 2048, %s595, [#allocation15], 64, 64, 4
        $region56: #{tpu_custom_call.1} parent=11 // pred_fallthru
          _
        // Predicated region
        $region57: #{tpu_custom_call.1} parent=11 // pred_check
          %p601 = pneg %p381
        $region58: #{tpu_custom_call.1} parent=11 // pred_check_branch
          %603 = sbr.rel (%p601) target = $region60
        $region59: #{tpu_custom_call.1} parent=11 // pred_region
          _
        $region60: #{tpu_custom_call.1} parent=11 // pred_fallthru
          _
        // Predicated region
        $region61: #{tpu_custom_call.1} parent=11 // pred_check
          %p604 = pneg %p402
        $region62: #{tpu_custom_call.1} parent=11 // pred_check_branch
          %606 = sbr.rel (%p604) target = $region64
        $region63: #{tpu_custom_call.1} parent=11 // pred_region
          _
        $region64: #{tpu_custom_call.1} parent=11 // pred_fallthru
          _
        // Predicated region
        $region65: #{tpu_custom_call.1} parent=11 // pred_check
          %p607 = pneg %p423
        $region66: #{tpu_custom_call.1} parent=11 // pred_check_branch
          %609 = sbr.rel (%p607) target = $region68
        $region67: #{tpu_custom_call.1} parent=11 // pred_region
          _
        $region68: #{tpu_custom_call.1} parent=11 // pred_fallthru
          _
        // Predicated region
        $region69: #{tpu_custom_call.1} parent=11 // pred_check
          %p610 = pneg %p444
        $region70: #{tpu_custom_call.1} parent=11 // pred_check_branch
          %612 = sbr.rel (%p610) target = $region72
        $region71: #{tpu_custom_call.1} parent=11 // pred_region
          _
        $region72: #{tpu_custom_call.1} parent=11 // pred_fallthru
          _
        // Predicated region
        $region73: #{tpu_custom_call.1} parent=11 // pred_check
          %p613 = pneg %p465
        $region74: #{tpu_custom_call.1} parent=11 // pred_check_branch
          %615 = sbr.rel (%p613) target = $region76
        $region75: #{tpu_custom_call.1} parent=11 // pred_region
          _
        $region76: #{tpu_custom_call.1} parent=11 // pred_fallthru
          _
      $region12: #{tpu_custom_call.1} parent=5 // pred_fallthru
        _
      %p616 = scmp.lt.s32.totalorder %s37, 4
      // Predicated region
      $region77: #{tpu_custom_call.1} parent=5 // pred_check
        %p617 = pneg %p616
      $region78: #{tpu_custom_call.1} parent=5 // pred_check_branch
        %619 = sbr.rel (%p617) target = $region80
      $region79: #{tpu_custom_call.1} parent=5 // pred_region
        // Predicated region
        $region81: #{tpu_custom_call.1} parent=79 // pred_check
          %p620 = pneg %p71
        $region82: #{tpu_custom_call.1} parent=79 // pred_check_branch
          %622 = sbr.rel (%p620) target = $region84
        $region83: #{tpu_custom_call.1} parent=79 // pred_region
          %s623 = sand.u32 %s61, 1
          %s624 = scalar_lea.sflag [#allocation3], %s623
          %s625 = sand.u32 %s61, 1
          %s626 = smul.addr %s625, 64
          %s627 = scalar_lea.vmem [#allocation2], %s626
          %s628 = smul.u32 8, %s45
          %s630 = ssub.s32 1024, 1024
          %631 = vsyncadd %s624, %s630
          %s632 = smul.addr %s44, 16
          %s633 = sadd.s32 %s628, %s632
          %s634 = smul.addr %s633, 128
          %s635 = scalar_lea.hbm %s0, %s634
          %s636 = sshll.u32 %s627, 4
          %s637 = int_to_ptr.vmem [resolvable:$true] %s636
          %642 = dma.hbm_to_vmem [thread:$0]  %s635, 1024, %s637, %s624, 128, 128, 8
        $region84: #{tpu_custom_call.1} parent=79 // pred_fallthru
          _
        // Predicated region
        $region85: #{tpu_custom_call.1} parent=79 // pred_check
          %p643 = pneg %p97
        $region86: #{tpu_custom_call.1} parent=79 // pred_check_branch
          %645 = sbr.rel (%p643) target = $region88
        $region87: #{tpu_custom_call.1} parent=79 // pred_region
          %s646 = sand.u32 %s37, 1
          %s647 = scalar_lea.sflag [#allocation6], %s646
          %s648 = sand.u32 %s87, 1
          %s649 = smul.addr %s648, 128
          %s650 = scalar_lea.vmem [#allocation5], %s649
          %s652 = ssub.s32 2048, 2048
          %653 = vsyncadd %s647, %s652
          %s654 = smul.addr %s44, 16
          %s655 = smul.addr %s654, 128
          %s656 = scalar_lea.hbm %s1, %s655
          %s657 = sshll.u32 %s650, 4
          %s658 = int_to_ptr.vmem [resolvable:$true] %s657
          %663 = dma.hbm_to_vmem [thread:$0]  %s656, 2048, %s658, %s647, 128, 128, 8
        $region88: #{tpu_custom_call.1} parent=79 // pred_fallthru
          _
        // Predicated region
        $region89: #{tpu_custom_call.1} parent=79 // pred_check
          %p664 = pneg %p123
        $region90: #{tpu_custom_call.1} parent=79 // pred_check_branch
          %666 = sbr.rel (%p664) target = $region92
        $region91: #{tpu_custom_call.1} parent=79 // pred_region
          %p667 = scmp.lt.s32.totalorder %s44, 1
          %s668 = scalar_select %p667, %s44, 1
          %s669 = scalar_lea.vmem %s2, %s668
        $region92: #{tpu_custom_call.1} parent=79 // pred_fallthru
          _
      $region80: #{tpu_custom_call.1} parent=5 // pred_fallthru
        _
      %p670 = scmp.le.s32.totalorder 1, %s37
      %p671 = scmp.lt.s32.totalorder %s37, 5
      %p672 = pnand %p670, %p671
      %p673 = pneg %p672
      // Predicated region
      $region93: #{tpu_custom_call.1} parent=5 // pred_check
        _
      $region94: #{tpu_custom_call.1} parent=5 // pred_check_branch
        %675 = sbr.rel (%p672) target = $region96
      $region95: #{tpu_custom_call.1} parent=5 // pred_region
        %s676 = ssub.s32 %s37, 1
        %s677 = sand.u32 %s64, 1
        %s678 = scalar_lea.sflag [#allocation3], %s677
        %s679 = sand.u32 %s64, 1
        %s680 = smul.addr %s679, 64
        %s681 = scalar_lea.vmem [#allocation2], %s680
        // Predicated region
        $region97: #{tpu_custom_call.1} parent=95 // pred_check
          %p682 = pneg %p77
        $region98: #{tpu_custom_call.1} parent=95 // pred_check_branch
          %684 = sbr.rel (%p682) target = $region100
        $region99: #{tpu_custom_call.1} parent=95 // pred_region
          %685 = dma.done %s678, 1024
        $region100: #{tpu_custom_call.1} parent=95 // pred_fallthru
          _
        %s686 = sand.u32 %s42, 1
        %s687 = scalar_lea.sflag [#allocation6], %s686
        %s688 = sand.u32 %s90, 1
        %s689 = smul.addr %s688, 128
        %s690 = scalar_lea.vmem [#allocation5], %s689
        // Predicated region
        $region101: #{tpu_custom_call.1} parent=95 // pred_check
          %p691 = pneg %p103
        $region102: #{tpu_custom_call.1} parent=95 // pred_check_branch
          %693 = sbr.rel (%p691) target = $region104
        $region103: #{tpu_custom_call.1} parent=95 // pred_region
          %694 = dma.done %s687, 2048
        $region104: #{tpu_custom_call.1} parent=95 // pred_fallthru
          _
        // Predicated region
        $region105: #{tpu_custom_call.1} parent=95 // pred_check
          %p695 = pneg %p150
        $region106: #{tpu_custom_call.1} parent=95 // pred_check_branch
          %697 = sbr.rel (%p695) target = $region108
        $region107: #{tpu_custom_call.1} parent=95 // pred_region
          %698 = dma.done [#allocation6], 1024
        $region108: #{tpu_custom_call.1} parent=95 // pred_fallthru
          _
        // Predicated region
        $region109: #{tpu_custom_call.1} parent=95 // pred_check
          %p699 = pneg %p192
        $region110: #{tpu_custom_call.1} parent=95 // pred_check_branch
          %701 = sbr.rel (%p699) target = $region112
        $region111: #{tpu_custom_call.1} parent=95 // pred_region
          %702 = dma.done [#allocation9], 1024
        $region112: #{tpu_custom_call.1} parent=95 // pred_fallthru
          _
        // Predicated region
        $region113: #{tpu_custom_call.1} parent=95 // pred_check
          %p703 = pneg %p234
        $region114: #{tpu_custom_call.1} parent=95 // pred_check_branch
          %705 = sbr.rel (%p703) target = $region116
        $region115: #{tpu_custom_call.1} parent=95 // pred_region
          %706 = dma.done [#allocation9], 1024
        $region116: #{tpu_custom_call.1} parent=95 // pred_fallthru
          _
        // Predicated region
        $region117: #{tpu_custom_call.1} parent=95 // pred_check
          %p707 = pneg %p276
        $region118: #{tpu_custom_call.1} parent=95 // pred_check_branch
          %709 = sbr.rel (%p707) target = $region120
        $region119: #{tpu_custom_call.1} parent=95 // pred_region
          %710 = dma.done [#allocation12], 1024
        $region120: #{tpu_custom_call.1} parent=95 // pred_fallthru
          _
        // Predicated region
        $region121: #{tpu_custom_call.1} parent=95 // pred_check
          %p711 = pneg %p318
        $region122: #{tpu_custom_call.1} parent=95 // pred_check_branch
          %713 = sbr.rel (%p711) target = $region124
        $region123: #{tpu_custom_call.1} parent=95 // pred_region
          %714 = dma.done [#allocation12], 2048
        $region124: #{tpu_custom_call.1} parent=95 // pred_fallthru
          _
        // Predicated region
        $region125: #{tpu_custom_call.1} parent=95 // pred_check
          %p715 = pneg %p360
        $region126: #{tpu_custom_call.1} parent=95 // pred_check_branch
          %717 = sbr.rel (%p715) target = $region128
        $region127: #{tpu_custom_call.1} parent=95 // pred_region
          %718 = dma.done [#allocation15], 2048
        $region128: #{tpu_custom_call.1} parent=95 // pred_fallthru
          _
        %s719 = sand.u32 %s64, 1
        %s720 = scalar_lea.sflag [#allocation3], %s719
        %s721 = sand.u32 %s64, 1
        %s722 = smul.addr %s721, 64
        %s723 = scalar_lea.vmem [#allocation2], %s722
        %p724 = pneg %p77
        %p725 = pneg %p74
        %s726 = sand.u32 %s42, 1
        %s727 = scalar_lea.sflag [#allocation6], %s726
        %s728 = sand.u32 %s90, 1
        %s729 = smul.addr %s728, 128
        %s730 = scalar_lea.vmem [#allocation5], %s729
        %p731 = pneg %p103
        %p732 = pneg %p100
        %p733 = scmp.lt.s32.totalorder %s46, 1
        %s734 = scalar_select %p733, %s46, 1
        %s735 = scalar_lea.vmem %s2, %s734
        %p736 = pneg %p129
        %p737 = pneg %p126
        %p738 = pneg %p150
        %p739 = pneg %p147
        %p740 = pneg %p171
        %p741 = pneg %p168
        %p742 = pneg %p192
        %p743 = pneg %p189
        %p744 = pneg %p213
        %p745 = pneg %p210
        %p746 = pneg %p234
        %p747 = pneg %p231
        %p748 = pneg %p255
        %p749 = pneg %p252
        %p750 = pneg %p276
        %p751 = pneg %p273
        %p752 = pneg %p297
        %p753 = pneg %p294
        %p754 = pneg %p318
        %p755 = pneg %p315
        %p756 = pneg %p339
        %p757 = pneg %p336
        %p758 = pneg %p360
        %p759 = pneg %p357
        %p760 = pneg %p381
        %p761 = pneg %p378
        %p762 = pneg %p402
        %p763 = pneg %p399
        %p764 = pneg %p423
        %p765 = pneg %p420
        %p766 = pneg %p444
        %p767 = pneg %p441
        %p768 = pneg %p465
        %p769 = pneg %p462
        %p770 = pneg %p493
        %p771 = pneg %p490
        %s772 = sand.u32 %s480, 1
        %s773 = scalar_lea.sflag [#allocation4], %s772
        %s774 = sand.u32 %s480, 1
        %s775 = smul.addr %s774, 64
        %s776 = scalar_lea.vmem [#allocation16], %s775
        %s777 = smul.u32 8, %s47
        %p778 = scmp.lt.s32.totalorder %s46, 1
        %s779 = scalar_select %p778, %s46, 1
        %s780 = scalar_lea.vmem %s2, %s779
        %s781 = smul.u32 8, %s47
        %v783 = vld [vmem:[%s681] sm:$0xff]
        %v784 = vld [vmem:[%s681 + $0x8] sm:$0xff]
        %v785 = vld [vmem:[%s681 + $0x10] sm:$0xff]
        %v786 = vld [vmem:[%s681 + $0x18] sm:$0xff]
        %v787 = vld [vmem:[%s681 + $0x20] sm:$0xff]
        %v788 = vld [vmem:[%s681 + $0x28] sm:$0xff]
        %v789 = vld [vmem:[%s681 + $0x30] sm:$0xff]
        %v790 = vld [vmem:[%s681 + $0x38] sm:$0xff]
        %v791 = vld [vmem:[%s690] sm:$0xff]
        %v792 = vld [vmem:[%s690 + $0x8] sm:$0xff]
        %v793 = vld [vmem:[%s690 + $0x10] sm:$0xff]
        %v794 = vld [vmem:[%s690 + $0x18] sm:$0xff]
        %v795 = vld [vmem:[%s690 + $0x20] sm:$0xff]
        %v796 = vld [vmem:[%s690 + $0x28] sm:$0xff]
        %v797 = vld [vmem:[%s690 + $0x30] sm:$0xff]
        %v798 = vld [vmem:[%s690 + $0x38] sm:$0xff]
        %v799 = vld [vmem:[%s690 + $0x40] sm:$0xff]
        %v800 = vld [vmem:[%s690 + $0x48] sm:$0xff]
        %v801 = vld [vmem:[%s690 + $0x50] sm:$0xff]
        %v802 = vld [vmem:[%s690 + $0x58] sm:$0xff]
        %v803 = vld [vmem:[%s690 + $0x60] sm:$0xff]
        %v804 = vld [vmem:[%s690 + $0x68] sm:$0xff]
        %v805 = vld [vmem:[%s690 + $0x70] sm:$0xff]
        %v806 = vld [vmem:[%s690 + $0x78] sm:$0xff]
        %v807 = vld [vmem:[%s780] sm:$0x1]
        %808 = vadd.xlane.f32.xlu0 %v783
        %v809 = vpop.xlane.xlu0 %808
        %810 = vadd.xlane.f32.xlu0 %v784
        %v811 = vpop.xlane.xlu0 %810
        %812 = vadd.xlane.f32.xlu0 %v785
        %v813 = vpop.xlane.xlu0 %812
        %814 = vadd.xlane.f32.xlu0 %v786
        %v815 = vpop.xlane.xlu0 %814
        %816 = vadd.xlane.f32.xlu0 %v787
        %v817 = vpop.xlane.xlu0 %816
        %818 = vadd.xlane.f32.xlu0 %v788
        %v819 = vpop.xlane.xlu0 %818
        %820 = vadd.xlane.f32.xlu0 %v789
        %v821 = vpop.xlane.xlu0 %820
        %822 = vadd.xlane.f32.xlu0 %v790
        %v823 = vpop.xlane.xlu0 %822
        %v824 = vrcp.pop 128.0
        %v825 = vmul.f32 %v809, %v824
        %v826 = vmul.f32 %v811, %v824
        %v827 = vmul.f32 %v813, %v824
        %v828 = vmul.f32 %v815, %v824
        %v829 = vmul.f32 %v817, %v824
        %v830 = vmul.f32 %v819, %v824
        %v831 = vmul.f32 %v821, %v824
        %v832 = vmul.f32 %v823, %v824
        %v833 = vsub.f32 %v783, %v825
        %v834 = vsub.f32 %v784, %v826
        %v835 = vsub.f32 %v785, %v827
        %v836 = vsub.f32 %v786, %v828
        %v837 = vsub.f32 %v787, %v829
        %v838 = vsub.f32 %v788, %v830
        %v839 = vsub.f32 %v789, %v831
        %v840 = vsub.f32 %v790, %v832
        %v841 = vmul.f32 %v833, %v833
        %v842 = vmul.f32 %v834, %v834
        %v843 = vmul.f32 %v835, %v835
        %v844 = vmul.f32 %v836, %v836
        %v845 = vmul.f32 %v837, %v837
        %v846 = vmul.f32 %v838, %v838
        %v847 = vmul.f32 %v839, %v839
        %v848 = vmul.f32 %v840, %v840
        %849 = vadd.xlane.f32.xlu0 %v841
        %v850 = vpop.xlane.xlu0 %849
        %851 = vadd.xlane.f32.xlu0 %v842
        %v852 = vpop.xlane.xlu0 %851
        %853 = vadd.xlane.f32.xlu0 %v843
        %v854 = vpop.xlane.xlu0 %853
        %855 = vadd.xlane.f32.xlu0 %v844
        %v856 = vpop.xlane.xlu0 %855
        %857 = vadd.xlane.f32.xlu0 %v845
        %v858 = vpop.xlane.xlu0 %857
        %859 = vadd.xlane.f32.xlu0 %v846
        %v860 = vpop.xlane.xlu0 %859
        %861 = vadd.xlane.f32.xlu0 %v847
        %v862 = vpop.xlane.xlu0 %861
        %863 = vadd.xlane.f32.xlu0 %v848
        %v864 = vpop.xlane.xlu0 %863
        %v865 = vmul.f32 %v850, 0.007874016
        %v866 = vmul.f32 %v852, 0.007874016
        %v867 = vmul.f32 %v854, 0.007874016
        %v868 = vmul.f32 %v856, 0.007874016
        %v869 = vmul.f32 %v858, 0.007874016
        %v870 = vmul.f32 %v860, 0.007874016
        %v871 = vmul.f32 %v862, 0.007874016
        %v872 = vmul.f32 %v864, 0.007874016
        %v873 = vrsqrt.pop %v865
        %v874 = vmul.f32 %v865, %v873
        %vm875 = vcmp.eq.f32.partialorder %v865, inf
        %v876 = vsel %vm875, %v865, %v874
        %vm877 = vcmp.eq.f32.partialorder %v865, 0.0
        %v878 = vand.u32 %v865, 2147483648
        %v879 = vsel %vm877, %v878, %v876
        %v880 = vrsqrt.pop %v866
        %v881 = vmul.f32 %v866, %v880
        %vm882 = vcmp.eq.f32.partialorder %v866, inf
        %v883 = vsel %vm882, %v866, %v881
        %vm884 = vcmp.eq.f32.partialorder %v866, 0.0
        %v885 = vand.u32 %v866, 2147483648
        %v886 = vsel %vm884, %v885, %v883
        %v887 = vrsqrt.pop %v867
        %v888 = vmul.f32 %v867, %v887
        %vm889 = vcmp.eq.f32.partialorder %v867, inf
        %v890 = vsel %vm889, %v867, %v888
        %vm891 = vcmp.eq.f32.partialorder %v867, 0.0
        %v892 = vand.u32 %v867, 2147483648
        %v893 = vsel %vm891, %v892, %v890
        %v894 = vrsqrt.pop %v868
        %v895 = vmul.f32 %v868, %v894
        %vm896 = vcmp.eq.f32.partialorder %v868, inf
        %v897 = vsel %vm896, %v868, %v895
        %vm898 = vcmp.eq.f32.partialorder %v868, 0.0
        %v899 = vand.u32 %v868, 2147483648
        %v900 = vsel %vm898, %v899, %v897
        %v901 = vrsqrt.pop %v869
        %v902 = vmul.f32 %v869, %v901
        %vm903 = vcmp.eq.f32.partialorder %v869, inf
        %v904 = vsel %vm903, %v869, %v902
        %vm905 = vcmp.eq.f32.partialorder %v869, 0.0
        %v906 = vand.u32 %v869, 2147483648
        %v907 = vsel %vm905, %v906, %v904
        %v908 = vrsqrt.pop %v870
        %v909 = vmul.f32 %v870, %v908
        %vm910 = vcmp.eq.f32.partialorder %v870, inf
        %v911 = vsel %vm910, %v870, %v909
        %vm912 = vcmp.eq.f32.partialorder %v870, 0.0
        %v913 = vand.u32 %v870, 2147483648
        %v914 = vsel %vm912, %v913, %v911
        %v915 = vrsqrt.pop %v871
        %v916 = vmul.f32 %v871, %v915
        %vm917 = vcmp.eq.f32.partialorder %v871, inf
        %v918 = vsel %vm917, %v871, %v916
        %vm919 = vcmp.eq.f32.partialorder %v871, 0.0
        %v920 = vand.u32 %v871, 2147483648
        %v921 = vsel %vm919, %v920, %v918
        %v922 = vrsqrt.pop %v872
        %v923 = vmul.f32 %v872, %v922
        %vm924 = vcmp.eq.f32.partialorder %v872, inf
        %v925 = vsel %vm924, %v872, %v923
        %vm926 = vcmp.eq.f32.partialorder %v872, 0.0
        %v927 = vand.u32 %v872, 2147483648
        %v928 = vsel %vm926, %v927, %v925
        %v929 = vld [vmem:[%s15] sm:$0x1]
        %v931 = vlaneseq
        %v932 = vshrl.u32 %v931, 7
        %v933 = vsub.s32 0, %v932
        %v934 = vrot.slane %v929, %v933
        %v936 = vmul.f32 %v934, %v833
        %v937 = vmul.f32 %v934, %v834
        %v938 = vmul.f32 %v934, %v835
        %v939 = vmul.f32 %v934, %v836
        %v940 = vmul.f32 %v934, %v837
        %v941 = vmul.f32 %v934, %v838
        %v942 = vmul.f32 %v934, %v839
        %v943 = vmul.f32 %v934, %v840
        %v944 = vadd.f32 %v879, 1e-06
        %v945 = vadd.f32 %v886, 1e-06
        %v946 = vadd.f32 %v893, 1e-06
        %v947 = vadd.f32 %v900, 1e-06
        %v948 = vadd.f32 %v907, 1e-06
        %v949 = vadd.f32 %v914, 1e-06
        %v950 = vadd.f32 %v921, 1e-06
        %v951 = vadd.f32 %v928, 1e-06
        %v952 = vrcp.pop %v944
        %v953 = vrcp.pop %v945
        %v954 = vrcp.pop %v946
        %v955 = vrcp.pop %v947
        %v956 = vrcp.pop %v948
        %v957 = vrcp.pop %v949
        %v958 = vrcp.pop %v950
        %v959 = vrcp.pop %v951
        %v960 = vmul.f32 %v936, %v952
        %v961 = vmul.f32 %v937, %v953
        %v962 = vmul.f32 %v938, %v954
        %v963 = vmul.f32 %v939, %v955
        %v964 = vmul.f32 %v940, %v956
        %v965 = vmul.f32 %v941, %v957
        %v966 = vmul.f32 %v942, %v958
        %v967 = vmul.f32 %v943, %v959
        %v968 = vld [vmem:[%s16] sm:$0x1]
        %v970 = vlaneseq
        %v971 = vshrl.u32 %v970, 7
        %v972 = vsub.s32 0, %v971
        %v973 = vrot.slane %v968, %v972
        %v975 = vadd.f32 %v960, %v973
        %v976 = vadd.f32 %v961, %v973
        %v977 = vadd.f32 %v962, %v973
        %v978 = vadd.f32 %v963, %v973
        %v979 = vadd.f32 %v964, %v973
        %v980 = vadd.f32 %v965, %v973
        %v981 = vadd.f32 %v966, %v973
        %v982 = vadd.f32 %v967, %v973
        %v983 = vpack.c.bf16 %v976, %v975
        %v984 = vpack.c.bf16 %v978, %v977
        %v985 = vpack.c.bf16 %v980, %v979
        %v986 = vpack.c.bf16 %v982, %v981
        %987 = vadd.xlane.f32.xlu0 %v791
        %v988 = vpop.xlane.xlu0 %987
        %989 = vadd.xlane.f32.xlu0 %v792
        %v990 = vpop.xlane.xlu0 %989
        %991 = vadd.xlane.f32.xlu0 %v793
        %v992 = vpop.xlane.xlu0 %991
        %993 = vadd.xlane.f32.xlu0 %v794
        %v994 = vpop.xlane.xlu0 %993
        %995 = vadd.xlane.f32.xlu0 %v795
        %v996 = vpop.xlane.xlu0 %995
        %997 = vadd.xlane.f32.xlu0 %v796
        %v998 = vpop.xlane.xlu0 %997
        %999 = vadd.xlane.f32.xlu0 %v797
        %v1000 = vpop.xlane.xlu0 %999
        %1001 = vadd.xlane.f32.xlu0 %v798
        %v1002 = vpop.xlane.xlu0 %1001
        %1003 = vadd.xlane.f32.xlu0 %v799
        %v1004 = vpop.xlane.xlu0 %1003
        %1005 = vadd.xlane.f32.xlu0 %v800
        %v1006 = vpop.xlane.xlu0 %1005
        %1007 = vadd.xlane.f32.xlu0 %v801
        %v1008 = vpop.xlane.xlu0 %1007
        %1009 = vadd.xlane.f32.xlu0 %v802
        %v1010 = vpop.xlane.xlu0 %1009
        %1011 = vadd.xlane.f32.xlu0 %v803
        %v1012 = vpop.xlane.xlu0 %1011
        %1013 = vadd.xlane.f32.xlu0 %v804
        %v1014 = vpop.xlane.xlu0 %1013
        %1015 = vadd.xlane.f32.xlu0 %v805
        %v1016 = vpop.xlane.xlu0 %1015
        %1017 = vadd.xlane.f32.xlu0 %v806
        %v1018 = vpop.xlane.xlu0 %1017
        %v1019 = vmul.f32 %v988, %v824
        %v1020 = vmul.f32 %v990, %v824
        %v1021 = vmul.f32 %v992, %v824
        %v1022 = vmul.f32 %v994, %v824
        %v1023 = vmul.f32 %v996, %v824
        %v1024 = vmul.f32 %v998, %v824
        %v1025 = vmul.f32 %v1000, %v824
        %v1026 = vmul.f32 %v1002, %v824
        %v1027 = vmul.f32 %v1004, %v824
        %v1028 = vmul.f32 %v1006, %v824
        %v1029 = vmul.f32 %v1008, %v824
        %v1030 = vmul.f32 %v1010, %v824
        %v1031 = vmul.f32 %v1012, %v824
        %v1032 = vmul.f32 %v1014, %v824
        %v1033 = vmul.f32 %v1016, %v824
        %v1034 = vmul.f32 %v1018, %v824
        %v1035 = vsub.f32 %v791, %v1019
        %v1036 = vsub.f32 %v792, %v1020
        %v1037 = vsub.f32 %v793, %v1021
        %v1038 = vsub.f32 %v794, %v1022
        %v1039 = vsub.f32 %v795, %v1023
        %v1040 = vsub.f32 %v796, %v1024
        %v1041 = vsub.f32 %v797, %v1025
        %v1042 = vsub.f32 %v798, %v1026
        %v1043 = vsub.f32 %v799, %v1027
        %v1044 = vsub.f32 %v800, %v1028
        %v1045 = vsub.f32 %v801, %v1029
        %v1046 = vsub.f32 %v802, %v1030
        %v1047 = vsub.f32 %v803, %v1031
        %v1048 = vsub.f32 %v804, %v1032
        %v1049 = vsub.f32 %v805, %v1033
        %v1050 = vsub.f32 %v806, %v1034
        %v1051 = vmul.f32 %v1035, %v1035
        %v1052 = vmul.f32 %v1036, %v1036
        %v1053 = vmul.f32 %v1037, %v1037
        %v1054 = vmul.f32 %v1038, %v1038
        %v1055 = vmul.f32 %v1039, %v1039
        %v1056 = vmul.f32 %v1040, %v1040
        %v1057 = vmul.f32 %v1041, %v1041
        %v1058 = vmul.f32 %v1042, %v1042
        %v1059 = vmul.f32 %v1043, %v1043
        %v1060 = vmul.f32 %v1044, %v1044
        %v1061 = vmul.f32 %v1045, %v1045
        %v1062 = vmul.f32 %v1046, %v1046
        %v1063 = vmul.f32 %v1047, %v1047
        %v1064 = vmul.f32 %v1048, %v1048
        %v1065 = vmul.f32 %v1049, %v1049
        %v1066 = vmul.f32 %v1050, %v1050
        %1067 = vadd.xlane.f32.xlu0 %v1051
        %v1068 = vpop.xlane.xlu0 %1067
        %1069 = vadd.xlane.f32.xlu0 %v1052
        %v1070 = vpop.xlane.xlu0 %1069
        %1071 = vadd.xlane.f32.xlu0 %v1053
        %v1072 = vpop.xlane.xlu0 %1071
        %1073 = vadd.xlane.f32.xlu0 %v1054
        %v1074 = vpop.xlane.xlu0 %1073
        %1075 = vadd.xlane.f32.xlu0 %v1055
        %v1076 = vpop.xlane.xlu0 %1075
        %1077 = vadd.xlane.f32.xlu0 %v1056
        %v1078 = vpop.xlane.xlu0 %1077
        %1079 = vadd.xlane.f32.xlu0 %v1057
        %v1080 = vpop.xlane.xlu0 %1079
        %1081 = vadd.xlane.f32.xlu0 %v1058
        %v1082 = vpop.xlane.xlu0 %1081
        %1083 = vadd.xlane.f32.xlu0 %v1059
        %v1084 = vpop.xlane.xlu0 %1083
        %1085 = vadd.xlane.f32.xlu0 %v1060
        %v1086 = vpop.xlane.xlu0 %1085
        %1087 = vadd.xlane.f32.xlu0 %v1061
        %v1088 = vpop.xlane.xlu0 %1087
        %1089 = vadd.xlane.f32.xlu0 %v1062
        %v1090 = vpop.xlane.xlu0 %1089
        %1091 = vadd.xlane.f32.xlu0 %v1063
        %v1092 = vpop.xlane.xlu0 %1091
        %1093 = vadd.xlane.f32.xlu0 %v1064
        %v1094 = vpop.xlane.xlu0 %1093
        %1095 = vadd.xlane.f32.xlu0 %v1065
        %v1096 = vpop.xlane.xlu0 %1095
        %1097 = vadd.xlane.f32.xlu0 %v1066
        %v1098 = vpop.xlane.xlu0 %1097
        %v1099 = vmul.f32 %v1068, 0.007874016
        %v1100 = vmul.f32 %v1070, 0.007874016
        %v1101 = vmul.f32 %v1072, 0.007874016
        %v1102 = vmul.f32 %v1074, 0.007874016
        %v1103 = vmul.f32 %v1076, 0.007874016
        %v1104 = vmul.f32 %v1078, 0.007874016
        %v1105 = vmul.f32 %v1080, 0.007874016
        %v1106 = vmul.f32 %v1082, 0.007874016
        %v1107 = vmul.f32 %v1084, 0.007874016
        %v1108 = vmul.f32 %v1086, 0.007874016
        %v1109 = vmul.f32 %v1088, 0.007874016
        %v1110 = vmul.f32 %v1090, 0.007874016
        %v1111 = vmul.f32 %v1092, 0.007874016
        %v1112 = vmul.f32 %v1094, 0.007874016
        %v1113 = vmul.f32 %v1096, 0.007874016
        %v1114 = vmul.f32 %v1098, 0.007874016
        %v1115 = vrsqrt.pop %v1099
        %v1116 = vmul.f32 %v1099, %v1115
        %vm1117 = vcmp.eq.f32.partialorder %v1099, inf
        %v1118 = vsel %vm1117, %v1099, %v1116
        %vm1119 = vcmp.eq.f32.partialorder %v1099, 0.0
        %v1120 = vand.u32 %v1099, 2147483648
        %v1121 = vsel %vm1119, %v1120, %v1118
        %v1122 = vrsqrt.pop %v1100
        %v1123 = vmul.f32 %v1100, %v1122
        %vm1124 = vcmp.eq.f32.partialorder %v1100, inf
        %v1125 = vsel %vm1124, %v1100, %v1123
        %vm1126 = vcmp.eq.f32.partialorder %v1100, 0.0
        %v1127 = vand.u32 %v1100, 2147483648
        %v1128 = vsel %vm1126, %v1127, %v1125
        %v1129 = vrsqrt.pop %v1101
        %v1130 = vmul.f32 %v1101, %v1129
        %vm1131 = vcmp.eq.f32.partialorder %v1101, inf
        %v1132 = vsel %vm1131, %v1101, %v1130
        %vm1133 = vcmp.eq.f32.partialorder %v1101, 0.0
        %v1134 = vand.u32 %v1101, 2147483648
        %v1135 = vsel %vm1133, %v1134, %v1132
        %v1136 = vrsqrt.pop %v1102
        %v1137 = vmul.f32 %v1102, %v1136
        %vm1138 = vcmp.eq.f32.partialorder %v1102, inf
        %v1139 = vsel %vm1138, %v1102, %v1137
        %vm1140 = vcmp.eq.f32.partialorder %v1102, 0.0
        %v1141 = vand.u32 %v1102, 2147483648
        %v1142 = vsel %vm1140, %v1141, %v1139
        %v1143 = vrsqrt.pop %v1103
        %v1144 = vmul.f32 %v1103, %v1143
        %vm1145 = vcmp.eq.f32.partialorder %v1103, inf
        %v1146 = vsel %vm1145, %v1103, %v1144
        %vm1147 = vcmp.eq.f32.partialorder %v1103, 0.0
        %v1148 = vand.u32 %v1103, 2147483648
        %v1149 = vsel %vm1147, %v1148, %v1146
        %v1150 = vrsqrt.pop %v1104
        %v1151 = vmul.f32 %v1104, %v1150
        %vm1152 = vcmp.eq.f32.partialorder %v1104, inf
        %v1153 = vsel %vm1152, %v1104, %v1151
        %vm1154 = vcmp.eq.f32.partialorder %v1104, 0.0
        %v1155 = vand.u32 %v1104, 2147483648
        %v1156 = vsel %vm1154, %v1155, %v1153
        %v1157 = vrsqrt.pop %v1105
        %v1158 = vmul.f32 %v1105, %v1157
        %vm1159 = vcmp.eq.f32.partialorder %v1105, inf
        %v1160 = vsel %vm1159, %v1105, %v1158
        %vm1161 = vcmp.eq.f32.partialorder %v1105, 0.0
        %v1162 = vand.u32 %v1105, 2147483648
        %v1163 = vsel %vm1161, %v1162, %v1160
        %v1164 = vrsqrt.pop %v1106
        %v1165 = vmul.f32 %v1106, %v1164
        %vm1166 = vcmp.eq.f32.partialorder %v1106, inf
        %v1167 = vsel %vm1166, %v1106, %v1165
        %vm1168 = vcmp.eq.f32.partialorder %v1106, 0.0
        %v1169 = vand.u32 %v1106, 2147483648
        %v1170 = vsel %vm1168, %v1169, %v1167
        %v1171 = vrsqrt.pop %v1107
        %v1172 = vmul.f32 %v1107, %v1171
        %vm1173 = vcmp.eq.f32.partialorder %v1107, inf
        %v1174 = vsel %vm1173, %v1107, %v1172
        %vm1175 = vcmp.eq.f32.partialorder %v1107, 0.0
        %v1176 = vand.u32 %v1107, 2147483648
        %v1177 = vsel %vm1175, %v1176, %v1174
        %v1178 = vrsqrt.pop %v1108
        %v1179 = vmul.f32 %v1108, %v1178
        %vm1180 = vcmp.eq.f32.partialorder %v1108, inf
        %v1181 = vsel %vm1180, %v1108, %v1179
        %vm1182 = vcmp.eq.f32.partialorder %v1108, 0.0
        %v1183 = vand.u32 %v1108, 2147483648
        %v1184 = vsel %vm1182, %v1183, %v1181
        %v1185 = vrsqrt.pop %v1109
        %v1186 = vmul.f32 %v1109, %v1185
        %vm1187 = vcmp.eq.f32.partialorder %v1109, inf
        %v1188 = vsel %vm1187, %v1109, %v1186
        %vm1189 = vcmp.eq.f32.partialorder %v1109, 0.0
        %v1190 = vand.u32 %v1109, 2147483648
        %v1191 = vsel %vm1189, %v1190, %v1188
        %v1192 = vrsqrt.pop %v1110
        %v1193 = vmul.f32 %v1110, %v1192
        %vm1194 = vcmp.eq.f32.partialorder %v1110, inf
        %v1195 = vsel %vm1194, %v1110, %v1193
        %vm1196 = vcmp.eq.f32.partialorder %v1110, 0.0
        %v1197 = vand.u32 %v1110, 2147483648
        %v1198 = vsel %vm1196, %v1197, %v1195
        %v1199 = vrsqrt.pop %v1111
        %v1200 = vmul.f32 %v1111, %v1199
        %vm1201 = vcmp.eq.f32.partialorder %v1111, inf
        %v1202 = vsel %vm1201, %v1111, %v1200
        %vm1203 = vcmp.eq.f32.partialorder %v1111, 0.0
        %v1204 = vand.u32 %v1111, 2147483648
        %v1205 = vsel %vm1203, %v1204, %v1202
        %v1206 = vrsqrt.pop %v1112
        %v1207 = vmul.f32 %v1112, %v1206
        %vm1208 = vcmp.eq.f32.partialorder %v1112, inf
        %v1209 = vsel %vm1208, %v1112, %v1207
        %vm1210 = vcmp.eq.f32.partialorder %v1112, 0.0
        %v1211 = vand.u32 %v1112, 2147483648
        %v1212 = vsel %vm1210, %v1211, %v1209
        %v1213 = vrsqrt.pop %v1113
        %v1214 = vmul.f32 %v1113, %v1213
        %vm1215 = vcmp.eq.f32.partialorder %v1113, inf
        %v1216 = vsel %vm1215, %v1113, %v1214
        %vm1217 = vcmp.eq.f32.partialorder %v1113, 0.0
        %v1218 = vand.u32 %v1113, 2147483648
        %v1219 = vsel %vm1217, %v1218, %v1216
        %v1220 = vrsqrt.pop %v1114
        %v1221 = vmul.f32 %v1114, %v1220
        %vm1222 = vcmp.eq.f32.partialorder %v1114, inf
        %v1223 = vsel %vm1222, %v1114, %v1221
        %vm1224 = vcmp.eq.f32.partialorder %v1114, 0.0
        %v1225 = vand.u32 %v1114, 2147483648
        %v1226 = vsel %vm1224, %v1225, %v1223
        %v1227 = vmul.f32 %v934, %v1035
        %v1228 = vmul.f32 %v934, %v1036
        %v1229 = vmul.f32 %v934, %v1037
        %v1230 = vmul.f32 %v934, %v1038
        %v1231 = vmul.f32 %v934, %v1039
        %v1232 = vmul.f32 %v934, %v1040
        %v1233 = vmul.f32 %v934, %v1041
        %v1234 = vmul.f32 %v934, %v1042
        %v1235 = vmul.f32 %v934, %v1043
        %v1236 = vmul.f32 %v934, %v1044
        %v1237 = vmul.f32 %v934, %v1045
        %v1238 = vmul.f32 %v934, %v1046
        %v1239 = vmul.f32 %v934, %v1047
        %v1240 = vmul.f32 %v934, %v1048
        %v1241 = vmul.f32 %v934, %v1049
        %v1242 = vmul.f32 %v934, %v1050
        %v1243 = vadd.f32 %v1121, 1e-06
        %v1244 = vadd.f32 %v1128, 1e-06
        %v1245 = vadd.f32 %v1135, 1e-06
        %v1246 = vadd.f32 %v1142, 1e-06
        %v1247 = vadd.f32 %v1149, 1e-06
        %v1248 = vadd.f32 %v1156, 1e-06
        %v1249 = vadd.f32 %v1163, 1e-06
        %v1250 = vadd.f32 %v1170, 1e-06
        %v1251 = vadd.f32 %v1177, 1e-06
        %v1252 = vadd.f32 %v1184, 1e-06
        %v1253 = vadd.f32 %v1191, 1e-06
        %v1254 = vadd.f32 %v1198, 1e-06
        %v1255 = vadd.f32 %v1205, 1e-06
        %v1256 = vadd.f32 %v1212, 1e-06
        %v1257 = vadd.f32 %v1219, 1e-06
        %v1258 = vadd.f32 %v1226, 1e-06
        %v1259 = vrcp.pop %v1243
        %v1260 = vrcp.pop %v1244
        %v1261 = vrcp.pop %v1245
        %v1262 = vrcp.pop %v1246
        %v1263 = vrcp.pop %v1247
        %v1264 = vrcp.pop %v1248
        %v1265 = vrcp.pop %v1249
        %v1266 = vrcp.pop %v1250
        %v1267 = vrcp.pop %v1251
        %v1268 = vrcp.pop %v1252
        %v1269 = vrcp.pop %v1253
        %v1270 = vrcp.pop %v1254
        %v1271 = vrcp.pop %v1255
        %v1272 = vrcp.pop %v1256
        %v1273 = vrcp.pop %v1257
        %v1274 = vrcp.pop %v1258
        %v1275 = vmul.f32 %v1227, %v1259
        %v1276 = vmul.f32 %v1228, %v1260
        %v1277 = vmul.f32 %v1229, %v1261
        %v1278 = vmul.f32 %v1230, %v1262
        %v1279 = vmul.f32 %v1231, %v1263
        %v1280 = vmul.f32 %v1232, %v1264
        %v1281 = vmul.f32 %v1233, %v1265
        %v1282 = vmul.f32 %v1234, %v1266
        %v1283 = vmul.f32 %v1235, %v1267
        %v1284 = vmul.f32 %v1236, %v1268
        %v1285 = vmul.f32 %v1237, %v1269
        %v1286 = vmul.f32 %v1238, %v1270
        %v1287 = vmul.f32 %v1239, %v1271
        %v1288 = vmul.f32 %v1240, %v1272
        %v1289 = vmul.f32 %v1241, %v1273
        %v1290 = vmul.f32 %v1242, %v1274
        %v1291 = vadd.f32 %v1275, %v973
        %v1292 = vadd.f32 %v1276, %v973
        %v1293 = vadd.f32 %v1277, %v973
        %v1294 = vadd.f32 %v1278, %v973
        %v1295 = vadd.f32 %v1279, %v973
        %v1296 = vadd.f32 %v1280, %v973
        %v1297 = vadd.f32 %v1281, %v973
        %v1298 = vadd.f32 %v1282, %v973
        %v1299 = vadd.f32 %v1283, %v973
        %v1300 = vadd.f32 %v1284, %v973
        %v1301 = vadd.f32 %v1285, %v973
        %v1302 = vadd.f32 %v1286, %v973
        %v1303 = vadd.f32 %v1287, %v973
        %v1304 = vadd.f32 %v1288, %v973
        %v1305 = vadd.f32 %v1289, %v973
        %v1306 = vadd.f32 %v1290, %v973
        %v1307 = vpack.c.bf16 %v1292, %v1291
        %v1308 = vpack.c.bf16 %v1294, %v1293
        %v1309 = vpack.c.bf16 %v1296, %v1295
        %v1310 = vpack.c.bf16 %v1298, %v1297
        %v1311 = vpack.c.bf16 %v1300, %v1299
        %v1312 = vpack.c.bf16 %v1302, %v1301
        %v1313 = vpack.c.bf16 %v1304, %v1303
        %v1314 = vpack.c.bf16 %v1306, %v1305
        %vm1315 = vcmp.eq.f32.partialorder %v807, 0.0
        %v1316 = vsel %vm1315, -1e+09, 0.0
        %v1317 = vld [vmem:[#allocation7] sm:$0xf]
        %v1318 = vld [vmem:[#allocation7 + $0x4] sm:$0xf]
        %v1319 = vld [vmem:[#allocation7 + $0x8] sm:$0xf]
        %v1320 = vld [vmem:[#allocation7 + $0xc] sm:$0xf]
        %v1321 = vld [vmem:[#allocation7 + $0x10] sm:$0xf]
        %v1322 = vld [vmem:[#allocation7 + $0x14] sm:$0xf]
        %v1323 = vld [vmem:[#allocation7 + $0x18] sm:$0xf]
        %v1324 = vld [vmem:[#allocation7 + $0x1c] sm:$0xf]
        %v1325 = vld [vmem:[#allocation7 + $0x20] sm:$0xf]
        %v1326 = vld [vmem:[#allocation7 + $0x24] sm:$0xf]
        %v1327 = vld [vmem:[#allocation7 + $0x28] sm:$0xf]
        %v1328 = vld [vmem:[#allocation7 + $0x2c] sm:$0xf]
        %v1329 = vld [vmem:[#allocation7 + $0x30] sm:$0xf]
        %v1330 = vld [vmem:[#allocation7 + $0x34] sm:$0xf]
        %v1331 = vld [vmem:[#allocation7 + $0x38] sm:$0xf]
        %v1332 = vld [vmem:[#allocation7 + $0x3c] sm:$0xf]
        %v1333 = vld [vmem:[%s4] sm:$0x1]
        %v1335 = vlaneseq
        %v1336 = vshrl.u32 %v1335, 7
        %v1337 = vsub.s32 0, %v1336
        %v1338 = vrot.slane %v1333, %v1337
        %v1356 = vunpack.c.l.b16 %v1317
        %v1357 = vunpack.c.l.b16 %v1318
        %v1358 = vunpack.c.l.b16 %v1319
        %v1359 = vunpack.c.l.b16 %v1320
        %v1360 = vunpack.c.l.b16 %v1321
        %v1361 = vunpack.c.l.b16 %v1322
        %v1362 = vunpack.c.l.b16 %v1323
        %v1363 = vunpack.c.l.b16 %v1324
        %v1364 = vunpack.c.l.b16 %v1325
        %v1365 = vunpack.c.l.b16 %v1326
        %v1366 = vunpack.c.l.b16 %v1327
        %v1367 = vunpack.c.l.b16 %v1328
        %v1368 = vunpack.c.l.b16 %v1329
        %v1369 = vunpack.c.l.b16 %v1330
        %v1370 = vunpack.c.l.b16 %v1331
        %v1371 = vunpack.c.l.b16 %v1332
        %v1372 = vpack.c.b16 %v1357, %v1356
        %v1373 = vpack.c.b16 %v1359, %v1358
        %v1374 = vpack.c.b16 %v1361, %v1360
        %v1375 = vpack.c.b16 %v1363, %v1362
        %v1376 = vpack.c.b16 %v1365, %v1364
        %v1377 = vpack.c.b16 %v1367, %v1366
        %v1378 = vpack.c.b16 %v1369, %v1368
        %v1379 = vpack.c.b16 %v1371, %v1370
        %1388 = vmatprep.subr.bf16.mxu0 0
        %1389 = vmatpush1.bf16.msra.mxu0 %v1372
        %1390 = vmatprep.subr.bf16.mxu0 0
        %1391 = vmatpush1.bf16.msra.mxu0 %v1373
        %1392 = vmatprep.subr.bf16.mxu0 0
        %1393 = vmatpush1.bf16.msra.mxu0 %v1374
        %1394 = vmatprep.subr.bf16.mxu0 0
        %1395 = vmatpush1.bf16.msra.mxu0 %v1375
        %1396 = vmatprep.subr.bf16.mxu0 0
        %1397 = vmatpush1.bf16.msra.mxu0 %v1376
        %1398 = vmatprep.subr.bf16.mxu0 0
        %1399 = vmatpush1.bf16.msra.mxu0 %v1377
        %1400 = vmatprep.subr.bf16.mxu0 0
        %1401 = vmatpush1.bf16.msra.mxu0 %v1378
        %1402 = vmatprep.subr.bf16.mxu0 0
        %1403 = vmatpush1.bf16.msra.mxu0 %v1379
        %1404 = vmatprep.subr.bf16.mxu0 0
        %1405 = vmatpush1.bf16.msra.mxu0 0
        %1406 = vmatprep.subr.bf16.mxu0 0
        %1407 = vmatpush1.bf16.msra.mxu0 0
        %1408 = vmatprep.subr.bf16.mxu0 0
        %1409 = vmatpush1.bf16.msra.mxu0 0
        %1410 = vmatprep.subr.bf16.mxu0 0
        %1411 = vmatpush1.bf16.msra.mxu0 0
        %1412 = vmatprep.subr.bf16.mxu0 0
        %1413 = vmatpush1.bf16.msra.mxu0 0
        %1414 = vmatprep.subr.bf16.mxu0 0
        %1415 = vmatpush1.bf16.msra.mxu0 0
        %1416 = vmatprep.subr.bf16.mxu0 0
        %1417 = vmatpush1.bf16.msra.mxu0 0
        %1418 = vmatprep.subr.bf16.mxu0 0
        %1419 = vmatpush1.bf16.msra.mxu0 0
        %1420 = vmatprep.mubr.bf16.mxu0 0
        %1421 = vmatmul.mubr.bf16.gmra.mrb[0].mxu0 %v983
        %v1422 = vpop.f32.mrb[0].mxu0
        %v1423 = vadd.f32 %v1338, %v1422
        %v1424 = vpop.f32.mrb[0].mxu0
        %v1425 = vpop.f32.mrb[0].mxu0
        %v1426 = vadd.f32 %v1338, %v1425
        %v1427 = vpop.f32.mrb[0].mxu0
        %1428 = vmatprep.mubr.bf16.mxu0 0
        %1429 = vmatmul.mubr.bf16.gmra.mrb[0].mxu0 %v984
        %v1430 = vpop.f32.mrb[0].mxu0
        %v1431 = vadd.f32 %v1338, %v1430
        %v1432 = vpop.f32.mrb[0].mxu0
        %v1433 = vpop.f32.mrb[0].mxu0
        %v1434 = vadd.f32 %v1338, %v1433
        %v1435 = vpop.f32.mrb[0].mxu0
        %1436 = vmatprep.mubr.bf16.mxu0 0
        %1437 = vmatmul.mubr.bf16.gmra.mrb[0].mxu0 %v985
        %v1438 = vpop.f32.mrb[0].mxu0
        %v1439 = vadd.f32 %v1338, %v1438
        %v1440 = vpop.f32.mrb[0].mxu0
        %v1441 = vpop.f32.mrb[0].mxu0
        %v1442 = vadd.f32 %v1338, %v1441
        %v1443 = vpop.f32.mrb[0].mxu0
        %1444 = vmatprep.mubr.bf16.mxu0 0
        %1445 = vmatmul.mubr.bf16.gmra.mrb[0].mxu0 %v986
        %v1446 = vpop.f32.mrb[0].mxu0
        %v1447 = vadd.f32 %v1338, %v1446
        %v1448 = vpop.f32.mrb[0].mxu0
        %v1449 = vpop.f32.mrb[0].mxu0
        %v1450 = vadd.f32 %v1338, %v1449
        %v1451 = vpop.f32.mrb[0].mxu0
        %1452 = vdwg.mxu0
        %v1453 = vmul.f32 %v1423, 0.17677669
        %v1454 = vmul.f32 %v1426, 0.17677669
        %v1455 = vmul.f32 %v1431, 0.17677669
        %v1456 = vmul.f32 %v1434, 0.17677669
        %v1457 = vmul.f32 %v1439, 0.17677669
        %v1458 = vmul.f32 %v1442, 0.17677669
        %v1459 = vmul.f32 %v1447, 0.17677669
        %v1460 = vmul.f32 %v1450, 0.17677669
        %v1461 = vld [vmem:[#allocation8] sm:$0xf]
        %v1462 = vld [vmem:[#allocation8 + $0x4] sm:$0xf]
        %v1463 = vld [vmem:[#allocation8 + $0x8] sm:$0xf]
        %v1464 = vld [vmem:[#allocation8 + $0xc] sm:$0xf]
        %v1465 = vld [vmem:[#allocation8 + $0x10] sm:$0xf]
        %v1466 = vld [vmem:[#allocation8 + $0x14] sm:$0xf]
        %v1467 = vld [vmem:[#allocation8 + $0x18] sm:$0xf]
        %v1468 = vld [vmem:[#allocation8 + $0x1c] sm:$0xf]
        %v1469 = vld [vmem:[#allocation8 + $0x20] sm:$0xf]
        %v1470 = vld [vmem:[#allocation8 + $0x24] sm:$0xf]
        %v1471 = vld [vmem:[#allocation8 + $0x28] sm:$0xf]
        %v1472 = vld [vmem:[#allocation8 + $0x2c] sm:$0xf]
        %v1473 = vld [vmem:[#allocation8 + $0x30] sm:$0xf]
        %v1474 = vld [vmem:[#allocation8 + $0x34] sm:$0xf]
        %v1475 = vld [vmem:[#allocation8 + $0x38] sm:$0xf]
        %v1476 = vld [vmem:[#allocation8 + $0x3c] sm:$0xf]
        %v1477 = vld [vmem:[%s6] sm:$0x1]
        %v1479 = vlaneseq
        %v1480 = vshrl.u32 %v1479, 7
        %v1481 = vsub.s32 0, %v1480
        %v1482 = vrot.slane %v1477, %v1481
        %v1500 = vunpack.c.l.b16 %v1461
        %v1501 = vunpack.c.l.b16 %v1462
        %v1502 = vunpack.c.l.b16 %v1463
        %v1503 = vunpack.c.l.b16 %v1464
        %v1504 = vunpack.c.l.b16 %v1465
        %v1505 = vunpack.c.l.b16 %v1466
        %v1506 = vunpack.c.l.b16 %v1467
        %v1507 = vunpack.c.l.b16 %v1468
        %v1508 = vunpack.c.l.b16 %v1469
        %v1509 = vunpack.c.l.b16 %v1470
        %v1510 = vunpack.c.l.b16 %v1471
        %v1511 = vunpack.c.l.b16 %v1472
        %v1512 = vunpack.c.l.b16 %v1473
        %v1513 = vunpack.c.l.b16 %v1474
        %v1514 = vunpack.c.l.b16 %v1475
        %v1515 = vunpack.c.l.b16 %v1476
        %v1516 = vpack.c.b16 %v1501, %v1500
        %v1517 = vpack.c.b16 %v1503, %v1502
        %v1518 = vpack.c.b16 %v1505, %v1504
        %v1519 = vpack.c.b16 %v1507, %v1506
        %v1520 = vpack.c.b16 %v1509, %v1508
        %v1521 = vpack.c.b16 %v1511, %v1510
        %v1522 = vpack.c.b16 %v1513, %v1512
        %v1523 = vpack.c.b16 %v1515, %v1514
        %1532 = vmatprep.subr.bf16.mxu0 0
        %1533 = vmatpush1.bf16.msra.mxu0 %v1516
        %1534 = vmatprep.subr.bf16.mxu0 0
        %1535 = vmatpush1.bf16.msra.mxu0 %v1517
        %1536 = vmatprep.subr.bf16.mxu0 0
        %1537 = vmatpush1.bf16.msra.mxu0 %v1518
        %1538 = vmatprep.subr.bf16.mxu0 0
        %1539 = vmatpush1.bf16.msra.mxu0 %v1519
        %1540 = vmatprep.subr.bf16.mxu0 0
        %1541 = vmatpush1.bf16.msra.mxu0 %v1520
        %1542 = vmatprep.subr.bf16.mxu0 0
        %1543 = vmatpush1.bf16.msra.mxu0 %v1521
        %1544 = vmatprep.subr.bf16.mxu0 0
        %1545 = vmatpush1.bf16.msra.mxu0 %v1522
        %1546 = vmatprep.subr.bf16.mxu0 0
        %1547 = vmatpush1.bf16.msra.mxu0 %v1523
        %1548 = vmatprep.subr.bf16.mxu0 0
        %1549 = vmatpush1.bf16.msra.mxu0 0
        %1550 = vmatprep.subr.bf16.mxu0 0
        %1551 = vmatpush1.bf16.msra.mxu0 0
        %1552 = vmatprep.subr.bf16.mxu0 0
        %1553 = vmatpush1.bf16.msra.mxu0 0
        %1554 = vmatprep.subr.bf16.mxu0 0
        %1555 = vmatpush1.bf16.msra.mxu0 0
        %1556 = vmatprep.subr.bf16.mxu0 0
        %1557 = vmatpush1.bf16.msra.mxu0 0
        %1558 = vmatprep.subr.bf16.mxu0 0
        %1559 = vmatpush1.bf16.msra.mxu0 0
        %1560 = vmatprep.subr.bf16.mxu0 0
        %1561 = vmatpush1.bf16.msra.mxu0 0
        %1562 = vmatprep.subr.bf16.mxu0 0
        %1563 = vmatpush1.bf16.msra.mxu0 0
        %1564 = vmatprep.mubr.bf16.mxu0 0
        %1565 = vmatmul.mubr.bf16.gmra.mrb[0].mxu0 %v1307
        %v1566 = vpop.f32.mrb[0].mxu0
        %v1567 = vadd.f32 %v1482, %v1566
        %v1568 = vpop.f32.mrb[0].mxu0
        %v1569 = vpop.f32.mrb[0].mxu0
        %v1570 = vadd.f32 %v1482, %v1569
        %v1571 = vpop.f32.mrb[0].mxu0
        %1572 = vmatprep.mubr.bf16.mxu0 0
        %1573 = vmatmul.mubr.bf16.gmra.mrb[0].mxu0 %v1308
        %v1574 = vpop.f32.mrb[0].mxu0
        %v1575 = vadd.f32 %v1482, %v1574
        %v1576 = vpop.f32.mrb[0].mxu0
        %v1577 = vpop.f32.mrb[0].mxu0
        %v1578 = vadd.f32 %v1482, %v1577
        %v1579 = vpop.f32.mrb[0].mxu0
        %1580 = vmatprep.mubr.bf16.mxu0 0
        %1581 = vmatmul.mubr.bf16.gmra.mrb[0].mxu0 %v1309
        %v1582 = vpop.f32.mrb[0].mxu0
        %v1583 = vadd.f32 %v1482, %v1582
        %v1584 = vpop.f32.mrb[0].mxu0
        %v1585 = vpop.f32.mrb[0].mxu0
        %v1586 = vadd.f32 %v1482, %v1585
        %v1587 = vpop.f32.mrb[0].mxu0
        %1588 = vmatprep.mubr.bf16.mxu0 0
        %1589 = vmatmul.mubr.bf16.gmra.mrb[0].mxu0 %v1310
        %v1590 = vpop.f32.mrb[0].mxu0
        %v1591 = vadd.f32 %v1482, %v1590
        %v1592 = vpop.f32.mrb[0].mxu0
        %v1593 = vpop.f32.mrb[0].mxu0
        %v1594 = vadd.f32 %v1482, %v1593
        %v1595 = vpop.f32.mrb[0].mxu0
        %1596 = vmatprep.mubr.bf16.mxu0 0
        %1597 = vmatmul.mubr.bf16.gmra.mrb[0].mxu0 %v1311
        %v1598 = vpop.f32.mrb[0].mxu0
        %v1599 = vadd.f32 %v1482, %v1598
        %v1600 = vpop.f32.mrb[0].mxu0
        %v1601 = vpop.f32.mrb[0].mxu0
        %v1602 = vadd.f32 %v1482, %v1601
        %v1603 = vpop.f32.mrb[0].mxu0
        %1604 = vmatprep.mubr.bf16.mxu0 0
        %1605 = vmatmul.mubr.bf16.gmra.mrb[0].mxu0 %v1312
        %v1606 = vpop.f32.mrb[0].mxu0
        %v1607 = vadd.f32 %v1482, %v1606
        %v1608 = vpop.f32.mrb[0].mxu0
        %v1609 = vpop.f32.mrb[0].mxu0
        %v1610 = vadd.f32 %v1482, %v1609
        %v1611 = vpop.f32.mrb[0].mxu0
        %1612 = vmatprep.mubr.bf16.mxu0 0
        %1613 = vmatmul.mubr.bf16.gmra.mrb[0].mxu0 %v1313
        %v1614 = vpop.f32.mrb[0].mxu0
        %v1615 = vadd.f32 %v1482, %v1614
        %v1616 = vpop.f32.mrb[0].mxu0
        %v1617 = vpop.f32.mrb[0].mxu0
        %v1618 = vadd.f32 %v1482, %v1617
        %v1619 = vpop.f32.mrb[0].mxu0
        %1620 = vmatprep.mubr.bf16.mxu0 0
        %1621 = vmatmul.mubr.bf16.gmra.mrb[0].mxu0 %v1314
        %v1622 = vpop.f32.mrb[0].mxu0
        %v1623 = vadd.f32 %v1482, %v1622
        %v1624 = vpop.f32.mrb[0].mxu0
        %v1625 = vpop.f32.mrb[0].mxu0
        %v1626 = vadd.f32 %v1482, %v1625
        %v1627 = vpop.f32.mrb[0].mxu0
        %1628 = vdwg.mxu0
        %v1629 = vld [vmem:[#allocation10] sm:$0xf]
        %v1630 = vld [vmem:[#allocation10 + $0x4] sm:$0xf]
        %v1631 = vld [vmem:[#allocation10 + $0x8] sm:$0xf]
        %v1632 = vld [vmem:[#allocation10 + $0xc] sm:$0xf]
        %v1633 = vld [vmem:[#allocation10 + $0x10] sm:$0xf]
        %v1634 = vld [vmem:[#allocation10 + $0x14] sm:$0xf]
        %v1635 = vld [vmem:[#allocation10 + $0x18] sm:$0xf]
        %v1636 = vld [vmem:[#allocation10 + $0x1c] sm:$0xf]
        %v1637 = vld [vmem:[#allocation10 + $0x20] sm:$0xf]
        %v1638 = vld [vmem:[#allocation10 + $0x24] sm:$0xf]
        %v1639 = vld [vmem:[#allocation10 + $0x28] sm:$0xf]
        %v1640 = vld [vmem:[#allocation10 + $0x2c] sm:$0xf]
        %v1641 = vld [vmem:[#allocation10 + $0x30] sm:$0xf]
        %v1642 = vld [vmem:[#allocation10 + $0x34] sm:$0xf]
        %v1643 = vld [vmem:[#allocation10 + $0x38] sm:$0xf]
        %v1644 = vld [vmem:[#allocation10 + $0x3c] sm:$0xf]
        %v1645 = vld [vmem:[%s8] sm:$0x1]
        %v1647 = vlaneseq
        %v1648 = vshrl.u32 %v1647, 7
        %v1649 = vsub.s32 0, %v1648
        %v1650 = vrot.slane %v1645, %v1649
        %v1668 = vunpack.c.l.b16 %v1629
        %v1669 = vunpack.c.l.b16 %v1630
        %v1670 = vunpack.c.l.b16 %v1631
        %v1671 = vunpack.c.l.b16 %v1632
        %v1672 = vunpack.c.l.b16 %v1633
        %v1673 = vunpack.c.l.b16 %v1634
        %v1674 = vunpack.c.l.b16 %v1635
        %v1675 = vunpack.c.l.b16 %v1636
        %v1676 = vunpack.c.l.b16 %v1637
        %v1677 = vunpack.c.l.b16 %v1638
        %v1678 = vunpack.c.l.b16 %v1639
        %v1679 = vunpack.c.l.b16 %v1640
        %v1680 = vunpack.c.l.b16 %v1641
        %v1681 = vunpack.c.l.b16 %v1642
        %v1682 = vunpack.c.l.b16 %v1643
        %v1683 = vunpack.c.l.b16 %v1644
        %v1684 = vpack.c.b16 %v1669, %v1668
        %v1685 = vpack.c.b16 %v1671, %v1670
        %v1686 = vpack.c.b16 %v1673, %v1672
        %v1687 = vpack.c.b16 %v1675, %v1674
        %v1688 = vpack.c.b16 %v1677, %v1676
        %v1689 = vpack.c.b16 %v1679, %v1678
        %v1690 = vpack.c.b16 %v1681, %v1680
        %v1691 = vpack.c.b16 %v1683, %v1682
        %1700 = vmatprep.subr.bf16.mxu0 0
        %1701 = vmatpush1.bf16.msra.mxu0 %v1684
        %1702 = vmatprep.subr.bf16.mxu0 0
        %1703 = vmatpush1.bf16.msra.mxu0 %v1685
        %1704 = vmatprep.subr.bf16.mxu0 0
        %1705 = vmatpush1.bf16.msra.mxu0 %v1686
        %1706 = vmatprep.subr.bf16.mxu0 0
        %1707 = vmatpush1.bf16.msra.mxu0 %v1687
        %1708 = vmatprep.subr.bf16.mxu0 0
        %1709 = vmatpush1.bf16.msra.mxu0 %v1688
        %1710 = vmatprep.subr.bf16.mxu0 0
        %1711 = vmatpush1.bf16.msra.mxu0 %v1689
        %1712 = vmatprep.subr.bf16.mxu0 0
        %1713 = vmatpush1.bf16.msra.mxu0 %v1690
        %1714 = vmatprep.subr.bf16.mxu0 0
        %1715 = vmatpush1.bf16.msra.mxu0 %v1691
        %1716 = vmatprep.subr.bf16.mxu0 0
        %1717 = vmatpush1.bf16.msra.mxu0 0
        %1718 = vmatprep.subr.bf16.mxu0 0
        %1719 = vmatpush1.bf16.msra.mxu0 0
        %1720 = vmatprep.subr.bf16.mxu0 0
        %1721 = vmatpush1.bf16.msra.mxu0 0
        %1722 = vmatprep.subr.bf16.mxu0 0
        %1723 = vmatpush1.bf16.msra.mxu0 0
        %1724 = vmatprep.subr.bf16.mxu0 0
        %1725 = vmatpush1.bf16.msra.mxu0 0
        %1726 = vmatprep.subr.bf16.mxu0 0
        %1727 = vmatpush1.bf16.msra.mxu0 0
        %1728 = vmatprep.subr.bf16.mxu0 0
        %1729 = vmatpush1.bf16.msra.mxu0 0
        %1730 = vmatprep.subr.bf16.mxu0 0
        %1731 = vmatpush1.bf16.msra.mxu0 0
        %1732 = vmatprep.mubr.bf16.mxu0 0
        %1733 = vmatmul.mubr.bf16.gmra.mrb[0].mxu0 %v1307
        %v1734 = vpop.f32.mrb[0].mxu0
        %v1735 = vadd.f32 %v1650, %v1734
        %v1736 = vpop.f32.mrb[0].mxu0
        %v1737 = vpop.f32.mrb[0].mxu0
        %v1738 = vadd.f32 %v1650, %v1737
        %v1739 = vpop.f32.mrb[0].mxu0
        %1740 = vmatprep.mubr.bf16.mxu0 0
        %1741 = vmatmul.mubr.bf16.gmra.mrb[0].mxu0 %v1308
        %v1742 = vpop.f32.mrb[0].mxu0
        %v1743 = vadd.f32 %v1650, %v1742
        %v1744 = vpop.f32.mrb[0].mxu0
        %v1745 = vpop.f32.mrb[0].mxu0
        %v1746 = vadd.f32 %v1650, %v1745
        %v1747 = vpop.f32.mrb[0].mxu0
        %1748 = vmatprep.mubr.bf16.mxu0 0
        %1749 = vmatmul.mubr.bf16.gmra.mrb[0].mxu0 %v1309
        %v1750 = vpop.f32.mrb[0].mxu0
        %v1751 = vadd.f32 %v1650, %v1750
        %v1752 = vpop.f32.mrb[0].mxu0
        %v1753 = vpop.f32.mrb[0].mxu0
        %v1754 = vadd.f32 %v1650, %v1753
        %v1755 = vpop.f32.mrb[0].mxu0
        %1756 = vmatprep.mubr.bf16.mxu0 0
        %1757 = vmatmul.mubr.bf16.gmra.mrb[0].mxu0 %v1310
        %v1758 = vpop.f32.mrb[0].mxu0
        %v1759 = vadd.f32 %v1650, %v1758
        %v1760 = vpop.f32.mrb[0].mxu0
        %v1761 = vpop.f32.mrb[0].mxu0
        %v1762 = vadd.f32 %v1650, %v1761
        %v1763 = vpop.f32.mrb[0].mxu0
        %1764 = vmatprep.mubr.bf16.mxu0 0
        %1765 = vmatmul.mubr.bf16.gmra.mrb[0].mxu0 %v1311
        %v1766 = vpop.f32.mrb[0].mxu0
        %v1767 = vadd.f32 %v1650, %v1766
        %v1768 = vpop.f32.mrb[0].mxu0
        %v1769 = vpop.f32.mrb[0].mxu0
        %v1770 = vadd.f32 %v1650, %v1769
        %v1771 = vpop.f32.mrb[0].mxu0
        %1772 = vmatprep.mubr.bf16.mxu0 0
        %1773 = vmatmul.mubr.bf16.gmra.mrb[0].mxu0 %v1312
        %v1774 = vpop.f32.mrb[0].mxu0
        %v1775 = vadd.f32 %v1650, %v1774
        %v1776 = vpop.f32.mrb[0].mxu0
        %v1777 = vpop.f32.mrb[0].mxu0
        %v1778 = vadd.f32 %v1650, %v1777
        %v1779 = vpop.f32.mrb[0].mxu0
        %1780 = vmatprep.mubr.bf16.mxu0 0
        %1781 = vmatmul.mubr.bf16.gmra.mrb[0].mxu0 %v1313
        %v1782 = vpop.f32.mrb[0].mxu0
        %v1783 = vadd.f32 %v1650, %v1782
        %v1784 = vpop.f32.mrb[0].mxu0
        %v1785 = vpop.f32.mrb[0].mxu0
        %v1786 = vadd.f32 %v1650, %v1785
        %v1787 = vpop.f32.mrb[0].mxu0
        %1788 = vmatprep.mubr.bf16.mxu0 0
        %1789 = vmatmul.mubr.bf16.gmra.mrb[0].mxu0 %v1314
        %v1790 = vpop.f32.mrb[0].mxu0
        %v1791 = vadd.f32 %v1650, %v1790
        %v1792 = vpop.f32.mrb[0].mxu0
        %v1793 = vpop.f32.mrb[0].mxu0
        %v1794 = vadd.f32 %v1650, %v1793
        %v1795 = vpop.f32.mrb[0].mxu0
        %1796 = vdwg.mxu0
        %v1797 = vpack.c.bf16 %v1454, %v1453
        %v1798 = vpack.c.bf16 %v1456, %v1455
        %v1799 = vpack.c.bf16 %v1458, %v1457
        %v1800 = vpack.c.bf16 %v1460, %v1459
        %v1801 = vpack.c.bf16 %v1570, %v1567
        %v1802 = vpack.c.bf16 %v1578, %v1575
        %v1803 = vpack.c.bf16 %v1586, %v1583
        %v1804 = vpack.c.bf16 %v1594, %v1591
        %v1805 = vpack.c.bf16 %v1602, %v1599
        %v1806 = vpack.c.bf16 %v1610, %v1607
        %v1807 = vpack.c.bf16 %v1618, %v1615
        %v1808 = vpack.c.bf16 %v1626, %v1623
        %v1810 = vlaneseq
        %v1811 = vshrl.u32 %v1810, 7
        %v1812 = vsub.s32 0, %v1811
        %v1813 = vrot.slane %v1316, %v1812
        %vm1815 = vcmask 261120
        %v1817 = vsel %vm1815, %v1797, 0
        %v1820 = vsel %vm1815, %v1798, 0
        %v1823 = vsel %vm1815, %v1799, 0
        %v1826 = vsel %vm1815, %v1800, 0
        %v1829 = vsel %vm1815, %v1801, 0
        %v1832 = vsel %vm1815, %v1802, 0
        %v1835 = vsel %vm1815, %v1803, 0
        %v1838 = vsel %vm1815, %v1804, 0
        %v1841 = vsel %vm1815, %v1805, 0
        %v1844 = vsel %vm1815, %v1806, 0
        %v1847 = vsel %vm1815, %v1807, 0
        %v1850 = vsel %vm1815, %v1808, 0
        %1852 = vmatprep.subr.bf16.mxu0 0
        %1853 = vmatpush1.bf16.xpose.msra.mxu0 %v1829
        %1854 = vmatprep.subr.bf16.mxu0 0
        %1855 = vmatpush1.bf16.xpose.msra.mxu0 %v1832
        %1856 = vmatprep.subr.bf16.mxu0 0
        %1857 = vmatpush1.bf16.xpose.msra.mxu0 %v1835
        %1858 = vmatprep.subr.bf16.mxu0 0
        %1859 = vmatpush1.bf16.xpose.msra.mxu0 %v1838
        %1860 = vmatprep.subr.bf16.mxu0 0
        %1861 = vmatpush1.bf16.xpose.msra.mxu0 %v1841
        %1862 = vmatprep.subr.bf16.mxu0 0
        %1863 = vmatpush1.bf16.xpose.msra.mxu0 %v1844
        %1864 = vmatprep.subr.bf16.mxu0 0
        %1865 = vmatpush1.bf16.xpose.msra.mxu0 %v1847
        %1866 = vmatprep.subr.bf16.mxu0 0
        %1867 = vmatpush1.bf16.xpose.msra.mxu0 %v1850
        %1868 = vmatprep.subr.bf16.mxu0 0
        %1869 = vmatpush1.bf16.xpose.msra.mxu0 0
        %1870 = vmatprep.subr.bf16.mxu0 0
        %1871 = vmatpush1.bf16.xpose.msra.mxu0 0
        %1872 = vmatprep.subr.bf16.mxu0 0
        %1873 = vmatpush1.bf16.xpose.msra.mxu0 0
        %1874 = vmatprep.subr.bf16.mxu0 0
        %1875 = vmatpush1.bf16.xpose.msra.mxu0 0
        %1876 = vmatprep.subr.bf16.mxu0 0
        %1877 = vmatpush1.bf16.xpose.msra.mxu0 0
        %1878 = vmatprep.subr.bf16.mxu0 0
        %1879 = vmatpush1.bf16.xpose.msra.mxu0 0
        %1880 = vmatprep.subr.bf16.mxu0 0
        %1881 = vmatpush1.bf16.xpose.msra.mxu0 0
        %1882 = vmatprep.subr.bf16.mxu0 0
        %1883 = vmatpush1.bf16.xpose.msra.mxu0 0
        %1884 = vmatprep.mubr.bf16.mxu0 0
        %1885 = vmatmul.mubr.bf16.gmra.mrb[0].mxu0 %v1817
        %v1886 = vpop.f32.mrb[0].mxu0
        %v1887 = vadd.f32 %v1813, %v1886
        %v1888 = vpop.f32.mrb[0].mxu0
        %v1889 = vpop.f32.mrb[0].mxu0
        %v1890 = vadd.f32 %v1813, %v1889
        %v1891 = vpop.f32.mrb[0].mxu0
        %1892 = vmatprep.mubr.bf16.mxu0 0
        %1893 = vmatmul.mubr.bf16.gmra.mrb[0].mxu0 %v1820
        %v1894 = vpop.f32.mrb[0].mxu0
        %v1895 = vadd.f32 %v1813, %v1894
        %v1896 = vpop.f32.mrb[0].mxu0
        %v1897 = vpop.f32.mrb[0].mxu0
        %v1898 = vadd.f32 %v1813, %v1897
        %v1899 = vpop.f32.mrb[0].mxu0
        %1900 = vmatprep.mubr.bf16.mxu0 0
        %1901 = vmatmul.mubr.bf16.gmra.mrb[0].mxu0 %v1823
        %v1902 = vpop.f32.mrb[0].mxu0
        %v1903 = vadd.f32 %v1813, %v1902
        %v1904 = vpop.f32.mrb[0].mxu0
        %v1905 = vpop.f32.mrb[0].mxu0
        %v1906 = vadd.f32 %v1813, %v1905
        %v1907 = vpop.f32.mrb[0].mxu0
        %1908 = vmatprep.mubr.bf16.mxu0 0
        %1909 = vmatmul.mubr.bf16.gmra.mrb[0].mxu0 %v1826
        %v1910 = vpop.f32.mrb[0].mxu0
        %v1911 = vadd.f32 %v1813, %v1910
        %v1912 = vpop.f32.mrb[0].mxu0
        %v1913 = vpop.f32.mrb[0].mxu0
        %v1914 = vadd.f32 %v1813, %v1913
        %v1915 = vpop.f32.mrb[0].mxu0
        %1916 = vdwg.mxu0
        %1917 = vmax.xlane.f32.xlu0 %v1887
        %v1918 = vpop.xlane.xlu0 %1917
        %1919 = vmax.xlane.f32.xlu0 %v1890
        %v1920 = vpop.xlane.xlu0 %1919
        %1921 = vmax.xlane.f32.xlu0 %v1895
        %v1922 = vpop.xlane.xlu0 %1921
        %1923 = vmax.xlane.f32.xlu0 %v1898
        %v1924 = vpop.xlane.xlu0 %1923
        %1925 = vmax.xlane.f32.xlu0 %v1903
        %v1926 = vpop.xlane.xlu0 %1925
        %1927 = vmax.xlane.f32.xlu0 %v1906
        %v1928 = vpop.xlane.xlu0 %1927
        %1929 = vmax.xlane.f32.xlu0 %v1911
        %v1930 = vpop.xlane.xlu0 %1929
        %1931 = vmax.xlane.f32.xlu0 %v1914
        %v1932 = vpop.xlane.xlu0 %1931
        %v1933 = vsub.f32 %v1887, %v1918
        %v1934 = vsub.f32 %v1890, %v1920
        %v1935 = vsub.f32 %v1895, %v1922
        %v1936 = vsub.f32 %v1898, %v1924
        %v1937 = vsub.f32 %v1903, %v1926
        %v1938 = vsub.f32 %v1906, %v1928
        %v1939 = vsub.f32 %v1911, %v1930
        %v1940 = vsub.f32 %v1914, %v1932
        %v1941 = vmul.f32 %v1933, 1.442695
        %v1942 = vpow.pop %v1941
        %v1943 = vmul.f32 %v1934, 1.442695
        %v1944 = vpow.pop %v1943
        %v1945 = vmul.f32 %v1935, 1.442695
        %v1946 = vpow.pop %v1945
        %v1947 = vmul.f32 %v1936, 1.442695
        %v1948 = vpow.pop %v1947
        %v1949 = vmul.f32 %v1937, 1.442695
        %v1950 = vpow.pop %v1949
        %v1951 = vmul.f32 %v1938, 1.442695
        %v1952 = vpow.pop %v1951
        %v1953 = vmul.f32 %v1939, 1.442695
        %v1954 = vpow.pop %v1953
        %v1955 = vmul.f32 %v1940, 1.442695
        %v1956 = vpow.pop %v1955
        %1957 = vadd.xlane.f32.xlu0 %v1942
        %v1958 = vpop.xlane.xlu0 %1957
        %1959 = vadd.xlane.f32.xlu0 %v1944
        %v1960 = vpop.xlane.xlu0 %1959
        %1961 = vadd.xlane.f32.xlu0 %v1946
        %v1962 = vpop.xlane.xlu0 %1961
        %1963 = vadd.xlane.f32.xlu0 %v1948
        %v1964 = vpop.xlane.xlu0 %1963
        %1965 = vadd.xlane.f32.xlu0 %v1950
        %v1966 = vpop.xlane.xlu0 %1965
        %1967 = vadd.xlane.f32.xlu0 %v1952
        %v1968 = vpop.xlane.xlu0 %1967
        %1969 = vadd.xlane.f32.xlu0 %v1954
        %v1970 = vpop.xlane.xlu0 %1969
        %1971 = vadd.xlane.f32.xlu0 %v1956
        %v1972 = vpop.xlane.xlu0 %1971
        %v1973 = vrcp.pop %v1958
        %v1974 = vrcp.pop %v1960
        %v1975 = vrcp.pop %v1962
        %v1976 = vrcp.pop %v1964
        %v1977 = vrcp.pop %v1966
        %v1978 = vrcp.pop %v1968
        %v1979 = vrcp.pop %v1970
        %v1980 = vrcp.pop %v1972
        %v1981 = vmul.f32 %v1942, %v1973
        %v1982 = vmul.f32 %v1944, %v1974
        %v1983 = vmul.f32 %v1946, %v1975
        %v1984 = vmul.f32 %v1948, %v1976
        %v1985 = vmul.f32 %v1950, %v1977
        %v1986 = vmul.f32 %v1952, %v1978
        %v1987 = vmul.f32 %v1954, %v1979
        %v1988 = vmul.f32 %v1956, %v1980
        %v1989 = vpack.c.bf16 %v1982, %v1981
        %v1990 = vpack.c.bf16 %v1984, %v1983
        %v1991 = vpack.c.bf16 %v1986, %v1985
        %v1992 = vpack.c.bf16 %v1988, %v1987
        %v1993 = vpack.c.bf16 %v1738, %v1735
        %v1994 = vpack.c.bf16 %v1746, %v1743
        %v1995 = vpack.c.bf16 %v1754, %v1751
        %v1996 = vpack.c.bf16 %v1762, %v1759
        %v1997 = vpack.c.bf16 %v1770, %v1767
        %v1998 = vpack.c.bf16 %v1778, %v1775
        %v1999 = vpack.c.bf16 %v1786, %v1783
        %v2000 = vpack.c.bf16 %v1794, %v1791
        %2001 = vmatprep.subr.bf16.mxu0 0
        %2002 = vmatpush1.bf16.msra.mxu0 %v1993
        %2003 = vmatprep.subr.bf16.mxu0 0
        %2004 = vmatpush1.bf16.msra.mxu0 %v1994
        %2005 = vmatprep.subr.bf16.mxu0 0
        %2006 = vmatpush1.bf16.msra.mxu0 %v1995
        %2007 = vmatprep.subr.bf16.mxu0 0
        %2008 = vmatpush1.bf16.msra.mxu0 %v1996
        %2009 = vmatprep.subr.bf16.mxu0 0
        %2010 = vmatpush1.bf16.msra.mxu0 %v1997
        %2011 = vmatprep.subr.bf16.mxu0 0
        %2012 = vmatpush1.bf16.msra.mxu0 %v1998
        %2013 = vmatprep.subr.bf16.mxu0 0
        %2014 = vmatpush1.bf16.msra.mxu0 %v1999
        %2015 = vmatprep.subr.bf16.mxu0 0
        %2016 = vmatpush1.bf16.msra.mxu0 %v2000
        %2017 = vmatprep.subr.bf16.mxu0 0
        %2018 = vmatpush1.bf16.msra.mxu0 0
        %2019 = vmatprep.subr.bf16.mxu0 0
        %2020 = vmatpush1.bf16.msra.mxu0 0
        %2021 = vmatprep.subr.bf16.mxu0 0
        %2022 = vmatpush1.bf16.msra.mxu0 0
        %2023 = vmatprep.subr.bf16.mxu0 0
        %2024 = vmatpush1.bf16.msra.mxu0 0
        %2025 = vmatprep.subr.bf16.mxu0 0
        %2026 = vmatpush1.bf16.msra.mxu0 0
        %2027 = vmatprep.subr.bf16.mxu0 0
        %2028 = vmatpush1.bf16.msra.mxu0 0
        %2029 = vmatprep.subr.bf16.mxu0 0
        %2030 = vmatpush1.bf16.msra.mxu0 0
        %2031 = vmatprep.subr.bf16.mxu0 0
        %2032 = vmatpush1.bf16.msra.mxu0 0
        %2033 = vmatprep.mubr.bf16.mxu0 0
        %2034 = vmatmul.mubr.bf16.gmra.mrb[0].mxu0 %v1989
        %v2035 = vpop.f32.mrb[0].mxu0
        %v2036 = vadd.f32 0.0, %v2035
        %v2037 = vpop.f32.mrb[0].mxu0
        %v2038 = vpop.f32.mrb[0].mxu0
        %v2039 = vadd.f32 0.0, %v2038
        %v2040 = vpop.f32.mrb[0].mxu0
        %2041 = vmatprep.mubr.bf16.mxu0 0
        %2042 = vmatmul.mubr.bf16.gmra.mrb[0].mxu0 %v1990
        %v2043 = vpop.f32.mrb[0].mxu0
        %v2044 = vadd.f32 0.0, %v2043
        %v2045 = vpop.f32.mrb[0].mxu0
        %v2046 = vpop.f32.mrb[0].mxu0
        %v2047 = vadd.f32 0.0, %v2046
        %v2048 = vpop.f32.mrb[0].mxu0
        %2049 = vmatprep.mubr.bf16.mxu0 0
        %2050 = vmatmul.mubr.bf16.gmra.mrb[0].mxu0 %v1991
        %v2051 = vpop.f32.mrb[0].mxu0
        %v2052 = vadd.f32 0.0, %v2051
        %v2053 = vpop.f32.mrb[0].mxu0
        %v2054 = vpop.f32.mrb[0].mxu0
        %v2055 = vadd.f32 0.0, %v2054
        %v2056 = vpop.f32.mrb[0].mxu0
        %2057 = vmatprep.mubr.bf16.mxu0 0
        %2058 = vmatmul.mubr.bf16.gmra.mrb[0].mxu0 %v1992
        %v2059 = vpop.f32.mrb[0].mxu0
        %v2060 = vadd.f32 0.0, %v2059
        %v2061 = vpop.f32.mrb[0].mxu0
        %v2062 = vpop.f32.mrb[0].mxu0
        %v2063 = vadd.f32 0.0, %v2062
        %v2064 = vpop.f32.mrb[0].mxu0
        %2065 = vdwg.mxu0
        %v2066 = vpack.c.bf16 %v2039, %v2036
        %v2067 = vpack.c.bf16 %v2047, %v2044
        %v2068 = vpack.c.bf16 %v2055, %v2052
        %v2069 = vpack.c.bf16 %v2063, %v2060
        %v2070 = vld [vmem:[#allocation11] sm:$0xf]
        %v2071 = vld [vmem:[#allocation11 + $0x4] sm:$0xf]
        %v2072 = vld [vmem:[#allocation11 + $0x8] sm:$0xf]
        %v2073 = vld [vmem:[#allocation11 + $0xc] sm:$0xf]
        %2074 = vrot.lane.b32.xlu0 %v1372, 96
        %v2075 = vpop.permute.xlu0 %2074
        %2076 = vrot.lane.b32.xlu0 %v1373, 96
        %v2077 = vpop.permute.xlu0 %2076
        %2078 = vrot.lane.b32.xlu0 %v1374, 96
        %v2079 = vpop.permute.xlu0 %2078
        %2080 = vrot.lane.b32.xlu0 %v1375, 96
        %v2081 = vpop.permute.xlu0 %2080
        %2082 = vrot.lane.b32.xlu0 %v1376, 96
        %v2083 = vpop.permute.xlu0 %2082
        %2084 = vrot.lane.b32.xlu0 %v1377, 96
        %v2085 = vpop.permute.xlu0 %2084
        %2086 = vrot.lane.b32.xlu0 %v1378, 96
        %v2087 = vpop.permute.xlu0 %2086
        %2088 = vrot.lane.b32.xlu0 %v1379, 96
        %v2089 = vpop.permute.xlu0 %2088
        %2098 = vrot.lane.b32.xlu0 %v1338, 96
        %v2099 = vpop.permute.xlu0 %2098
        %2101 = vmatprep.subr.bf16.mxu0 0
        %2102 = vmatpush1.bf16.msra.mxu0 %v2075
        %2103 = vmatprep.subr.bf16.mxu0 0
        %2104 = vmatpush1.bf16.msra.mxu0 %v2077
        %2105 = vmatprep.subr.bf16.mxu0 0
        %2106 = vmatpush1.bf16.msra.mxu0 %v2079
        %2107 = vmatprep.subr.bf16.mxu0 0
        %2108 = vmatpush1.bf16.msra.mxu0 %v2081
        %2109 = vmatprep.subr.bf16.mxu0 0
        %2110 = vmatpush1.bf16.msra.mxu0 %v2083
        %2111 = vmatprep.subr.bf16.mxu0 0
        %2112 = vmatpush1.bf16.msra.mxu0 %v2085
        %2113 = vmatprep.subr.bf16.mxu0 0
        %2114 = vmatpush1.bf16.msra.mxu0 %v2087
        %2115 = vmatprep.subr.bf16.mxu0 0
        %2116 = vmatpush1.bf16.msra.mxu0 %v2089
        %2117 = vmatprep.subr.bf16.mxu0 0
        %2118 = vmatpush1.bf16.msra.mxu0 0
        %2119 = vmatprep.subr.bf16.mxu0 0
        %2120 = vmatpush1.bf16.msra.mxu0 0
        %2121 = vmatprep.subr.bf16.mxu0 0
        %2122 = vmatpush1.bf16.msra.mxu0 0
        %2123 = vmatprep.subr.bf16.mxu0 0
        %2124 = vmatpush1.bf16.msra.mxu0 0
        %2125 = vmatprep.subr.bf16.mxu0 0
        %2126 = vmatpush1.bf16.msra.mxu0 0
        %2127 = vmatprep.subr.bf16.mxu0 0
        %2128 = vmatpush1.bf16.msra.mxu0 0
        %2129 = vmatprep.subr.bf16.mxu0 0
        %2130 = vmatpush1.bf16.msra.mxu0 0
        %2131 = vmatprep.subr.bf16.mxu0 0
        %2132 = vmatpush1.bf16.msra.mxu0 0
        %2133 = vmatprep.mubr.bf16.mxu0 0
        %2134 = vmatmul.mubr.bf16.gmra.mrb[0].mxu0 %v983
        %v2135 = vpop.f32.mrb[0].mxu0
        %v2136 = vadd.f32 %v2099, %v2135
        %v2137 = vpop.f32.mrb[0].mxu0
        %v2138 = vpop.f32.mrb[0].mxu0
        %v2139 = vadd.f32 %v2099, %v2138
        %v2140 = vpop.f32.mrb[0].mxu0
        %2141 = vmatprep.mubr.bf16.mxu0 0
        %2142 = vmatmul.mubr.bf16.gmra.mrb[0].mxu0 %v984
        %v2143 = vpop.f32.mrb[0].mxu0
        %v2144 = vadd.f32 %v2099, %v2143
        %v2145 = vpop.f32.mrb[0].mxu0
        %v2146 = vpop.f32.mrb[0].mxu0
        %v2147 = vadd.f32 %v2099, %v2146
        %v2148 = vpop.f32.mrb[0].mxu0
        %2149 = vmatprep.mubr.bf16.mxu0 0
        %2150 = vmatmul.mubr.bf16.gmra.mrb[0].mxu0 %v985
        %v2151 = vpop.f32.mrb[0].mxu0
        %v2152 = vadd.f32 %v2099, %v2151
        %v2153 = vpop.f32.mrb[0].mxu0
        %v2154 = vpop.f32.mrb[0].mxu0
        %v2155 = vadd.f32 %v2099, %v2154
        %v2156 = vpop.f32.mrb[0].mxu0
        %2157 = vmatprep.mubr.bf16.mxu0 0
        %2158 = vmatmul.mubr.bf16.gmra.mrb[0].mxu0 %v986
        %v2159 = vpop.f32.mrb[0].mxu0
        %v2160 = vadd.f32 %v2099, %v2159
        %v2161 = vpop.f32.mrb[0].mxu0
        %v2162 = vpop.f32.mrb[0].mxu0
        %v2163 = vadd.f32 %v2099, %v2162
        %v2164 = vpop.f32.mrb[0].mxu0
        %2165 = vdwg.mxu0
        %v2166 = vmul.f32 %v2136, 0.17677669
        %v2167 = vmul.f32 %v2139, 0.17677669
        %v2168 = vmul.f32 %v2144, 0.17677669
        %v2169 = vmul.f32 %v2147, 0.17677669
        %v2170 = vmul.f32 %v2152, 0.17677669
        %v2171 = vmul.f32 %v2155, 0.17677669
        %v2172 = vmul.f32 %v2160, 0.17677669
        %v2173 = vmul.f32 %v2163, 0.17677669
        %2174 = vrot.lane.b32.xlu0 %v1516, 96
        %v2175 = vpop.permute.xlu0 %2174
        %2176 = vrot.lane.b32.xlu0 %v1517, 96
        %v2177 = vpop.permute.xlu0 %2176
        %2178 = vrot.lane.b32.xlu0 %v1518, 96
        %v2179 = vpop.permute.xlu0 %2178
        %2180 = vrot.lane.b32.xlu0 %v1519, 96
        %v2181 = vpop.permute.xlu0 %2180
        %2182 = vrot.lane.b32.xlu0 %v1520, 96
        %v2183 = vpop.permute.xlu0 %2182
        %2184 = vrot.lane.b32.xlu0 %v1521, 96
        %v2185 = vpop.permute.xlu0 %2184
        %2186 = vrot.lane.b32.xlu0 %v1522, 96
        %v2187 = vpop.permute.xlu0 %2186
        %2188 = vrot.lane.b32.xlu0 %v1523, 96
        %v2189 = vpop.permute.xlu0 %2188
        %2198 = vrot.lane.b32.xlu0 %v1482, 96
        %v2199 = vpop.permute.xlu0 %2198
        %2201 = vmatprep.subr.bf16.mxu0 0
        %2202 = vmatpush1.bf16.msra.mxu0 %v2175
        %2203 = vmatprep.subr.bf16.mxu0 0
        %2204 = vmatpush1.bf16.msra.mxu0 %v2177
        %2205 = vmatprep.subr.bf16.mxu0 0
        %2206 = vmatpush1.bf16.msra.mxu0 %v2179
        %2207 = vmatprep.subr.bf16.mxu0 0
        %2208 = vmatpush1.bf16.msra.mxu0 %v2181
        %2209 = vmatprep.subr.bf16.mxu0 0
        %2210 = vmatpush1.bf16.msra.mxu0 %v2183
        %2211 = vmatprep.subr.bf16.mxu0 0
        %2212 = vmatpush1.bf16.msra.mxu0 %v2185
        %2213 = vmatprep.subr.bf16.mxu0 0
        %2214 = vmatpush1.bf16.msra.mxu0 %v2187
        %2215 = vmatprep.subr.bf16.mxu0 0
        %2216 = vmatpush1.bf16.msra.mxu0 %v2189
        %2217 = vmatprep.subr.bf16.mxu0 0
        %2218 = vmatpush1.bf16.msra.mxu0 0
        %2219 = vmatprep.subr.bf16.mxu0 0
        %2220 = vmatpush1.bf16.msra.mxu0 0
        %2221 = vmatprep.subr.bf16.mxu0 0
        %2222 = vmatpush1.bf16.msra.mxu0 0
        %2223 = vmatprep.subr.bf16.mxu0 0
        %2224 = vmatpush1.bf16.msra.mxu0 0
        %2225 = vmatprep.subr.bf16.mxu0 0
        %2226 = vmatpush1.bf16.msra.mxu0 0
        %2227 = vmatprep.subr.bf16.mxu0 0
        %2228 = vmatpush1.bf16.msra.mxu0 0
        %2229 = vmatprep.subr.bf16.mxu0 0
        %2230 = vmatpush1.bf16.msra.mxu0 0
        %2231 = vmatprep.subr.bf16.mxu0 0
        %2232 = vmatpush1.bf16.msra.mxu0 0
        %2233 = vmatprep.mubr.bf16.mxu0 0
        %2234 = vmatmul.mubr.bf16.gmra.mrb[0].mxu0 %v1307
        %v2235 = vpop.f32.mrb[0].mxu0
        %v2236 = vadd.f32 %v2199, %v2235
        %v2237 = vpop.f32.mrb[0].mxu0
        %v2238 = vpop.f32.mrb[0].mxu0
        %v2239 = vadd.f32 %v2199, %v2238
        %v2240 = vpop.f32.mrb[0].mxu0
        %2241 = vmatprep.mubr.bf16.mxu0 0
        %2242 = vmatmul.mubr.bf16.gmra.mrb[0].mxu0 %v1308
        %v2243 = vpop.f32.mrb[0].mxu0
        %v2244 = vadd.f32 %v2199, %v2243
        %v2245 = vpop.f32.mrb[0].mxu0
        %v2246 = vpop.f32.mrb[0].mxu0
        %v2247 = vadd.f32 %v2199, %v2246
        %v2248 = vpop.f32.mrb[0].mxu0
        %2249 = vmatprep.mubr.bf16.mxu0 0
        %2250 = vmatmul.mubr.bf16.gmra.mrb[0].mxu0 %v1309
        %v2251 = vpop.f32.mrb[0].mxu0
        %v2252 = vadd.f32 %v2199, %v2251
        %v2253 = vpop.f32.mrb[0].mxu0
        %v2254 = vpop.f32.mrb[0].mxu0
        %v2255 = vadd.f32 %v2199, %v2254
        %v2256 = vpop.f32.mrb[0].mxu0
        %2257 = vmatprep.mubr.bf16.mxu0 0
        %2258 = vmatmul.mubr.bf16.gmra.mrb[0].mxu0 %v1310
        %v2259 = vpop.f32.mrb[0].mxu0
        %v2260 = vadd.f32 %v2199, %v2259
        %v2261 = vpop.f32.mrb[0].mxu0
        %v2262 = vpop.f32.mrb[0].mxu0
        %v2263 = vadd.f32 %v2199, %v2262
        %v2264 = vpop.f32.mrb[0].mxu0
        %2265 = vmatprep.mubr.bf16.mxu0 0
        %2266 = vmatmul.mubr.bf16.gmra.mrb[0].mxu0 %v1311
        %v2267 = vpop.f32.mrb[0].mxu0
        %v2268 = vadd.f32 %v2199, %v2267
        %v2269 = vpop.f32.mrb[0].mxu0
        %v2270 = vpop.f32.mrb[0].mxu0
        %v2271 = vadd.f32 %v2199, %v2270
        %v2272 = vpop.f32.mrb[0].mxu0
        %2273 = vmatprep.mubr.bf16.mxu0 0
        %2274 = vmatmul.mubr.bf16.gmra.mrb[0].mxu0 %v1312
        %v2275 = vpop.f32.mrb[0].mxu0
        %v2276 = vadd.f32 %v2199, %v2275
        %v2277 = vpop.f32.mrb[0].mxu0
        %v2278 = vpop.f32.mrb[0].mxu0
        %v2279 = vadd.f32 %v2199, %v2278
        %v2280 = vpop.f32.mrb[0].mxu0
        %2281 = vmatprep.mubr.bf16.mxu0 0
        %2282 = vmatmul.mubr.bf16.gmra.mrb[0].mxu0 %v1313
        %v2283 = vpop.f32.mrb[0].mxu0
        %v2284 = vadd.f32 %v2199, %v2283
        %v2285 = vpop.f32.mrb[0].mxu0
        %v2286 = vpop.f32.mrb[0].mxu0
        %v2287 = vadd.f32 %v2199, %v2286
        %v2288 = vpop.f32.mrb[0].mxu0
        %2289 = vmatprep.mubr.bf16.mxu0 0
        %2290 = vmatmul.mubr.bf16.gmra.mrb[0].mxu0 %v1314
        %v2291 = vpop.f32.mrb[0].mxu0
        %v2292 = vadd.f32 %v2199, %v2291
        %v2293 = vpop.f32.mrb[0].mxu0
        %v2294 = vpop.f32.mrb[0].mxu0
        %v2295 = vadd.f32 %v2199, %v2294
        %v2296 = vpop.f32.mrb[0].mxu0
        %2297 = vdwg.mxu0
        %2298 = vrot.lane.b32.xlu0 %v1684, 96
        %v2299 = vpop.permute.xlu0 %2298
        %2300 = vrot.lane.b32.xlu0 %v1685, 96
        %v2301 = vpop.permute.xlu0 %2300
        %2302 = vrot.lane.b32.xlu0 %v1686, 96
        %v2303 = vpop.permute.xlu0 %2302
        %2304 = vrot.lane.b32.xlu0 %v1687, 96
        %v2305 = vpop.permute.xlu0 %2304
        %2306 = vrot.lane.b32.xlu0 %v1688, 96
        %v2307 = vpop.permute.xlu0 %2306
        %2308 = vrot.lane.b32.xlu0 %v1689, 96
        %v2309 = vpop.permute.xlu0 %2308
        %2310 = vrot.lane.b32.xlu0 %v1690, 96
        %v2311 = vpop.permute.xlu0 %2310
        %2312 = vrot.lane.b32.xlu0 %v1691, 96
        %v2313 = vpop.permute.xlu0 %2312
        %2322 = vrot.lane.b32.xlu0 %v1650, 96
        %v2323 = vpop.permute.xlu0 %2322
        %2325 = vmatprep.subr.bf16.mxu0 0
        %2326 = vmatpush1.bf16.msra.mxu0 %v2299
        %2327 = vmatprep.subr.bf16.mxu0 0
        %2328 = vmatpush1.bf16.msra.mxu0 %v2301
        %2329 = vmatprep.subr.bf16.mxu0 0
        %2330 = vmatpush1.bf16.msra.mxu0 %v2303
        %2331 = vmatprep.subr.bf16.mxu0 0
        %2332 = vmatpush1.bf16.msra.mxu0 %v2305
        %2333 = vmatprep.subr.bf16.mxu0 0
        %2334 = vmatpush1.bf16.msra.mxu0 %v2307
        %2335 = vmatprep.subr.bf16.mxu0 0
        %2336 = vmatpush1.bf16.msra.mxu0 %v2309
        %2337 = vmatprep.subr.bf16.mxu0 0
        %2338 = vmatpush1.bf16.msra.mxu0 %v2311
        %2339 = vmatprep.subr.bf16.mxu0 0
        %2340 = vmatpush1.bf16.msra.mxu0 %v2313
        %2341 = vmatprep.subr.bf16.mxu0 0
        %2342 = vmatpush1.bf16.msra.mxu0 0
        %2343 = vmatprep.subr.bf16.mxu0 0
        %2344 = vmatpush1.bf16.msra.mxu0 0
        %2345 = vmatprep.subr.bf16.mxu0 0
        %2346 = vmatpush1.bf16.msra.mxu0 0
        %2347 = vmatprep.subr.bf16.mxu0 0
        %2348 = vmatpush1.bf16.msra.mxu0 0
        %2349 = vmatprep.subr.bf16.mxu0 0
        %2350 = vmatpush1.bf16.msra.mxu0 0
        %2351 = vmatprep.subr.bf16.mxu0 0
        %2352 = vmatpush1.bf16.msra.mxu0 0
        %2353 = vmatprep.subr.bf16.mxu0 0
        %2354 = vmatpush1.bf16.msra.mxu0 0
        %2355 = vmatprep.subr.bf16.mxu0 0
        %2356 = vmatpush1.bf16.msra.mxu0 0
        %2357 = vmatprep.mubr.bf16.mxu0 0
        %2358 = vmatmul.mubr.bf16.gmra.mrb[0].mxu0 %v1307
        %v2359 = vpop.f32.mrb[0].mxu0
        %v2360 = vadd.f32 %v2323, %v2359
        %v2361 = vpop.f32.mrb[0].mxu0
        %v2362 = vpop.f32.mrb[0].mxu0
        %v2363 = vadd.f32 %v2323, %v2362
        %v2364 = vpop.f32.mrb[0].mxu0
        %2365 = vmatprep.mubr.bf16.mxu0 0
        %2366 = vmatmul.mubr.bf16.gmra.mrb[0].mxu0 %v1308
        %v2367 = vpop.f32.mrb[0].mxu0
        %v2368 = vadd.f32 %v2323, %v2367
        %v2369 = vpop.f32.mrb[0].mxu0
        %v2370 = vpop.f32.mrb[0].mxu0
        %v2371 = vadd.f32 %v2323, %v2370
        %v2372 = vpop.f32.mrb[0].mxu0
        %2373 = vmatprep.mubr.bf16.mxu0 0
        %2374 = vmatmul.mubr.bf16.gmra.mrb[0].mxu0 %v1309
        %v2375 = vpop.f32.mrb[0].mxu0
        %v2376 = vadd.f32 %v2323, %v2375
        %v2377 = vpop.f32.mrb[0].mxu0
        %v2378 = vpop.f32.mrb[0].mxu0
        %v2379 = vadd.f32 %v2323, %v2378
        %v2380 = vpop.f32.mrb[0].mxu0
        %2381 = vmatprep.mubr.bf16.mxu0 0
        %2382 = vmatmul.mubr.bf16.gmra.mrb[0].mxu0 %v1310
        %v2383 = vpop.f32.mrb[0].mxu0
        %v2384 = vadd.f32 %v2323, %v2383
        %v2385 = vpop.f32.mrb[0].mxu0
        %v2386 = vpop.f32.mrb[0].mxu0
        %v2387 = vadd.f32 %v2323, %v2386
        %v2388 = vpop.f32.mrb[0].mxu0
        %2389 = vmatprep.mubr.bf16.mxu0 0
        %2390 = vmatmul.mubr.bf16.gmra.mrb[0].mxu0 %v1311
        %v2391 = vpop.f32.mrb[0].mxu0
        %v2392 = vadd.f32 %v2323, %v2391
        %v2393 = vpop.f32.mrb[0].mxu0
        %v2394 = vpop.f32.mrb[0].mxu0
        %v2395 = vadd.f32 %v2323, %v2394
        %v2396 = vpop.f32.mrb[0].mxu0
        %2397 = vmatprep.mubr.bf16.mxu0 0
        %2398 = vmatmul.mubr.bf16.gmra.mrb[0].mxu0 %v1312
        %v2399 = vpop.f32.mrb[0].mxu0
        %v2400 = vadd.f32 %v2323, %v2399
        %v2401 = vpop.f32.mrb[0].mxu0
        %v2402 = vpop.f32.mrb[0].mxu0
        %v2403 = vadd.f32 %v2323, %v2402
        %v2404 = vpop.f32.mrb[0].mxu0
        %2405 = vmatprep.mubr.bf16.mxu0 0
        %2406 = vmatmul.mubr.bf16.gmra.mrb[0].mxu0 %v1313
        %v2407 = vpop.f32.mrb[0].mxu0
        %v2408 = vadd.f32 %v2323, %v2407
        %v2409 = vpop.f32.mrb[0].mxu0
        %v2410 = vpop.f32.mrb[0].mxu0
        %v2411 = vadd.f32 %v2323, %v2410
        %v2412 = vpop.f32.mrb[0].mxu0
        %2413 = vmatprep.mubr.bf16.mxu0 0
        %2414 = vmatmul.mubr.bf16.gmra.mrb[0].mxu0 %v1314
        %v2415 = vpop.f32.mrb[0].mxu0
        %v2416 = vadd.f32 %v2323, %v2415
        %v2417 = vpop.f32.mrb[0].mxu0
        %v2418 = vpop.f32.mrb[0].mxu0
        %v2419 = vadd.f32 %v2323, %v2418
        %v2420 = vpop.f32.mrb[0].mxu0
        %2421 = vdwg.mxu0
        %v2422 = vpack.c.bf16 %v2167, %v2166
        %v2423 = vpack.c.bf16 %v2169, %v2168
        %v2424 = vpack.c.bf16 %v2171, %v2170
        %v2425 = vpack.c.bf16 %v2173, %v2172
        %v2426 = vpack.c.bf16 %v2239, %v2236
        %v2427 = vpack.c.bf16 %v2247, %v2244
        %v2428 = vpack.c.bf16 %v2255, %v2252
        %v2429 = vpack.c.bf16 %v2263, %v2260
        %v2430 = vpack.c.bf16 %v2271, %v2268
        %v2431 = vpack.c.bf16 %v2279, %v2276
        %v2432 = vpack.c.bf16 %v2287, %v2284
        %v2433 = vpack.c.bf16 %v2295, %v2292
        %v2435 = vsel %vm1815, %v2422, 0
        %v2438 = vsel %vm1815, %v2423, 0
        %v2441 = vsel %vm1815, %v2424, 0
        %v2444 = vsel %vm1815, %v2425, 0
        %v2447 = vsel %vm1815, %v2426, 0
        %v2450 = vsel %vm1815, %v2427, 0
        %v2453 = vsel %vm1815, %v2428, 0
        %v2456 = vsel %vm1815, %v2429, 0
        %v2459 = vsel %vm1815, %v2430, 0
        %v2462 = vsel %vm1815, %v2431, 0
        %v2465 = vsel %vm1815, %v2432, 0
        %v2468 = vsel %vm1815, %v2433, 0
        %2470 = vmatprep.subr.bf16.mxu0 0
        %2471 = vmatpush1.bf16.xpose.msra.mxu0 %v2447
        %2472 = vmatprep.subr.bf16.mxu0 0
        %2473 = vmatpush1.bf16.xpose.msra.mxu0 %v2450
        %2474 = vmatprep.subr.bf16.mxu0 0
        %2475 = vmatpush1.bf16.xpose.msra.mxu0 %v2453
        %2476 = vmatprep.subr.bf16.mxu0 0
        %2477 = vmatpush1.bf16.xpose.msra.mxu0 %v2456
        %2478 = vmatprep.subr.bf16.mxu0 0
        %2479 = vmatpush1.bf16.xpose.msra.mxu0 %v2459
        %2480 = vmatprep.subr.bf16.mxu0 0
        %2481 = vmatpush1.bf16.xpose.msra.mxu0 %v2462
        %2482 = vmatprep.subr.bf16.mxu0 0
        %2483 = vmatpush1.bf16.xpose.msra.mxu0 %v2465
        %2484 = vmatprep.subr.bf16.mxu0 0
        %2485 = vmatpush1.bf16.xpose.msra.mxu0 %v2468
        %2486 = vmatprep.subr.bf16.mxu0 0
        %2487 = vmatpush1.bf16.xpose.msra.mxu0 0
        %2488 = vmatprep.subr.bf16.mxu0 0
        %2489 = vmatpush1.bf16.xpose.msra.mxu0 0
        %2490 = vmatprep.subr.bf16.mxu0 0
        %2491 = vmatpush1.bf16.xpose.msra.mxu0 0
        %2492 = vmatprep.subr.bf16.mxu0 0
        %2493 = vmatpush1.bf16.xpose.msra.mxu0 0
        %2494 = vmatprep.subr.bf16.mxu0 0
        %2495 = vmatpush1.bf16.xpose.msra.mxu0 0
        %2496 = vmatprep.subr.bf16.mxu0 0
        %2497 = vmatpush1.bf16.xpose.msra.mxu0 0
        %2498 = vmatprep.subr.bf16.mxu0 0
        %2499 = vmatpush1.bf16.xpose.msra.mxu0 0
        %2500 = vmatprep.subr.bf16.mxu0 0
        %2501 = vmatpush1.bf16.xpose.msra.mxu0 0
        %2502 = vmatprep.mubr.bf16.mxu0 0
        %2503 = vmatmul.mubr.bf16.gmra.mrb[0].mxu0 %v2435
        %v2504 = vpop.f32.mrb[0].mxu0
        %v2505 = vadd.f32 %v1813, %v2504
        %v2506 = vpop.f32.mrb[0].mxu0
        %v2507 = vpop.f32.mrb[0].mxu0
        %v2508 = vadd.f32 %v1813, %v2507
        %v2509 = vpop.f32.mrb[0].mxu0
        %2510 = vmatprep.mubr.bf16.mxu0 0
        %2511 = vmatmul.mubr.bf16.gmra.mrb[0].mxu0 %v2438
        %v2512 = vpop.f32.mrb[0].mxu0
        %v2513 = vadd.f32 %v1813, %v2512
        %v2514 = vpop.f32.mrb[0].mxu0
        %v2515 = vpop.f32.mrb[0].mxu0
        %v2516 = vadd.f32 %v1813, %v2515
        %v2517 = vpop.f32.mrb[0].mxu0
        %2518 = vmatprep.mubr.bf16.mxu0 0
        %2519 = vmatmul.mubr.bf16.gmra.mrb[0].mxu0 %v2441
        %v2520 = vpop.f32.mrb[0].mxu0
        %v2521 = vadd.f32 %v1813, %v2520
        %v2522 = vpop.f32.mrb[0].mxu0
        %v2523 = vpop.f32.mrb[0].mxu0
        %v2524 = vadd.f32 %v1813, %v2523
        %v2525 = vpop.f32.mrb[0].mxu0
        %2526 = vmatprep.mubr.bf16.mxu0 0
        %2527 = vmatmul.mubr.bf16.gmra.mrb[0].mxu0 %v2444
        %v2528 = vpop.f32.mrb[0].mxu0
        %v2529 = vadd.f32 %v1813, %v2528
        %v2530 = vpop.f32.mrb[0].mxu0
        %v2531 = vpop.f32.mrb[0].mxu0
        %v2532 = vadd.f32 %v1813, %v2531
        %v2533 = vpop.f32.mrb[0].mxu0
        %2534 = vdwg.mxu0
        %2535 = vmax.xlane.f32.xlu0 %v2505
        %v2536 = vpop.xlane.xlu0 %2535
        %2537 = vmax.xlane.f32.xlu0 %v2508
        %v2538 = vpop.xlane.xlu0 %2537
        %2539 = vmax.xlane.f32.xlu0 %v2513
        %v2540 = vpop.xlane.xlu0 %2539
        %2541 = vmax.xlane.f32.xlu0 %v2516
        %v2542 = vpop.xlane.xlu0 %2541
        %2543 = vmax.xlane.f32.xlu0 %v2521
        %v2544 = vpop.xlane.xlu0 %2543
        %2545 = vmax.xlane.f32.xlu0 %v2524
        %v2546 = vpop.xlane.xlu0 %2545
        %2547 = vmax.xlane.f32.xlu0 %v2529
        %v2548 = vpop.xlane.xlu0 %2547
        %2549 = vmax.xlane.f32.xlu0 %v2532
        %v2550 = vpop.xlane.xlu0 %2549
        %v2551 = vsub.f32 %v2505, %v2536
        %v2552 = vsub.f32 %v2508, %v2538
        %v2553 = vsub.f32 %v2513, %v2540
        %v2554 = vsub.f32 %v2516, %v2542
        %v2555 = vsub.f32 %v2521, %v2544
        %v2556 = vsub.f32 %v2524, %v2546
        %v2557 = vsub.f32 %v2529, %v2548
        %v2558 = vsub.f32 %v2532, %v2550
        %v2559 = vmul.f32 %v2551, 1.442695
        %v2560 = vpow.pop %v2559
        %v2561 = vmul.f32 %v2552, 1.442695
        %v2562 = vpow.pop %v2561
        %v2563 = vmul.f32 %v2553, 1.442695
        %v2564 = vpow.pop %v2563
        %v2565 = vmul.f32 %v2554, 1.442695
        %v2566 = vpow.pop %v2565
        %v2567 = vmul.f32 %v2555, 1.442695
        %v2568 = vpow.pop %v2567
        %v2569 = vmul.f32 %v2556, 1.442695
        %v2570 = vpow.pop %v2569
        %v2571 = vmul.f32 %v2557, 1.442695
        %v2572 = vpow.pop %v2571
        %v2573 = vmul.f32 %v2558, 1.442695
        %v2574 = vpow.pop %v2573
        %2575 = vadd.xlane.f32.xlu0 %v2560
        %v2576 = vpop.xlane.xlu0 %2575
        %2577 = vadd.xlane.f32.xlu0 %v2562
        %v2578 = vpop.xlane.xlu0 %2577
        %2579 = vadd.xlane.f32.xlu0 %v2564
        %v2580 = vpop.xlane.xlu0 %2579
        %2581 = vadd.xlane.f32.xlu0 %v2566
        %v2582 = vpop.xlane.xlu0 %2581
        %2583 = vadd.xlane.f32.xlu0 %v2568
        %v2584 = vpop.xlane.xlu0 %2583
        %2585 = vadd.xlane.f32.xlu0 %v2570
        %v2586 = vpop.xlane.xlu0 %2585
        %2587 = vadd.xlane.f32.xlu0 %v2572
        %v2588 = vpop.xlane.xlu0 %2587
        %2589 = vadd.xlane.f32.xlu0 %v2574
        %v2590 = vpop.xlane.xlu0 %2589
        %v2591 = vrcp.pop %v2576
        %v2592 = vrcp.pop %v2578
        %v2593 = vrcp.pop %v2580
        %v2594 = vrcp.pop %v2582
        %v2595 = vrcp.pop %v2584
        %v2596 = vrcp.pop %v2586
        %v2597 = vrcp.pop %v2588
        %v2598 = vrcp.pop %v2590
        %v2599 = vmul.f32 %v2560, %v2591
        %v2600 = vmul.f32 %v2562, %v2592
        %v2601 = vmul.f32 %v2564, %v2593
        %v2602 = vmul.f32 %v2566, %v2594
        %v2603 = vmul.f32 %v2568, %v2595
        %v2604 = vmul.f32 %v2570, %v2596
        %v2605 = vmul.f32 %v2572, %v2597
        %v2606 = vmul.f32 %v2574, %v2598
        %v2607 = vpack.c.bf16 %v2600, %v2599
        %v2608 = vpack.c.bf16 %v2602, %v2601
        %v2609 = vpack.c.bf16 %v2604, %v2603
        %v2610 = vpack.c.bf16 %v2606, %v2605
        %v2611 = vpack.c.bf16 %v2363, %v2360
        %v2612 = vpack.c.bf16 %v2371, %v2368
        %v2613 = vpack.c.bf16 %v2379, %v2376
        %v2614 = vpack.c.bf16 %v2387, %v2384
        %v2615 = vpack.c.bf16 %v2395, %v2392
        %v2616 = vpack.c.bf16 %v2403, %v2400
        %v2617 = vpack.c.bf16 %v2411, %v2408
        %v2618 = vpack.c.bf16 %v2419, %v2416
        %2619 = vmatprep.subr.bf16.mxu0 0
        %2620 = vmatpush1.bf16.msra.mxu0 %v2611
        %2621 = vmatprep.subr.bf16.mxu0 0
        %2622 = vmatpush1.bf16.msra.mxu0 %v2612
        %2623 = vmatprep.subr.bf16.mxu0 0
        %2624 = vmatpush1.bf16.msra.mxu0 %v2613
        %2625 = vmatprep.subr.bf16.mxu0 0
        %2626 = vmatpush1.bf16.msra.mxu0 %v2614
        %2627 = vmatprep.subr.bf16.mxu0 0
        %2628 = vmatpush1.bf16.msra.mxu0 %v2615
        %2629 = vmatprep.subr.bf16.mxu0 0
        %2630 = vmatpush1.bf16.msra.mxu0 %v2616
        %2631 = vmatprep.subr.bf16.mxu0 0
        %2632 = vmatpush1.bf16.msra.mxu0 %v2617
        %2633 = vmatprep.subr.bf16.mxu0 0
        %2634 = vmatpush1.bf16.msra.mxu0 %v2618
        %2635 = vmatprep.subr.bf16.mxu0 0
        %2636 = vmatpush1.bf16.msra.mxu0 0
        %2637 = vmatprep.subr.bf16.mxu0 0
        %2638 = vmatpush1.bf16.msra.mxu0 0
        %2639 = vmatprep.subr.bf16.mxu0 0
        %2640 = vmatpush1.bf16.msra.mxu0 0
        %2641 = vmatprep.subr.bf16.mxu0 0
        %2642 = vmatpush1.bf16.msra.mxu0 0
        %2643 = vmatprep.subr.bf16.mxu0 0
        %2644 = vmatpush1.bf16.msra.mxu0 0
        %2645 = vmatprep.subr.bf16.mxu0 0
        %2646 = vmatpush1.bf16.msra.mxu0 0
        %2647 = vmatprep.subr.bf16.mxu0 0
        %2648 = vmatpush1.bf16.msra.mxu0 0
        %2649 = vmatprep.subr.bf16.mxu0 0
        %2650 = vmatpush1.bf16.msra.mxu0 0
        %2651 = vmatprep.mubr.bf16.mxu0 0
        %2652 = vmatmul.mubr.bf16.gmra.mrb[0].mxu0 %v2607
        %v2653 = vpop.f32.mrb[0].mxu0
        %v2654 = vadd.f32 0.0, %v2653
        %v2655 = vpop.f32.mrb[0].mxu0
        %v2656 = vpop.f32.mrb[0].mxu0
        %v2657 = vadd.f32 0.0, %v2656
        %v2658 = vpop.f32.mrb[0].mxu0
        %2659 = vmatprep.mubr.bf16.mxu0 0
        %2660 = vmatmul.mubr.bf16.gmra.mrb[0].mxu0 %v2608
        %v2661 = vpop.f32.mrb[0].mxu0
        %v2662 = vadd.f32 0.0, %v2661
        %v2663 = vpop.f32.mrb[0].mxu0
        %v2664 = vpop.f32.mrb[0].mxu0
        %v2665 = vadd.f32 0.0, %v2664
        %v2666 = vpop.f32.mrb[0].mxu0
        %2667 = vmatprep.mubr.bf16.mxu0 0
        %2668 = vmatmul.mubr.bf16.gmra.mrb[0].mxu0 %v2609
        %v2669 = vpop.f32.mrb[0].mxu0
        %v2670 = vadd.f32 0.0, %v2669
        %v2671 = vpop.f32.mrb[0].mxu0
        %v2672 = vpop.f32.mrb[0].mxu0
        %v2673 = vadd.f32 0.0, %v2672
        %v2674 = vpop.f32.mrb[0].mxu0
        %2675 = vmatprep.mubr.bf16.mxu0 0
        %2676 = vmatmul.mubr.bf16.gmra.mrb[0].mxu0 %v2610
        %v2677 = vpop.f32.mrb[0].mxu0
        %v2678 = vadd.f32 0.0, %v2677
        %v2679 = vpop.f32.mrb[0].mxu0
        %v2680 = vpop.f32.mrb[0].mxu0
        %v2681 = vadd.f32 0.0, %v2680
        %v2682 = vpop.f32.mrb[0].mxu0
        %2683 = vdwg.mxu0
        %v2684 = vpack.c.bf16 %v2657, %v2654
        %v2685 = vpack.c.bf16 %v2665, %v2662
        %v2686 = vpack.c.bf16 %v2673, %v2670
        %v2687 = vpack.c.bf16 %v2681, %v2678
        %v2688 = vld [vmem:[#allocation11 + $0x10] sm:$0xf]
        %v2689 = vld [vmem:[#allocation11 + $0x14] sm:$0xf]
        %v2690 = vld [vmem:[#allocation11 + $0x18] sm:$0xf]
        %v2691 = vld [vmem:[#allocation11 + $0x1c] sm:$0xf]
        %v2696 = vunpack.c.l.b16 %v2688
        %v2697 = vunpack.c.l.b16 %v2689
        %v2698 = vunpack.c.l.b16 %v2690
        %v2699 = vunpack.c.l.b16 %v2691
        %v2700 = vpack.c.b16 %v2697, %v2696
        %v2701 = vpack.c.b16 %v2699, %v2698
        %v2705 = vsel %vm1815, %v2684, 0
        %v2708 = vsel %vm1815, %v2685, 0
        %v2711 = vsel %vm1815, %v2686, 0
        %v2714 = vsel %vm1815, %v2687, 0
        %2716 = vmatprep.subr.bf16.mxu0 0
        %2717 = vmatpush1.bf16.msra.mxu0 %v2700
        %2718 = vmatprep.subr.bf16.mxu0 0
        %2719 = vmatpush1.bf16.msra.mxu0 %v2701
        %2720 = vmatprep.subr.bf16.mxu0 0
        %2721 = vmatpush1.bf16.msra.mxu0 0
        %2722 = vmatprep.subr.bf16.mxu0 0
        %2723 = vmatpush1.bf16.msra.mxu0 0
        %2724 = vmatprep.subr.bf16.mxu0 0
        %2725 = vmatpush1.bf16.msra.mxu0 0
        %2726 = vmatprep.subr.bf16.mxu0 0
        %2727 = vmatpush1.bf16.msra.mxu0 0
        %2728 = vmatprep.subr.bf16.mxu0 0
        %2729 = vmatpush1.bf16.msra.mxu0 0
        %2730 = vmatprep.subr.bf16.mxu0 0
        %2731 = vmatpush1.bf16.msra.mxu0 0
        %2732 = vmatprep.subr.bf16.mxu0 0
        %2733 = vmatpush1.bf16.msra.mxu0 0
        %2734 = vmatprep.subr.bf16.mxu0 0
        %2735 = vmatpush1.bf16.msra.mxu0 0
        %2736 = vmatprep.subr.bf16.mxu0 0
        %2737 = vmatpush1.bf16.msra.mxu0 0
        %2738 = vmatprep.subr.bf16.mxu0 0
        %2739 = vmatpush1.bf16.msra.mxu0 0
        %2740 = vmatprep.subr.bf16.mxu0 0
        %2741 = vmatpush1.bf16.msra.mxu0 0
        %2742 = vmatprep.subr.bf16.mxu0 0
        %2743 = vmatpush1.bf16.msra.mxu0 0
        %2744 = vmatprep.subr.bf16.mxu0 0
        %2745 = vmatpush1.bf16.msra.mxu0 0
        %2746 = vmatprep.subr.bf16.mxu0 0
        %2747 = vmatpush1.bf16.msra.mxu0 0
        %2748 = vmatprep.mubr.bf16.mxu0 0
        %2749 = vmatmul.mubr.bf16.gmra.mrb[0].mxu0 %v2705
        %v2750 = vpop.f32.mrb[0].mxu0
        %v2751 = vadd.f32 0.0, %v2750
        %v2752 = vpop.f32.mrb[0].mxu0
        %v2753 = vpop.f32.mrb[0].mxu0
        %v2754 = vadd.f32 0.0, %v2753
        %v2755 = vpop.f32.mrb[0].mxu0
        %2756 = vmatprep.mubr.bf16.mxu0 0
        %2757 = vmatmul.mubr.bf16.gmra.mrb[0].mxu0 %v2708
        %v2758 = vpop.f32.mrb[0].mxu0
        %v2759 = vadd.f32 0.0, %v2758
        %v2760 = vpop.f32.mrb[0].mxu0
        %v2761 = vpop.f32.mrb[0].mxu0
        %v2762 = vadd.f32 0.0, %v2761
        %v2763 = vpop.f32.mrb[0].mxu0
        %2764 = vmatprep.mubr.bf16.mxu0 0
        %2765 = vmatmul.mubr.bf16.gmra.mrb[0].mxu0 %v2711
        %v2766 = vpop.f32.mrb[0].mxu0
        %v2767 = vadd.f32 0.0, %v2766
        %v2768 = vpop.f32.mrb[0].mxu0
        %v2769 = vpop.f32.mrb[0].mxu0
        %v2770 = vadd.f32 0.0, %v2769
        %v2771 = vpop.f32.mrb[0].mxu0
        %2772 = vmatprep.mubr.bf16.mxu0 0
        %2773 = vmatmul.mubr.bf16.gmra.mrb[0].mxu0 %v2714
        %v2774 = vpop.f32.mrb[0].mxu0
        %v2775 = vadd.f32 0.0, %v2774
        %v2776 = vpop.f32.mrb[0].mxu0
        %v2777 = vpop.f32.mrb[0].mxu0
        %v2778 = vadd.f32 0.0, %v2777
        %v2779 = vpop.f32.mrb[0].mxu0
        %2780 = vdwg.mxu0
        %v2785 = vunpack.c.l.b16 %v2070
        %v2786 = vunpack.c.l.b16 %v2071
        %v2787 = vunpack.c.l.b16 %v2072
        %v2788 = vunpack.c.l.b16 %v2073
        %v2789 = vpack.c.b16 %v2786, %v2785
        %v2790 = vpack.c.b16 %v2788, %v2787
        %v2794 = vsel %vm1815, %v2066, 0
        %v2797 = vsel %vm1815, %v2067, 0
        %v2800 = vsel %vm1815, %v2068, 0
        %v2803 = vsel %vm1815, %v2069, 0
        %2805 = vmatprep.subr.bf16.mxu0 0
        %2806 = vmatpush1.bf16.msra.mxu0 %v2789
        %2807 = vmatprep.subr.bf16.mxu0 0
        %2808 = vmatpush1.bf16.msra.mxu0 %v2790
        %2809 = vmatprep.subr.bf16.mxu0 0
        %2810 = vmatpush1.bf16.msra.mxu0 0
        %2811 = vmatprep.subr.bf16.mxu0 0
        %2812 = vmatpush1.bf16.msra.mxu0 0
        %2813 = vmatprep.subr.bf16.mxu0 0
        %2814 = vmatpush1.bf16.msra.mxu0 0
        %2815 = vmatprep.subr.bf16.mxu0 0
        %2816 = vmatpush1.bf16.msra.mxu0 0
        %2817 = vmatprep.subr.bf16.mxu0 0
        %2818 = vmatpush1.bf16.msra.mxu0 0
        %2819 = vmatprep.subr.bf16.mxu0 0
        %2820 = vmatpush1.bf16.msra.mxu0 0
        %2821 = vmatprep.subr.bf16.mxu0 0
        %2822 = vmatpush1.bf16.msra.mxu0 0
        %2823 = vmatprep.subr.bf16.mxu0 0
        %2824 = vmatpush1.bf16.msra.mxu0 0
        %2825 = vmatprep.subr.bf16.mxu0 0
        %2826 = vmatpush1.bf16.msra.mxu0 0
        %2827 = vmatprep.subr.bf16.mxu0 0
        %2828 = vmatpush1.bf16.msra.mxu0 0
        %2829 = vmatprep.subr.bf16.mxu0 0
        %2830 = vmatpush1.bf16.msra.mxu0 0
        %2831 = vmatprep.subr.bf16.mxu0 0
        %2832 = vmatpush1.bf16.msra.mxu0 0
        %2833 = vmatprep.subr.bf16.mxu0 0
        %2834 = vmatpush1.bf16.msra.mxu0 0
        %2835 = vmatprep.subr.bf16.mxu0 0
        %2836 = vmatpush1.bf16.msra.mxu0 0
        %2837 = vmatprep.mubr.bf16.mxu0 0
        %2838 = vmatmul.mubr.bf16.gmra.mrb[0].mxu0 %v2794
        %v2839 = vpop.f32.mrb[0].mxu0
        %v2840 = vadd.f32 %v2751, %v2839
        %v2841 = vpop.f32.mrb[0].mxu0
        %v2842 = vpop.f32.mrb[0].mxu0
        %v2843 = vadd.f32 %v2754, %v2842
        %v2844 = vpop.f32.mrb[0].mxu0
        %2845 = vmatprep.mubr.bf16.mxu0 0
        %2846 = vmatmul.mubr.bf16.gmra.mrb[0].mxu0 %v2797
        %v2847 = vpop.f32.mrb[0].mxu0
        %v2848 = vadd.f32 %v2759, %v2847
        %v2849 = vpop.f32.mrb[0].mxu0
        %v2850 = vpop.f32.mrb[0].mxu0
        %v2851 = vadd.f32 %v2762, %v2850
        %v2852 = vpop.f32.mrb[0].mxu0
        %2853 = vmatprep.mubr.bf16.mxu0 0
        %2854 = vmatmul.mubr.bf16.gmra.mrb[0].mxu0 %v2800
        %v2855 = vpop.f32.mrb[0].mxu0
        %v2856 = vadd.f32 %v2767, %v2855
        %v2857 = vpop.f32.mrb[0].mxu0
        %v2858 = vpop.f32.mrb[0].mxu0
        %v2859 = vadd.f32 %v2770, %v2858
        %v2860 = vpop.f32.mrb[0].mxu0
        %2861 = vmatprep.mubr.bf16.mxu0 0
        %2862 = vmatmul.mubr.bf16.gmra.mrb[0].mxu0 %v2803
        %v2863 = vpop.f32.mrb[0].mxu0
        %v2864 = vadd.f32 %v2775, %v2863
        %v2865 = vpop.f32.mrb[0].mxu0
        %v2866 = vpop.f32.mrb[0].mxu0
        %v2867 = vadd.f32 %v2778, %v2866
        %v2868 = vpop.f32.mrb[0].mxu0
        %2869 = vdwg.mxu0
        %2870 = vrot.lane.b32.xlu0 %v1372, 64
        %v2871 = vpop.permute.xlu0 %2870
        %2872 = vrot.lane.b32.xlu0 %v1373, 64
        %v2873 = vpop.permute.xlu0 %2872
        %2874 = vrot.lane.b32.xlu0 %v1374, 64
        %v2875 = vpop.permute.xlu0 %2874
        %2876 = vrot.lane.b32.xlu0 %v1375, 64
        %v2877 = vpop.permute.xlu0 %2876
        %2878 = vrot.lane.b32.xlu0 %v1376, 64
        %v2879 = vpop.permute.xlu0 %2878
        %2880 = vrot.lane.b32.xlu0 %v1377, 64
        %v2881 = vpop.permute.xlu0 %2880
        %2882 = vrot.lane.b32.xlu0 %v1378, 64
        %v2883 = vpop.permute.xlu0 %2882
        %2884 = vrot.lane.b32.xlu0 %v1379, 64
        %v2885 = vpop.permute.xlu0 %2884
        %2894 = vrot.lane.b32.xlu0 %v1338, 64
        %v2895 = vpop.permute.xlu0 %2894
        %2897 = vmatprep.subr.bf16.mxu0 0
        %2898 = vmatpush1.bf16.msra.mxu0 %v2871
        %2899 = vmatprep.subr.bf16.mxu0 0
        %2900 = vmatpush1.bf16.msra.mxu0 %v2873
        %2901 = vmatprep.subr.bf16.mxu0 0
        %2902 = vmatpush1.bf16.msra.mxu0 %v2875
        %2903 = vmatprep.subr.bf16.mxu0 0
        %2904 = vmatpush1.bf16.msra.mxu0 %v2877
        %2905 = vmatprep.subr.bf16.mxu0 0
        %2906 = vmatpush1.bf16.msra.mxu0 %v2879
        %2907 = vmatprep.subr.bf16.mxu0 0
        %2908 = vmatpush1.bf16.msra.mxu0 %v2881
        %2909 = vmatprep.subr.bf16.mxu0 0
        %2910 = vmatpush1.bf16.msra.mxu0 %v2883
        %2911 = vmatprep.subr.bf16.mxu0 0
        %2912 = vmatpush1.bf16.msra.mxu0 %v2885
        %2913 = vmatprep.subr.bf16.mxu0 0
        %2914 = vmatpush1.bf16.msra.mxu0 0
        %2915 = vmatprep.subr.bf16.mxu0 0
        %2916 = vmatpush1.bf16.msra.mxu0 0
        %2917 = vmatprep.subr.bf16.mxu0 0
        %2918 = vmatpush1.bf16.msra.mxu0 0
        %2919 = vmatprep.subr.bf16.mxu0 0
        %2920 = vmatpush1.bf16.msra.mxu0 0
        %2921 = vmatprep.subr.bf16.mxu0 0
        %2922 = vmatpush1.bf16.msra.mxu0 0
        %2923 = vmatprep.subr.bf16.mxu0 0
        %2924 = vmatpush1.bf16.msra.mxu0 0
        %2925 = vmatprep.subr.bf16.mxu0 0
        %2926 = vmatpush1.bf16.msra.mxu0 0
        %2927 = vmatprep.subr.bf16.mxu0 0
        %2928 = vmatpush1.bf16.msra.mxu0 0
        %2929 = vmatprep.mubr.bf16.mxu0 0
        %2930 = vmatmul.mubr.bf16.gmra.mrb[0].mxu0 %v983
        %v2931 = vpop.f32.mrb[0].mxu0
        %v2932 = vadd.f32 %v2895, %v2931
        %v2933 = vpop.f32.mrb[0].mxu0
        %v2934 = vpop.f32.mrb[0].mxu0
        %v2935 = vadd.f32 %v2895, %v2934
        %v2936 = vpop.f32.mrb[0].mxu0
        %2937 = vmatprep.mubr.bf16.mxu0 0
        %2938 = vmatmul.mubr.bf16.gmra.mrb[0].mxu0 %v984
        %v2939 = vpop.f32.mrb[0].mxu0
        %v2940 = vadd.f32 %v2895, %v2939
        %v2941 = vpop.f32.mrb[0].mxu0
        %v2942 = vpop.f32.mrb[0].mxu0
        %v2943 = vadd.f32 %v2895, %v2942
        %v2944 = vpop.f32.mrb[0].mxu0
        %2945 = vmatprep.mubr.bf16.mxu0 0
        %2946 = vmatmul.mubr.bf16.gmra.mrb[0].mxu0 %v985
        %v2947 = vpop.f32.mrb[0].mxu0
        %v2948 = vadd.f32 %v2895, %v2947
        %v2949 = vpop.f32.mrb[0].mxu0
        %v2950 = vpop.f32.mrb[0].mxu0
        %v2951 = vadd.f32 %v2895, %v2950
        %v2952 = vpop.f32.mrb[0].mxu0
        %2953 = vmatprep.mubr.bf16.mxu0 0
        %2954 = vmatmul.mubr.bf16.gmra.mrb[0].mxu0 %v986
        %v2955 = vpop.f32.mrb[0].mxu0
        %v2956 = vadd.f32 %v2895, %v2955
        %v2957 = vpop.f32.mrb[0].mxu0
        %v2958 = vpop.f32.mrb[0].mxu0
        %v2959 = vadd.f32 %v2895, %v2958
        %v2960 = vpop.f32.mrb[0].mxu0
        %2961 = vdwg.mxu0
        %v2962 = vmul.f32 %v2932, 0.17677669
        %v2963 = vmul.f32 %v2935, 0.17677669
        %v2964 = vmul.f32 %v2940, 0.17677669
        %v2965 = vmul.f32 %v2943, 0.17677669
        %v2966 = vmul.f32 %v2948, 0.17677669
        %v2967 = vmul.f32 %v2951, 0.17677669
        %v2968 = vmul.f32 %v2956, 0.17677669
        %v2969 = vmul.f32 %v2959, 0.17677669
        %2970 = vrot.lane.b32.xlu0 %v1516, 64
        %v2971 = vpop.permute.xlu0 %2970
        %2972 = vrot.lane.b32.xlu0 %v1517, 64
        %v2973 = vpop.permute.xlu0 %2972
        %2974 = vrot.lane.b32.xlu0 %v1518, 64
        %v2975 = vpop.permute.xlu0 %2974
        %2976 = vrot.lane.b32.xlu0 %v1519, 64
        %v2977 = vpop.permute.xlu0 %2976
        %2978 = vrot.lane.b32.xlu0 %v1520, 64
        %v2979 = vpop.permute.xlu0 %2978
        %2980 = vrot.lane.b32.xlu0 %v1521, 64
        %v2981 = vpop.permute.xlu0 %2980
        %2982 = vrot.lane.b32.xlu0 %v1522, 64
        %v2983 = vpop.permute.xlu0 %2982
        %2984 = vrot.lane.b32.xlu0 %v1523, 64
        %v2985 = vpop.permute.xlu0 %2984
        %2994 = vrot.lane.b32.xlu0 %v1482, 64
        %v2995 = vpop.permute.xlu0 %2994
        %2997 = vmatprep.subr.bf16.mxu0 0
        %2998 = vmatpush1.bf16.msra.mxu0 %v2971
        %2999 = vmatprep.subr.bf16.mxu0 0
        %3000 = vmatpush1.bf16.msra.mxu0 %v2973
        %3001 = vmatprep.subr.bf16.mxu0 0
        %3002 = vmatpush1.bf16.msra.mxu0 %v2975
        %3003 = vmatprep.subr.bf16.mxu0 0
        %3004 = vmatpush1.bf16.msra.mxu0 %v2977
        %3005 = vmatprep.subr.bf16.mxu0 0
        %3006 = vmatpush1.bf16.msra.mxu0 %v2979
        %3007 = vmatprep.subr.bf16.mxu0 0
        %3008 = vmatpush1.bf16.msra.mxu0 %v2981
        %3009 = vmatprep.subr.bf16.mxu0 0
        %3010 = vmatpush1.bf16.msra.mxu0 %v2983
        %3011 = vmatprep.subr.bf16.mxu0 0
        %3012 = vmatpush1.bf16.msra.mxu0 %v2985
        %3013 = vmatprep.subr.bf16.mxu0 0
        %3014 = vmatpush1.bf16.msra.mxu0 0
        %3015 = vmatprep.subr.bf16.mxu0 0
        %3016 = vmatpush1.bf16.msra.mxu0 0
        %3017 = vmatprep.subr.bf16.mxu0 0
        %3018 = vmatpush1.bf16.msra.mxu0 0
        %3019 = vmatprep.subr.bf16.mxu0 0
        %3020 = vmatpush1.bf16.msra.mxu0 0
        %3021 = vmatprep.subr.bf16.mxu0 0
        %3022 = vmatpush1.bf16.msra.mxu0 0
        %3023 = vmatprep.subr.bf16.mxu0 0
        %3024 = vmatpush1.bf16.msra.mxu0 0
        %3025 = vmatprep.subr.bf16.mxu0 0
        %3026 = vmatpush1.bf16.msra.mxu0 0
        %3027 = vmatprep.subr.bf16.mxu0 0
        %3028 = vmatpush1.bf16.msra.mxu0 0
        %3029 = vmatprep.mubr.bf16.mxu0 0
        %3030 = vmatmul.mubr.bf16.gmra.mrb[0].mxu0 %v1307
        %v3031 = vpop.f32.mrb[0].mxu0
        %v3032 = vadd.f32 %v2995, %v3031
        %v3033 = vpop.f32.mrb[0].mxu0
        %v3034 = vpop.f32.mrb[0].mxu0
        %v3035 = vadd.f32 %v2995, %v3034
        %v3036 = vpop.f32.mrb[0].mxu0
        %3037 = vmatprep.mubr.bf16.mxu0 0
        %3038 = vmatmul.mubr.bf16.gmra.mrb[0].mxu0 %v1308
        %v3039 = vpop.f32.mrb[0].mxu0
        %v3040 = vadd.f32 %v2995, %v3039
        %v3041 = vpop.f32.mrb[0].mxu0
        %v3042 = vpop.f32.mrb[0].mxu0
        %v3043 = vadd.f32 %v2995, %v3042
        %v3044 = vpop.f32.mrb[0].mxu0
        %3045 = vmatprep.mubr.bf16.mxu0 0
        %3046 = vmatmul.mubr.bf16.gmra.mrb[0].mxu0 %v1309
        %v3047 = vpop.f32.mrb[0].mxu0
        %v3048 = vadd.f32 %v2995, %v3047
        %v3049 = vpop.f32.mrb[0].mxu0
        %v3050 = vpop.f32.mrb[0].mxu0
        %v3051 = vadd.f32 %v2995, %v3050
        %v3052 = vpop.f32.mrb[0].mxu0
        %3053 = vmatprep.mubr.bf16.mxu0 0
        %3054 = vmatmul.mubr.bf16.gmra.mrb[0].mxu0 %v1310
        %v3055 = vpop.f32.mrb[0].mxu0
        %v3056 = vadd.f32 %v2995, %v3055
        %v3057 = vpop.f32.mrb[0].mxu0
        %v3058 = vpop.f32.mrb[0].mxu0
        %v3059 = vadd.f32 %v2995, %v3058
        %v3060 = vpop.f32.mrb[0].mxu0
        %3061 = vmatprep.mubr.bf16.mxu0 0
        %3062 = vmatmul.mubr.bf16.gmra.mrb[0].mxu0 %v1311
        %v3063 = vpop.f32.mrb[0].mxu0
        %v3064 = vadd.f32 %v2995, %v3063
        %v3065 = vpop.f32.mrb[0].mxu0
        %v3066 = vpop.f32.mrb[0].mxu0
        %v3067 = vadd.f32 %v2995, %v3066
        %v3068 = vpop.f32.mrb[0].mxu0
        %3069 = vmatprep.mubr.bf16.mxu0 0
        %3070 = vmatmul.mubr.bf16.gmra.mrb[0].mxu0 %v1312
        %v3071 = vpop.f32.mrb[0].mxu0
        %v3072 = vadd.f32 %v2995, %v3071
        %v3073 = vpop.f32.mrb[0].mxu0
        %v3074 = vpop.f32.mrb[0].mxu0
        %v3075 = vadd.f32 %v2995, %v3074
        %v3076 = vpop.f32.mrb[0].mxu0
        %3077 = vmatprep.mubr.bf16.mxu0 0
        %3078 = vmatmul.mubr.bf16.gmra.mrb[0].mxu0 %v1313
        %v3079 = vpop.f32.mrb[0].mxu0
        %v3080 = vadd.f32 %v2995, %v3079
        %v3081 = vpop.f32.mrb[0].mxu0
        %v3082 = vpop.f32.mrb[0].mxu0
        %v3083 = vadd.f32 %v2995, %v3082
        %v3084 = vpop.f32.mrb[0].mxu0
        %3085 = vmatprep.mubr.bf16.mxu0 0
        %3086 = vmatmul.mubr.bf16.gmra.mrb[0].mxu0 %v1314
        %v3087 = vpop.f32.mrb[0].mxu0
        %v3088 = vadd.f32 %v2995, %v3087
        %v3089 = vpop.f32.mrb[0].mxu0
        %v3090 = vpop.f32.mrb[0].mxu0
        %v3091 = vadd.f32 %v2995, %v3090
        %v3092 = vpop.f32.mrb[0].mxu0
        %3093 = vdwg.mxu0
        %3094 = vrot.lane.b32.xlu0 %v1684, 64
        %v3095 = vpop.permute.xlu0 %3094
        %3096 = vrot.lane.b32.xlu0 %v1685, 64
        %v3097 = vpop.permute.xlu0 %3096
        %3098 = vrot.lane.b32.xlu0 %v1686, 64
        %v3099 = vpop.permute.xlu0 %3098
        %3100 = vrot.lane.b32.xlu0 %v1687, 64
        %v3101 = vpop.permute.xlu0 %3100
        %3102 = vrot.lane.b32.xlu0 %v1688, 64
        %v3103 = vpop.permute.xlu0 %3102
        %3104 = vrot.lane.b32.xlu0 %v1689, 64
        %v3105 = vpop.permute.xlu0 %3104
        %3106 = vrot.lane.b32.xlu0 %v1690, 64
        %v3107 = vpop.permute.xlu0 %3106
        %3108 = vrot.lane.b32.xlu0 %v1691, 64
        %v3109 = vpop.permute.xlu0 %3108
        %3118 = vrot.lane.b32.xlu0 %v1650, 64
        %v3119 = vpop.permute.xlu0 %3118
        %3121 = vmatprep.subr.bf16.mxu0 0
        %3122 = vmatpush1.bf16.msra.mxu0 %v3095
        %3123 = vmatprep.subr.bf16.mxu0 0
        %3124 = vmatpush1.bf16.msra.mxu0 %v3097
        %3125 = vmatprep.subr.bf16.mxu0 0
        %3126 = vmatpush1.bf16.msra.mxu0 %v3099
        %3127 = vmatprep.subr.bf16.mxu0 0
        %3128 = vmatpush1.bf16.msra.mxu0 %v3101
        %3129 = vmatprep.subr.bf16.mxu0 0
        %3130 = vmatpush1.bf16.msra.mxu0 %v3103
        %3131 = vmatprep.subr.bf16.mxu0 0
        %3132 = vmatpush1.bf16.msra.mxu0 %v3105
        %3133 = vmatprep.subr.bf16.mxu0 0
        %3134 = vmatpush1.bf16.msra.mxu0 %v3107
        %3135 = vmatprep.subr.bf16.mxu0 0
        %3136 = vmatpush1.bf16.msra.mxu0 %v3109
        %3137 = vmatprep.subr.bf16.mxu0 0
        %3138 = vmatpush1.bf16.msra.mxu0 0
        %3139 = vmatprep.subr.bf16.mxu0 0
        %3140 = vmatpush1.bf16.msra.mxu0 0
        %3141 = vmatprep.subr.bf16.mxu0 0
        %3142 = vmatpush1.bf16.msra.mxu0 0
        %3143 = vmatprep.subr.bf16.mxu0 0
        %3144 = vmatpush1.bf16.msra.mxu0 0
        %3145 = vmatprep.subr.bf16.mxu0 0
        %3146 = vmatpush1.bf16.msra.mxu0 0
        %3147 = vmatprep.subr.bf16.mxu0 0
        %3148 = vmatpush1.bf16.msra.mxu0 0
        %3149 = vmatprep.subr.bf16.mxu0 0
        %3150 = vmatpush1.bf16.msra.mxu0 0
        %3151 = vmatprep.subr.bf16.mxu0 0
        %3152 = vmatpush1.bf16.msra.mxu0 0
        %3153 = vmatprep.mubr.bf16.mxu0 0
        %3154 = vmatmul.mubr.bf16.gmra.mrb[0].mxu0 %v1307
        %v3155 = vpop.f32.mrb[0].mxu0
        %v3156 = vadd.f32 %v3119, %v3155
        %v3157 = vpop.f32.mrb[0].mxu0
        %v3158 = vpop.f32.mrb[0].mxu0
        %v3159 = vadd.f32 %v3119, %v3158
        %v3160 = vpop.f32.mrb[0].mxu0
        %3161 = vmatprep.mubr.bf16.mxu0 0
        %3162 = vmatmul.mubr.bf16.gmra.mrb[0].mxu0 %v1308
        %v3163 = vpop.f32.mrb[0].mxu0
        %v3164 = vadd.f32 %v3119, %v3163
        %v3165 = vpop.f32.mrb[0].mxu0
        %v3166 = vpop.f32.mrb[0].mxu0
        %v3167 = vadd.f32 %v3119, %v3166
        %v3168 = vpop.f32.mrb[0].mxu0
        %3169 = vmatprep.mubr.bf16.mxu0 0
        %3170 = vmatmul.mubr.bf16.gmra.mrb[0].mxu0 %v1309
        %v3171 = vpop.f32.mrb[0].mxu0
        %v3172 = vadd.f32 %v3119, %v3171
        %v3173 = vpop.f32.mrb[0].mxu0
        %v3174 = vpop.f32.mrb[0].mxu0
        %v3175 = vadd.f32 %v3119, %v3174
        %v3176 = vpop.f32.mrb[0].mxu0
        %3177 = vmatprep.mubr.bf16.mxu0 0
        %3178 = vmatmul.mubr.bf16.gmra.mrb[0].mxu0 %v1310
        %v3179 = vpop.f32.mrb[0].mxu0
        %v3180 = vadd.f32 %v3119, %v3179
        %v3181 = vpop.f32.mrb[0].mxu0
        %v3182 = vpop.f32.mrb[0].mxu0
        %v3183 = vadd.f32 %v3119, %v3182
        %v3184 = vpop.f32.mrb[0].mxu0
        %3185 = vmatprep.mubr.bf16.mxu0 0
        %3186 = vmatmul.mubr.bf16.gmra.mrb[0].mxu0 %v1311
        %v3187 = vpop.f32.mrb[0].mxu0
        %v3188 = vadd.f32 %v3119, %v3187
        %v3189 = vpop.f32.mrb[0].mxu0
        %v3190 = vpop.f32.mrb[0].mxu0
        %v3191 = vadd.f32 %v3119, %v3190
        %v3192 = vpop.f32.mrb[0].mxu0
        %3193 = vmatprep.mubr.bf16.mxu0 0
        %3194 = vmatmul.mubr.bf16.gmra.mrb[0].mxu0 %v1312
        %v3195 = vpop.f32.mrb[0].mxu0
        %v3196 = vadd.f32 %v3119, %v3195
        %v3197 = vpop.f32.mrb[0].mxu0
        %v3198 = vpop.f32.mrb[0].mxu0
        %v3199 = vadd.f32 %v3119, %v3198
        %v3200 = vpop.f32.mrb[0].mxu0
        %3201 = vmatprep.mubr.bf16.mxu0 0
        %3202 = vmatmul.mubr.bf16.gmra.mrb[0].mxu0 %v1313
        %v3203 = vpop.f32.mrb[0].mxu0
        %v3204 = vadd.f32 %v3119, %v3203
        %v3205 = vpop.f32.mrb[0].mxu0
        %v3206 = vpop.f32.mrb[0].mxu0
        %v3207 = vadd.f32 %v3119, %v3206
        %v3208 = vpop.f32.mrb[0].mxu0
        %3209 = vmatprep.mubr.bf16.mxu0 0
        %3210 = vmatmul.mubr.bf16.gmra.mrb[0].mxu0 %v1314
        %v3211 = vpop.f32.mrb[0].mxu0
        %v3212 = vadd.f32 %v3119, %v3211
        %v3213 = vpop.f32.mrb[0].mxu0
        %v3214 = vpop.f32.mrb[0].mxu0
        %v3215 = vadd.f32 %v3119, %v3214
        %v3216 = vpop.f32.mrb[0].mxu0
        %3217 = vdwg.mxu0
        %v3218 = vpack.c.bf16 %v2963, %v2962
        %v3219 = vpack.c.bf16 %v2965, %v2964
        %v3220 = vpack.c.bf16 %v2967, %v2966
        %v3221 = vpack.c.bf16 %v2969, %v2968
        %v3222 = vpack.c.bf16 %v3035, %v3032
        %v3223 = vpack.c.bf16 %v3043, %v3040
        %v3224 = vpack.c.bf16 %v3051, %v3048
        %v3225 = vpack.c.bf16 %v3059, %v3056
        %v3226 = vpack.c.bf16 %v3067, %v3064
        %v3227 = vpack.c.bf16 %v3075, %v3072
        %v3228 = vpack.c.bf16 %v3083, %v3080
        %v3229 = vpack.c.bf16 %v3091, %v3088
        %v3231 = vsel %vm1815, %v3218, 0
        %v3234 = vsel %vm1815, %v3219, 0
        %v3237 = vsel %vm1815, %v3220, 0
        %v3240 = vsel %vm1815, %v3221, 0
        %v3243 = vsel %vm1815, %v3222, 0
        %v3246 = vsel %vm1815, %v3223, 0
        %v3249 = vsel %vm1815, %v3224, 0
        %v3252 = vsel %vm1815, %v3225, 0
        %v3255 = vsel %vm1815, %v3226, 0
        %v3258 = vsel %vm1815, %v3227, 0
        %v3261 = vsel %vm1815, %v3228, 0
        %v3264 = vsel %vm1815, %v3229, 0
        %3266 = vmatprep.subr.bf16.mxu0 0
        %3267 = vmatpush1.bf16.xpose.msra.mxu0 %v3243
        %3268 = vmatprep.subr.bf16.mxu0 0
        %3269 = vmatpush1.bf16.xpose.msra.mxu0 %v3246
        %3270 = vmatprep.subr.bf16.mxu0 0
        %3271 = vmatpush1.bf16.xpose.msra.mxu0 %v3249
        %3272 = vmatprep.subr.bf16.mxu0 0
        %3273 = vmatpush1.bf16.xpose.msra.mxu0 %v3252
        %3274 = vmatprep.subr.bf16.mxu0 0
        %3275 = vmatpush1.bf16.xpose.msra.mxu0 %v3255
        %3276 = vmatprep.subr.bf16.mxu0 0
        %3277 = vmatpush1.bf16.xpose.msra.mxu0 %v3258
        %3278 = vmatprep.subr.bf16.mxu0 0
        %3279 = vmatpush1.bf16.xpose.msra.mxu0 %v3261
        %3280 = vmatprep.subr.bf16.mxu0 0
        %3281 = vmatpush1.bf16.xpose.msra.mxu0 %v3264
        %3282 = vmatprep.subr.bf16.mxu0 0
        %3283 = vmatpush1.bf16.xpose.msra.mxu0 0
        %3284 = vmatprep.subr.bf16.mxu0 0
        %3285 = vmatpush1.bf16.xpose.msra.mxu0 0
        %3286 = vmatprep.subr.bf16.mxu0 0
        %3287 = vmatpush1.bf16.xpose.msra.mxu0 0
        %3288 = vmatprep.subr.bf16.mxu0 0
        %3289 = vmatpush1.bf16.xpose.msra.mxu0 0
        %3290 = vmatprep.subr.bf16.mxu0 0
        %3291 = vmatpush1.bf16.xpose.msra.mxu0 0
        %3292 = vmatprep.subr.bf16.mxu0 0
        %3293 = vmatpush1.bf16.xpose.msra.mxu0 0
        %3294 = vmatprep.subr.bf16.mxu0 0
        %3295 = vmatpush1.bf16.xpose.msra.mxu0 0
        %3296 = vmatprep.subr.bf16.mxu0 0
        %3297 = vmatpush1.bf16.xpose.msra.mxu0 0
        %3298 = vmatprep.mubr.bf16.mxu0 0
        %3299 = vmatmul.mubr.bf16.gmra.mrb[0].mxu0 %v3231
        %v3300 = vpop.f32.mrb[0].mxu0
        %v3301 = vadd.f32 %v1813, %v3300
        %v3302 = vpop.f32.mrb[0].mxu0
        %v3303 = vpop.f32.mrb[0].mxu0
        %v3304 = vadd.f32 %v1813, %v3303
        %v3305 = vpop.f32.mrb[0].mxu0
        %3306 = vmatprep.mubr.bf16.mxu0 0
        %3307 = vmatmul.mubr.bf16.gmra.mrb[0].mxu0 %v3234
        %v3308 = vpop.f32.mrb[0].mxu0
        %v3309 = vadd.f32 %v1813, %v3308
        %v3310 = vpop.f32.mrb[0].mxu0
        %v3311 = vpop.f32.mrb[0].mxu0
        %v3312 = vadd.f32 %v1813, %v3311
        %v3313 = vpop.f32.mrb[0].mxu0
        %3314 = vmatprep.mubr.bf16.mxu0 0
        %3315 = vmatmul.mubr.bf16.gmra.mrb[0].mxu0 %v3237
        %v3316 = vpop.f32.mrb[0].mxu0
        %v3317 = vadd.f32 %v1813, %v3316
        %v3318 = vpop.f32.mrb[0].mxu0
        %v3319 = vpop.f32.mrb[0].mxu0
        %v3320 = vadd.f32 %v1813, %v3319
        %v3321 = vpop.f32.mrb[0].mxu0
        %3322 = vmatprep.mubr.bf16.mxu0 0
        %3323 = vmatmul.mubr.bf16.gmra.mrb[0].mxu0 %v3240
        %v3324 = vpop.f32.mrb[0].mxu0
        %v3325 = vadd.f32 %v1813, %v3324
        %v3326 = vpop.f32.mrb[0].mxu0
        %v3327 = vpop.f32.mrb[0].mxu0
        %v3328 = vadd.f32 %v1813, %v3327
        %v3329 = vpop.f32.mrb[0].mxu0
        %3330 = vdwg.mxu0
        %3331 = vmax.xlane.f32.xlu0 %v3301
        %v3332 = vpop.xlane.xlu0 %3331
        %3333 = vmax.xlane.f32.xlu0 %v3304
        %v3334 = vpop.xlane.xlu0 %3333
        %3335 = vmax.xlane.f32.xlu0 %v3309
        %v3336 = vpop.xlane.xlu0 %3335
        %3337 = vmax.xlane.f32.xlu0 %v3312
        %v3338 = vpop.xlane.xlu0 %3337
        %3339 = vmax.xlane.f32.xlu0 %v3317
        %v3340 = vpop.xlane.xlu0 %3339
        %3341 = vmax.xlane.f32.xlu0 %v3320
        %v3342 = vpop.xlane.xlu0 %3341
        %3343 = vmax.xlane.f32.xlu0 %v3325
        %v3344 = vpop.xlane.xlu0 %3343
        %3345 = vmax.xlane.f32.xlu0 %v3328
        %v3346 = vpop.xlane.xlu0 %3345
        %v3347 = vsub.f32 %v3301, %v3332
        %v3348 = vsub.f32 %v3304, %v3334
        %v3349 = vsub.f32 %v3309, %v3336
        %v3350 = vsub.f32 %v3312, %v3338
        %v3351 = vsub.f32 %v3317, %v3340
        %v3352 = vsub.f32 %v3320, %v3342
        %v3353 = vsub.f32 %v3325, %v3344
        %v3354 = vsub.f32 %v3328, %v3346
        %v3355 = vmul.f32 %v3347, 1.442695
        %v3356 = vpow.pop %v3355
        %v3357 = vmul.f32 %v3348, 1.442695
        %v3358 = vpow.pop %v3357
        %v3359 = vmul.f32 %v3349, 1.442695
        %v3360 = vpow.pop %v3359
        %v3361 = vmul.f32 %v3350, 1.442695
        %v3362 = vpow.pop %v3361
        %v3363 = vmul.f32 %v3351, 1.442695
        %v3364 = vpow.pop %v3363
        %v3365 = vmul.f32 %v3352, 1.442695
        %v3366 = vpow.pop %v3365
        %v3367 = vmul.f32 %v3353, 1.442695
        %v3368 = vpow.pop %v3367
        %v3369 = vmul.f32 %v3354, 1.442695
        %v3370 = vpow.pop %v3369
        %3371 = vadd.xlane.f32.xlu0 %v3356
        %v3372 = vpop.xlane.xlu0 %3371
        %3373 = vadd.xlane.f32.xlu0 %v3358
        %v3374 = vpop.xlane.xlu0 %3373
        %3375 = vadd.xlane.f32.xlu0 %v3360
        %v3376 = vpop.xlane.xlu0 %3375
        %3377 = vadd.xlane.f32.xlu0 %v3362
        %v3378 = vpop.xlane.xlu0 %3377
        %3379 = vadd.xlane.f32.xlu0 %v3364
        %v3380 = vpop.xlane.xlu0 %3379
        %3381 = vadd.xlane.f32.xlu0 %v3366
        %v3382 = vpop.xlane.xlu0 %3381
        %3383 = vadd.xlane.f32.xlu0 %v3368
        %v3384 = vpop.xlane.xlu0 %3383
        %3385 = vadd.xlane.f32.xlu0 %v3370
        %v3386 = vpop.xlane.xlu0 %3385
        %v3387 = vrcp.pop %v3372
        %v3388 = vrcp.pop %v3374
        %v3389 = vrcp.pop %v3376
        %v3390 = vrcp.pop %v3378
        %v3391 = vrcp.pop %v3380
        %v3392 = vrcp.pop %v3382
        %v3393 = vrcp.pop %v3384
        %v3394 = vrcp.pop %v3386
        %v3395 = vmul.f32 %v3356, %v3387
        %v3396 = vmul.f32 %v3358, %v3388
        %v3397 = vmul.f32 %v3360, %v3389
        %v3398 = vmul.f32 %v3362, %v3390
        %v3399 = vmul.f32 %v3364, %v3391
        %v3400 = vmul.f32 %v3366, %v3392
        %v3401 = vmul.f32 %v3368, %v3393
        %v3402 = vmul.f32 %v3370, %v3394
        %v3403 = vpack.c.bf16 %v3396, %v3395
        %v3404 = vpack.c.bf16 %v3398, %v3397
        %v3405 = vpack.c.bf16 %v3400, %v3399
        %v3406 = vpack.c.bf16 %v3402, %v3401
        %v3407 = vpack.c.bf16 %v3159, %v3156
        %v3408 = vpack.c.bf16 %v3167, %v3164
        %v3409 = vpack.c.bf16 %v3175, %v3172
        %v3410 = vpack.c.bf16 %v3183, %v3180
        %v3411 = vpack.c.bf16 %v3191, %v3188
        %v3412 = vpack.c.bf16 %v3199, %v3196
        %v3413 = vpack.c.bf16 %v3207, %v3204
        %v3414 = vpack.c.bf16 %v3215, %v3212
        %3415 = vmatprep.subr.bf16.mxu0 0
        %3416 = vmatpush1.bf16.msra.mxu0 %v3407
        %3417 = vmatprep.subr.bf16.mxu0 0
        %3418 = vmatpush1.bf16.msra.mxu0 %v3408
        %3419 = vmatprep.subr.bf16.mxu0 0
        %3420 = vmatpush1.bf16.msra.mxu0 %v3409
        %3421 = vmatprep.subr.bf16.mxu0 0
        %3422 = vmatpush1.bf16.msra.mxu0 %v3410
        %3423 = vmatprep.subr.bf16.mxu0 0
        %3424 = vmatpush1.bf16.msra.mxu0 %v3411
        %3425 = vmatprep.subr.bf16.mxu0 0
        %3426 = vmatpush1.bf16.msra.mxu0 %v3412
        %3427 = vmatprep.subr.bf16.mxu0 0
        %3428 = vmatpush1.bf16.msra.mxu0 %v3413
        %3429 = vmatprep.subr.bf16.mxu0 0
        %3430 = vmatpush1.bf16.msra.mxu0 %v3414
        %3431 = vmatprep.subr.bf16.mxu0 0
        %3432 = vmatpush1.bf16.msra.mxu0 0
        %3433 = vmatprep.subr.bf16.mxu0 0
        %3434 = vmatpush1.bf16.msra.mxu0 0
        %3435 = vmatprep.subr.bf16.mxu0 0
        %3436 = vmatpush1.bf16.msra.mxu0 0
        %3437 = vmatprep.subr.bf16.mxu0 0
        %3438 = vmatpush1.bf16.msra.mxu0 0
        %3439 = vmatprep.subr.bf16.mxu0 0
        %3440 = vmatpush1.bf16.msra.mxu0 0
        %3441 = vmatprep.subr.bf16.mxu0 0
        %3442 = vmatpush1.bf16.msra.mxu0 0
        %3443 = vmatprep.subr.bf16.mxu0 0
        %3444 = vmatpush1.bf16.msra.mxu0 0
        %3445 = vmatprep.subr.bf16.mxu0 0
        %3446 = vmatpush1.bf16.msra.mxu0 0
        %3447 = vmatprep.mubr.bf16.mxu0 0
        %3448 = vmatmul.mubr.bf16.gmra.mrb[0].mxu0 %v3403
        %v3449 = vpop.f32.mrb[0].mxu0
        %v3450 = vadd.f32 0.0, %v3449
        %v3451 = vpop.f32.mrb[0].mxu0
        %v3452 = vpop.f32.mrb[0].mxu0
        %v3453 = vadd.f32 0.0, %v3452
        %v3454 = vpop.f32.mrb[0].mxu0
        %3455 = vmatprep.mubr.bf16.mxu0 0
        %3456 = vmatmul.mubr.bf16.gmra.mrb[0].mxu0 %v3404
        %v3457 = vpop.f32.mrb[0].mxu0
        %v3458 = vadd.f32 0.0, %v3457
        %v3459 = vpop.f32.mrb[0].mxu0
        %v3460 = vpop.f32.mrb[0].mxu0
        %v3461 = vadd.f32 0.0, %v3460
        %v3462 = vpop.f32.mrb[0].mxu0
        %3463 = vmatprep.mubr.bf16.mxu0 0
        %3464 = vmatmul.mubr.bf16.gmra.mrb[0].mxu0 %v3405
        %v3465 = vpop.f32.mrb[0].mxu0
        %v3466 = vadd.f32 0.0, %v3465
        %v3467 = vpop.f32.mrb[0].mxu0
        %v3468 = vpop.f32.mrb[0].mxu0
        %v3469 = vadd.f32 0.0, %v3468
        %v3470 = vpop.f32.mrb[0].mxu0
        %3471 = vmatprep.mubr.bf16.mxu0 0
        %3472 = vmatmul.mubr.bf16.gmra.mrb[0].mxu0 %v3406
        %v3473 = vpop.f32.mrb[0].mxu0
        %v3474 = vadd.f32 0.0, %v3473
        %v3475 = vpop.f32.mrb[0].mxu0
        %v3476 = vpop.f32.mrb[0].mxu0
        %v3477 = vadd.f32 0.0, %v3476
        %v3478 = vpop.f32.mrb[0].mxu0
        %3479 = vdwg.mxu0
        %v3480 = vpack.c.bf16 %v3453, %v3450
        %v3481 = vpack.c.bf16 %v3461, %v3458
        %v3482 = vpack.c.bf16 %v3469, %v3466
        %v3483 = vpack.c.bf16 %v3477, %v3474
        %v3484 = vld [vmem:[#allocation11 + $0x20] sm:$0xf]
        %v3485 = vld [vmem:[#allocation11 + $0x24] sm:$0xf]
        %v3486 = vld [vmem:[#allocation11 + $0x28] sm:$0xf]
        %v3487 = vld [vmem:[#allocation11 + $0x2c] sm:$0xf]
        %v3492 = vunpack.c.l.b16 %v3484
        %v3493 = vunpack.c.l.b16 %v3485
        %v3494 = vunpack.c.l.b16 %v3486
        %v3495 = vunpack.c.l.b16 %v3487
        %v3496 = vpack.c.b16 %v3493, %v3492
        %v3497 = vpack.c.b16 %v3495, %v3494
        %v3501 = vsel %vm1815, %v3480, 0
        %v3504 = vsel %vm1815, %v3481, 0
        %v3507 = vsel %vm1815, %v3482, 0
        %v3510 = vsel %vm1815, %v3483, 0
        %3512 = vmatprep.subr.bf16.mxu0 0
        %3513 = vmatpush1.bf16.msra.mxu0 %v3496
        %3514 = vmatprep.subr.bf16.mxu0 0
        %3515 = vmatpush1.bf16.msra.mxu0 %v3497
        %3516 = vmatprep.subr.bf16.mxu0 0
        %3517 = vmatpush1.bf16.msra.mxu0 0
        %3518 = vmatprep.subr.bf16.mxu0 0
        %3519 = vmatpush1.bf16.msra.mxu0 0
        %3520 = vmatprep.subr.bf16.mxu0 0
        %3521 = vmatpush1.bf16.msra.mxu0 0
        %3522 = vmatprep.subr.bf16.mxu0 0
        %3523 = vmatpush1.bf16.msra.mxu0 0
        %3524 = vmatprep.subr.bf16.mxu0 0
        %3525 = vmatpush1.bf16.msra.mxu0 0
        %3526 = vmatprep.subr.bf16.mxu0 0
        %3527 = vmatpush1.bf16.msra.mxu0 0
        %3528 = vmatprep.subr.bf16.mxu0 0
        %3529 = vmatpush1.bf16.msra.mxu0 0
        %3530 = vmatprep.subr.bf16.mxu0 0
        %3531 = vmatpush1.bf16.msra.mxu0 0
        %3532 = vmatprep.subr.bf16.mxu0 0
        %3533 = vmatpush1.bf16.msra.mxu0 0
        %3534 = vmatprep.subr.bf16.mxu0 0
        %3535 = vmatpush1.bf16.msra.mxu0 0
        %3536 = vmatprep.subr.bf16.mxu0 0
        %3537 = vmatpush1.bf16.msra.mxu0 0
        %3538 = vmatprep.subr.bf16.mxu0 0
        %3539 = vmatpush1.bf16.msra.mxu0 0
        %3540 = vmatprep.subr.bf16.mxu0 0
        %3541 = vmatpush1.bf16.msra.mxu0 0
        %3542 = vmatprep.subr.bf16.mxu0 0
        %3543 = vmatpush1.bf16.msra.mxu0 0
        %3544 = vmatprep.mubr.bf16.mxu0 0
        %3545 = vmatmul.mubr.bf16.gmra.mrb[0].mxu0 %v3501
        %v3546 = vpop.f32.mrb[0].mxu0
        %v3547 = vadd.f32 0.0, %v3546
        %v3548 = vpop.f32.mrb[0].mxu0
        %v3549 = vpop.f32.mrb[0].mxu0
        %v3550 = vadd.f32 0.0, %v3549
        %v3551 = vpop.f32.mrb[0].mxu0
        %3552 = vmatprep.mubr.bf16.mxu0 0
        %3553 = vmatmul.mubr.bf16.gmra.mrb[0].mxu0 %v3504
        %v3554 = vpop.f32.mrb[0].mxu0
        %v3555 = vadd.f32 0.0, %v3554
        %v3556 = vpop.f32.mrb[0].mxu0
        %v3557 = vpop.f32.mrb[0].mxu0
        %v3558 = vadd.f32 0.0, %v3557
        %v3559 = vpop.f32.mrb[0].mxu0
        %3560 = vmatprep.mubr.bf16.mxu0 0
        %3561 = vmatmul.mubr.bf16.gmra.mrb[0].mxu0 %v3507
        %v3562 = vpop.f32.mrb[0].mxu0
        %v3563 = vadd.f32 0.0, %v3562
        %v3564 = vpop.f32.mrb[0].mxu0
        %v3565 = vpop.f32.mrb[0].mxu0
        %v3566 = vadd.f32 0.0, %v3565
        %v3567 = vpop.f32.mrb[0].mxu0
        %3568 = vmatprep.mubr.bf16.mxu0 0
        %3569 = vmatmul.mubr.bf16.gmra.mrb[0].mxu0 %v3510
        %v3570 = vpop.f32.mrb[0].mxu0
        %v3571 = vadd.f32 0.0, %v3570
        %v3572 = vpop.f32.mrb[0].mxu0
        %v3573 = vpop.f32.mrb[0].mxu0
        %v3574 = vadd.f32 0.0, %v3573
        %v3575 = vpop.f32.mrb[0].mxu0
        %3576 = vdwg.mxu0
        %v3577 = vadd.f32 %v2840, %v3547
        %v3578 = vadd.f32 %v2843, %v3550
        %v3579 = vadd.f32 %v2848, %v3555
        %v3580 = vadd.f32 %v2851, %v3558
        %v3581 = vadd.f32 %v2856, %v3563
        %v3582 = vadd.f32 %v2859, %v3566
        %v3583 = vadd.f32 %v2864, %v3571
        %v3584 = vadd.f32 %v2867, %v3574
        %3585 = vrot.lane.b32.xlu0 %v1372, 32
        %v3586 = vpop.permute.xlu0 %3585
        %3587 = vrot.lane.b32.xlu0 %v1373, 32
        %v3588 = vpop.permute.xlu0 %3587
        %3589 = vrot.lane.b32.xlu0 %v1374, 32
        %v3590 = vpop.permute.xlu0 %3589
        %3591 = vrot.lane.b32.xlu0 %v1375, 32
        %v3592 = vpop.permute.xlu0 %3591
        %3593 = vrot.lane.b32.xlu0 %v1376, 32
        %v3594 = vpop.permute.xlu0 %3593
        %3595 = vrot.lane.b32.xlu0 %v1377, 32
        %v3596 = vpop.permute.xlu0 %3595
        %3597 = vrot.lane.b32.xlu0 %v1378, 32
        %v3598 = vpop.permute.xlu0 %3597
        %3599 = vrot.lane.b32.xlu0 %v1379, 32
        %v3600 = vpop.permute.xlu0 %3599
        %3609 = vrot.lane.b32.xlu0 %v1338, 32
        %v3610 = vpop.permute.xlu0 %3609
        %3612 = vmatprep.subr.bf16.mxu0 0
        %3613 = vmatpush1.bf16.msra.mxu0 %v3586
        %3614 = vmatprep.subr.bf16.mxu0 0
        %3615 = vmatpush1.bf16.msra.mxu0 %v3588
        %3616 = vmatprep.subr.bf16.mxu0 0
        %3617 = vmatpush1.bf16.msra.mxu0 %v3590
        %3618 = vmatprep.subr.bf16.mxu0 0
        %3619 = vmatpush1.bf16.msra.mxu0 %v3592
        %3620 = vmatprep.subr.bf16.mxu0 0
        %3621 = vmatpush1.bf16.msra.mxu0 %v3594
        %3622 = vmatprep.subr.bf16.mxu0 0
        %3623 = vmatpush1.bf16.msra.mxu0 %v3596
        %3624 = vmatprep.subr.bf16.mxu0 0
        %3625 = vmatpush1.bf16.msra.mxu0 %v3598
        %3626 = vmatprep.subr.bf16.mxu0 0
        %3627 = vmatpush1.bf16.msra.mxu0 %v3600
        %3628 = vmatprep.subr.bf16.mxu0 0
        %3629 = vmatpush1.bf16.msra.mxu0 0
        %3630 = vmatprep.subr.bf16.mxu0 0
        %3631 = vmatpush1.bf16.msra.mxu0 0
        %3632 = vmatprep.subr.bf16.mxu0 0
        %3633 = vmatpush1.bf16.msra.mxu0 0
        %3634 = vmatprep.subr.bf16.mxu0 0
        %3635 = vmatpush1.bf16.msra.mxu0 0
        %3636 = vmatprep.subr.bf16.mxu0 0
        %3637 = vmatpush1.bf16.msra.mxu0 0
        %3638 = vmatprep.subr.bf16.mxu0 0
        %3639 = vmatpush1.bf16.msra.mxu0 0
        %3640 = vmatprep.subr.bf16.mxu0 0
        %3641 = vmatpush1.bf16.msra.mxu0 0
        %3642 = vmatprep.subr.bf16.mxu0 0
        %3643 = vmatpush1.bf16.msra.mxu0 0
        %3644 = vmatprep.mubr.bf16.mxu0 0
        %3645 = vmatmul.mubr.bf16.gmra.mrb[0].mxu0 %v983
        %v3646 = vpop.f32.mrb[0].mxu0
        %v3647 = vadd.f32 %v3610, %v3646
        %v3648 = vpop.f32.mrb[0].mxu0
        %v3649 = vpop.f32.mrb[0].mxu0
        %v3650 = vadd.f32 %v3610, %v3649
        %v3651 = vpop.f32.mrb[0].mxu0
        %3652 = vmatprep.mubr.bf16.mxu0 0
        %3653 = vmatmul.mubr.bf16.gmra.mrb[0].mxu0 %v984
        %v3654 = vpop.f32.mrb[0].mxu0
        %v3655 = vadd.f32 %v3610, %v3654
        %v3656 = vpop.f32.mrb[0].mxu0
        %v3657 = vpop.f32.mrb[0].mxu0
        %v3658 = vadd.f32 %v3610, %v3657
        %v3659 = vpop.f32.mrb[0].mxu0
        %3660 = vmatprep.mubr.bf16.mxu0 0
        %3661 = vmatmul.mubr.bf16.gmra.mrb[0].mxu0 %v985
        %v3662 = vpop.f32.mrb[0].mxu0
        %v3663 = vadd.f32 %v3610, %v3662
        %v3664 = vpop.f32.mrb[0].mxu0
        %v3665 = vpop.f32.mrb[0].mxu0
        %v3666 = vadd.f32 %v3610, %v3665
        %v3667 = vpop.f32.mrb[0].mxu0
        %3668 = vmatprep.mubr.bf16.mxu0 0
        %3669 = vmatmul.mubr.bf16.gmra.mrb[0].mxu0 %v986
        %v3670 = vpop.f32.mrb[0].mxu0
        %v3671 = vadd.f32 %v3610, %v3670
        %v3672 = vpop.f32.mrb[0].mxu0
        %v3673 = vpop.f32.mrb[0].mxu0
        %v3674 = vadd.f32 %v3610, %v3673
        %v3675 = vpop.f32.mrb[0].mxu0
        %3676 = vdwg.mxu0
        %v3677 = vmul.f32 %v3647, 0.17677669
        %v3678 = vmul.f32 %v3650, 0.17677669
        %v3679 = vmul.f32 %v3655, 0.17677669
        %v3680 = vmul.f32 %v3658, 0.17677669
        %v3681 = vmul.f32 %v3663, 0.17677669
        %v3682 = vmul.f32 %v3666, 0.17677669
        %v3683 = vmul.f32 %v3671, 0.17677669
        %v3684 = vmul.f32 %v3674, 0.17677669
        %3685 = vrot.lane.b32.xlu0 %v1516, 32
        %v3686 = vpop.permute.xlu0 %3685
        %3687 = vrot.lane.b32.xlu0 %v1517, 32
        %v3688 = vpop.permute.xlu0 %3687
        %3689 = vrot.lane.b32.xlu0 %v1518, 32
        %v3690 = vpop.permute.xlu0 %3689
        %3691 = vrot.lane.b32.xlu0 %v1519, 32
        %v3692 = vpop.permute.xlu0 %3691
        %3693 = vrot.lane.b32.xlu0 %v1520, 32
        %v3694 = vpop.permute.xlu0 %3693
        %3695 = vrot.lane.b32.xlu0 %v1521, 32
        %v3696 = vpop.permute.xlu0 %3695
        %3697 = vrot.lane.b32.xlu0 %v1522, 32
        %v3698 = vpop.permute.xlu0 %3697
        %3699 = vrot.lane.b32.xlu0 %v1523, 32
        %v3700 = vpop.permute.xlu0 %3699
        %3709 = vrot.lane.b32.xlu0 %v1482, 32
        %v3710 = vpop.permute.xlu0 %3709
        %3712 = vmatprep.subr.bf16.mxu0 0
        %3713 = vmatpush1.bf16.msra.mxu0 %v3686
        %3714 = vmatprep.subr.bf16.mxu0 0
        %3715 = vmatpush1.bf16.msra.mxu0 %v3688
        %3716 = vmatprep.subr.bf16.mxu0 0
        %3717 = vmatpush1.bf16.msra.mxu0 %v3690
        %3718 = vmatprep.subr.bf16.mxu0 0
        %3719 = vmatpush1.bf16.msra.mxu0 %v3692
        %3720 = vmatprep.subr.bf16.mxu0 0
        %3721 = vmatpush1.bf16.msra.mxu0 %v3694
        %3722 = vmatprep.subr.bf16.mxu0 0
        %3723 = vmatpush1.bf16.msra.mxu0 %v3696
        %3724 = vmatprep.subr.bf16.mxu0 0
        %3725 = vmatpush1.bf16.msra.mxu0 %v3698
        %3726 = vmatprep.subr.bf16.mxu0 0
        %3727 = vmatpush1.bf16.msra.mxu0 %v3700
        %3728 = vmatprep.subr.bf16.mxu0 0
        %3729 = vmatpush1.bf16.msra.mxu0 0
        %3730 = vmatprep.subr.bf16.mxu0 0
        %3731 = vmatpush1.bf16.msra.mxu0 0
        %3732 = vmatprep.subr.bf16.mxu0 0
        %3733 = vmatpush1.bf16.msra.mxu0 0
        %3734 = vmatprep.subr.bf16.mxu0 0
        %3735 = vmatpush1.bf16.msra.mxu0 0
        %3736 = vmatprep.subr.bf16.mxu0 0
        %3737 = vmatpush1.bf16.msra.mxu0 0
        %3738 = vmatprep.subr.bf16.mxu0 0
        %3739 = vmatpush1.bf16.msra.mxu0 0
        %3740 = vmatprep.subr.bf16.mxu0 0
        %3741 = vmatpush1.bf16.msra.mxu0 0
        %3742 = vmatprep.subr.bf16.mxu0 0
        %3743 = vmatpush1.bf16.msra.mxu0 0
        %3744 = vmatprep.mubr.bf16.mxu0 0
        %3745 = vmatmul.mubr.bf16.gmra.mrb[0].mxu0 %v1307
        %v3746 = vpop.f32.mrb[0].mxu0
        %v3747 = vadd.f32 %v3710, %v3746
        %v3748 = vpop.f32.mrb[0].mxu0
        %v3749 = vpop.f32.mrb[0].mxu0
        %v3750 = vadd.f32 %v3710, %v3749
        %v3751 = vpop.f32.mrb[0].mxu0
        %3752 = vmatprep.mubr.bf16.mxu0 0
        %3753 = vmatmul.mubr.bf16.gmra.mrb[0].mxu0 %v1308
        %v3754 = vpop.f32.mrb[0].mxu0
        %v3755 = vadd.f32 %v3710, %v3754
        %v3756 = vpop.f32.mrb[0].mxu0
        %v3757 = vpop.f32.mrb[0].mxu0
        %v3758 = vadd.f32 %v3710, %v3757
        %v3759 = vpop.f32.mrb[0].mxu0
        %3760 = vmatprep.mubr.bf16.mxu0 0
        %3761 = vmatmul.mubr.bf16.gmra.mrb[0].mxu0 %v1309
        %v3762 = vpop.f32.mrb[0].mxu0
        %v3763 = vadd.f32 %v3710, %v3762
        %v3764 = vpop.f32.mrb[0].mxu0
        %v3765 = vpop.f32.mrb[0].mxu0
        %v3766 = vadd.f32 %v3710, %v3765
        %v3767 = vpop.f32.mrb[0].mxu0
        %3768 = vmatprep.mubr.bf16.mxu0 0
        %3769 = vmatmul.mubr.bf16.gmra.mrb[0].mxu0 %v1310
        %v3770 = vpop.f32.mrb[0].mxu0
        %v3771 = vadd.f32 %v3710, %v3770
        %v3772 = vpop.f32.mrb[0].mxu0
        %v3773 = vpop.f32.mrb[0].mxu0
        %v3774 = vadd.f32 %v3710, %v3773
        %v3775 = vpop.f32.mrb[0].mxu0
        %3776 = vmatprep.mubr.bf16.mxu0 0
        %3777 = vmatmul.mubr.bf16.gmra.mrb[0].mxu0 %v1311
        %v3778 = vpop.f32.mrb[0].mxu0
        %v3779 = vadd.f32 %v3710, %v3778
        %v3780 = vpop.f32.mrb[0].mxu0
        %v3781 = vpop.f32.mrb[0].mxu0
        %v3782 = vadd.f32 %v3710, %v3781
        %v3783 = vpop.f32.mrb[0].mxu0
        %3784 = vmatprep.mubr.bf16.mxu0 0
        %3785 = vmatmul.mubr.bf16.gmra.mrb[0].mxu0 %v1312
        %v3786 = vpop.f32.mrb[0].mxu0
        %v3787 = vadd.f32 %v3710, %v3786
        %v3788 = vpop.f32.mrb[0].mxu0
        %v3789 = vpop.f32.mrb[0].mxu0
        %v3790 = vadd.f32 %v3710, %v3789
        %v3791 = vpop.f32.mrb[0].mxu0
        %3792 = vmatprep.mubr.bf16.mxu0 0
        %3793 = vmatmul.mubr.bf16.gmra.mrb[0].mxu0 %v1313
        %v3794 = vpop.f32.mrb[0].mxu0
        %v3795 = vadd.f32 %v3710, %v3794
        %v3796 = vpop.f32.mrb[0].mxu0
        %v3797 = vpop.f32.mrb[0].mxu0
        %v3798 = vadd.f32 %v3710, %v3797
        %v3799 = vpop.f32.mrb[0].mxu0
        %3800 = vmatprep.mubr.bf16.mxu0 0
        %3801 = vmatmul.mubr.bf16.gmra.mrb[0].mxu0 %v1314
        %v3802 = vpop.f32.mrb[0].mxu0
        %v3803 = vadd.f32 %v3710, %v3802
        %v3804 = vpop.f32.mrb[0].mxu0
        %v3805 = vpop.f32.mrb[0].mxu0
        %v3806 = vadd.f32 %v3710, %v3805
        %v3807 = vpop.f32.mrb[0].mxu0
        %3808 = vdwg.mxu0
        %3809 = vrot.lane.b32.xlu0 %v1684, 32
        %v3810 = vpop.permute.xlu0 %3809
        %3811 = vrot.lane.b32.xlu0 %v1685, 32
        %v3812 = vpop.permute.xlu0 %3811
        %3813 = vrot.lane.b32.xlu0 %v1686, 32
        %v3814 = vpop.permute.xlu0 %3813
        %3815 = vrot.lane.b32.xlu0 %v1687, 32
        %v3816 = vpop.permute.xlu0 %3815
        %3817 = vrot.lane.b32.xlu0 %v1688, 32
        %v3818 = vpop.permute.xlu0 %3817
        %3819 = vrot.lane.b32.xlu0 %v1689, 32
        %v3820 = vpop.permute.xlu0 %3819
        %3821 = vrot.lane.b32.xlu0 %v1690, 32
        %v3822 = vpop.permute.xlu0 %3821
        %3823 = vrot.lane.b32.xlu0 %v1691, 32
        %v3824 = vpop.permute.xlu0 %3823
        %3833 = vrot.lane.b32.xlu0 %v1650, 32
        %v3834 = vpop.permute.xlu0 %3833
        %3836 = vmatprep.subr.bf16.mxu0 0
        %3837 = vmatpush1.bf16.msra.mxu0 %v3810
        %3838 = vmatprep.subr.bf16.mxu0 0
        %3839 = vmatpush1.bf16.msra.mxu0 %v3812
        %3840 = vmatprep.subr.bf16.mxu0 0
        %3841 = vmatpush1.bf16.msra.mxu0 %v3814
        %3842 = vmatprep.subr.bf16.mxu0 0
        %3843 = vmatpush1.bf16.msra.mxu0 %v3816
        %3844 = vmatprep.subr.bf16.mxu0 0
        %3845 = vmatpush1.bf16.msra.mxu0 %v3818
        %3846 = vmatprep.subr.bf16.mxu0 0
        %3847 = vmatpush1.bf16.msra.mxu0 %v3820
        %3848 = vmatprep.subr.bf16.mxu0 0
        %3849 = vmatpush1.bf16.msra.mxu0 %v3822
        %3850 = vmatprep.subr.bf16.mxu0 0
        %3851 = vmatpush1.bf16.msra.mxu0 %v3824
        %3852 = vmatprep.subr.bf16.mxu0 0
        %3853 = vmatpush1.bf16.msra.mxu0 0
        %3854 = vmatprep.subr.bf16.mxu0 0
        %3855 = vmatpush1.bf16.msra.mxu0 0
        %3856 = vmatprep.subr.bf16.mxu0 0
        %3857 = vmatpush1.bf16.msra.mxu0 0
        %3858 = vmatprep.subr.bf16.mxu0 0
        %3859 = vmatpush1.bf16.msra.mxu0 0
        %3860 = vmatprep.subr.bf16.mxu0 0
        %3861 = vmatpush1.bf16.msra.mxu0 0
        %3862 = vmatprep.subr.bf16.mxu0 0
        %3863 = vmatpush1.bf16.msra.mxu0 0
        %3864 = vmatprep.subr.bf16.mxu0 0
        %3865 = vmatpush1.bf16.msra.mxu0 0
        %3866 = vmatprep.subr.bf16.mxu0 0
        %3867 = vmatpush1.bf16.msra.mxu0 0
        %3868 = vmatprep.mubr.bf16.mxu0 0
        %3869 = vmatmul.mubr.bf16.gmra.mrb[0].mxu0 %v1307
        %v3870 = vpop.f32.mrb[0].mxu0
        %v3871 = vadd.f32 %v3834, %v3870
        %v3872 = vpop.f32.mrb[0].mxu0
        %v3873 = vpop.f32.mrb[0].mxu0
        %v3874 = vadd.f32 %v3834, %v3873
        %v3875 = vpop.f32.mrb[0].mxu0
        %3876 = vmatprep.mubr.bf16.mxu0 0
        %3877 = vmatmul.mubr.bf16.gmra.mrb[0].mxu0 %v1308
        %v3878 = vpop.f32.mrb[0].mxu0
        %v3879 = vadd.f32 %v3834, %v3878
        %v3880 = vpop.f32.mrb[0].mxu0
        %v3881 = vpop.f32.mrb[0].mxu0
        %v3882 = vadd.f32 %v3834, %v3881
        %v3883 = vpop.f32.mrb[0].mxu0
        %3884 = vmatprep.mubr.bf16.mxu0 0
        %3885 = vmatmul.mubr.bf16.gmra.mrb[0].mxu0 %v1309
        %v3886 = vpop.f32.mrb[0].mxu0
        %v3887 = vadd.f32 %v3834, %v3886
        %v3888 = vpop.f32.mrb[0].mxu0
        %v3889 = vpop.f32.mrb[0].mxu0
        %v3890 = vadd.f32 %v3834, %v3889
        %v3891 = vpop.f32.mrb[0].mxu0
        %3892 = vmatprep.mubr.bf16.mxu0 0
        %3893 = vmatmul.mubr.bf16.gmra.mrb[0].mxu0 %v1310
        %v3894 = vpop.f32.mrb[0].mxu0
        %v3895 = vadd.f32 %v3834, %v3894
        %v3896 = vpop.f32.mrb[0].mxu0
        %v3897 = vpop.f32.mrb[0].mxu0
        %v3898 = vadd.f32 %v3834, %v3897
        %v3899 = vpop.f32.mrb[0].mxu0
        %3900 = vmatprep.mubr.bf16.mxu0 0
        %3901 = vmatmul.mubr.bf16.gmra.mrb[0].mxu0 %v1311
        %v3902 = vpop.f32.mrb[0].mxu0
        %v3903 = vadd.f32 %v3834, %v3902
        %v3904 = vpop.f32.mrb[0].mxu0
        %v3905 = vpop.f32.mrb[0].mxu0
        %v3906 = vadd.f32 %v3834, %v3905
        %v3907 = vpop.f32.mrb[0].mxu0
        %3908 = vmatprep.mubr.bf16.mxu0 0
        %3909 = vmatmul.mubr.bf16.gmra.mrb[0].mxu0 %v1312
        %v3910 = vpop.f32.mrb[0].mxu0
        %v3911 = vadd.f32 %v3834, %v3910
        %v3912 = vpop.f32.mrb[0].mxu0
        %v3913 = vpop.f32.mrb[0].mxu0
        %v3914 = vadd.f32 %v3834, %v3913
        %v3915 = vpop.f32.mrb[0].mxu0
        %3916 = vmatprep.mubr.bf16.mxu0 0
        %3917 = vmatmul.mubr.bf16.gmra.mrb[0].mxu0 %v1313
        %v3918 = vpop.f32.mrb[0].mxu0
        %v3919 = vadd.f32 %v3834, %v3918
        %v3920 = vpop.f32.mrb[0].mxu0
        %v3921 = vpop.f32.mrb[0].mxu0
        %v3922 = vadd.f32 %v3834, %v3921
        %v3923 = vpop.f32.mrb[0].mxu0
        %3924 = vmatprep.mubr.bf16.mxu0 0
        %3925 = vmatmul.mubr.bf16.gmra.mrb[0].mxu0 %v1314
        %v3926 = vpop.f32.mrb[0].mxu0
        %v3927 = vadd.f32 %v3834, %v3926
        %v3928 = vpop.f32.mrb[0].mxu0
        %v3929 = vpop.f32.mrb[0].mxu0
        %v3930 = vadd.f32 %v3834, %v3929
        %v3931 = vpop.f32.mrb[0].mxu0
        %3932 = vdwg.mxu0
        %v3933 = vpack.c.bf16 %v3678, %v3677
        %v3934 = vpack.c.bf16 %v3680, %v3679
        %v3935 = vpack.c.bf16 %v3682, %v3681
        %v3936 = vpack.c.bf16 %v3684, %v3683
        %v3937 = vpack.c.bf16 %v3750, %v3747
        %v3938 = vpack.c.bf16 %v3758, %v3755
        %v3939 = vpack.c.bf16 %v3766, %v3763
        %v3940 = vpack.c.bf16 %v3774, %v3771
        %v3941 = vpack.c.bf16 %v3782, %v3779
        %v3942 = vpack.c.bf16 %v3790, %v3787
        %v3943 = vpack.c.bf16 %v3798, %v3795
        %v3944 = vpack.c.bf16 %v3806, %v3803
        %v3946 = vsel %vm1815, %v3933, 0
        %v3949 = vsel %vm1815, %v3934, 0
        %v3952 = vsel %vm1815, %v3935, 0
        %v3955 = vsel %vm1815, %v3936, 0
        %v3958 = vsel %vm1815, %v3937, 0
        %v3961 = vsel %vm1815, %v3938, 0
        %v3964 = vsel %vm1815, %v3939, 0
        %v3967 = vsel %vm1815, %v3940, 0
        %v3970 = vsel %vm1815, %v3941, 0
        %v3973 = vsel %vm1815, %v3942, 0
        %v3976 = vsel %vm1815, %v3943, 0
        %v3979 = vsel %vm1815, %v3944, 0
        %3981 = vmatprep.subr.bf16.mxu0 0
        %3982 = vmatpush1.bf16.xpose.msra.mxu0 %v3958
        %3983 = vmatprep.subr.bf16.mxu0 0
        %3984 = vmatpush1.bf16.xpose.msra.mxu0 %v3961
        %3985 = vmatprep.subr.bf16.mxu0 0
        %3986 = vmatpush1.bf16.xpose.msra.mxu0 %v3964
        %3987 = vmatprep.subr.bf16.mxu0 0
        %3988 = vmatpush1.bf16.xpose.msra.mxu0 %v3967
        %3989 = vmatprep.subr.bf16.mxu0 0
        %3990 = vmatpush1.bf16.xpose.msra.mxu0 %v3970
        %3991 = vmatprep.subr.bf16.mxu0 0
        %3992 = vmatpush1.bf16.xpose.msra.mxu0 %v3973
        %3993 = vmatprep.subr.bf16.mxu0 0
        %3994 = vmatpush1.bf16.xpose.msra.mxu0 %v3976
        %3995 = vmatprep.subr.bf16.mxu0 0
        %3996 = vmatpush1.bf16.xpose.msra.mxu0 %v3979
        %3997 = vmatprep.subr.bf16.mxu0 0
        %3998 = vmatpush1.bf16.xpose.msra.mxu0 0
        %3999 = vmatprep.subr.bf16.mxu0 0
        %4000 = vmatpush1.bf16.xpose.msra.mxu0 0
        %4001 = vmatprep.subr.bf16.mxu0 0
        %4002 = vmatpush1.bf16.xpose.msra.mxu0 0
        %4003 = vmatprep.subr.bf16.mxu0 0
        %4004 = vmatpush1.bf16.xpose.msra.mxu0 0
        %4005 = vmatprep.subr.bf16.mxu0 0
        %4006 = vmatpush1.bf16.xpose.msra.mxu0 0
        %4007 = vmatprep.subr.bf16.mxu0 0
        %4008 = vmatpush1.bf16.xpose.msra.mxu0 0
        %4009 = vmatprep.subr.bf16.mxu0 0
        %4010 = vmatpush1.bf16.xpose.msra.mxu0 0
        %4011 = vmatprep.subr.bf16.mxu0 0
        %4012 = vmatpush1.bf16.xpose.msra.mxu0 0
        %4013 = vmatprep.mubr.bf16.mxu0 0
        %4014 = vmatmul.mubr.bf16.gmra.mrb[0].mxu0 %v3946
        %v4015 = vpop.f32.mrb[0].mxu0
        %v4016 = vadd.f32 %v1813, %v4015
        %v4017 = vpop.f32.mrb[0].mxu0
        %v4018 = vpop.f32.mrb[0].mxu0
        %v4019 = vadd.f32 %v1813, %v4018
        %v4020 = vpop.f32.mrb[0].mxu0
        %4021 = vmatprep.mubr.bf16.mxu0 0
        %4022 = vmatmul.mubr.bf16.gmra.mrb[0].mxu0 %v3949
        %v4023 = vpop.f32.mrb[0].mxu0
        %v4024 = vadd.f32 %v1813, %v4023
        %v4025 = vpop.f32.mrb[0].mxu0
        %v4026 = vpop.f32.mrb[0].mxu0
        %v4027 = vadd.f32 %v1813, %v4026
        %v4028 = vpop.f32.mrb[0].mxu0
        %4029 = vmatprep.mubr.bf16.mxu0 0
        %4030 = vmatmul.mubr.bf16.gmra.mrb[0].mxu0 %v3952
        %v4031 = vpop.f32.mrb[0].mxu0
        %v4032 = vadd.f32 %v1813, %v4031
        %v4033 = vpop.f32.mrb[0].mxu0
        %v4034 = vpop.f32.mrb[0].mxu0
        %v4035 = vadd.f32 %v1813, %v4034
        %v4036 = vpop.f32.mrb[0].mxu0
        %4037 = vmatprep.mubr.bf16.mxu0 0
        %4038 = vmatmul.mubr.bf16.gmra.mrb[0].mxu0 %v3955
        %v4039 = vpop.f32.mrb[0].mxu0
        %v4040 = vadd.f32 %v1813, %v4039
        %v4041 = vpop.f32.mrb[0].mxu0
        %v4042 = vpop.f32.mrb[0].mxu0
        %v4043 = vadd.f32 %v1813, %v4042
        %v4044 = vpop.f32.mrb[0].mxu0
        %4045 = vdwg.mxu0
        %4046 = vmax.xlane.f32.xlu0 %v4016
        %v4047 = vpop.xlane.xlu0 %4046
        %4048 = vmax.xlane.f32.xlu0 %v4019
        %v4049 = vpop.xlane.xlu0 %4048
        %4050 = vmax.xlane.f32.xlu0 %v4024
        %v4051 = vpop.xlane.xlu0 %4050
        %4052 = vmax.xlane.f32.xlu0 %v4027
        %v4053 = vpop.xlane.xlu0 %4052
        %4054 = vmax.xlane.f32.xlu0 %v4032
        %v4055 = vpop.xlane.xlu0 %4054
        %4056 = vmax.xlane.f32.xlu0 %v4035
        %v4057 = vpop.xlane.xlu0 %4056
        %4058 = vmax.xlane.f32.xlu0 %v4040
        %v4059 = vpop.xlane.xlu0 %4058
        %4060 = vmax.xlane.f32.xlu0 %v4043
        %v4061 = vpop.xlane.xlu0 %4060
        %v4062 = vsub.f32 %v4016, %v4047
        %v4063 = vsub.f32 %v4019, %v4049
        %v4064 = vsub.f32 %v4024, %v4051
        %v4065 = vsub.f32 %v4027, %v4053
        %v4066 = vsub.f32 %v4032, %v4055
        %v4067 = vsub.f32 %v4035, %v4057
        %v4068 = vsub.f32 %v4040, %v4059
        %v4069 = vsub.f32 %v4043, %v4061
        %v4070 = vmul.f32 %v4062, 1.442695
        %v4071 = vpow.pop %v4070
        %v4072 = vmul.f32 %v4063, 1.442695
        %v4073 = vpow.pop %v4072
        %v4074 = vmul.f32 %v4064, 1.442695
        %v4075 = vpow.pop %v4074
        %v4076 = vmul.f32 %v4065, 1.442695
        %v4077 = vpow.pop %v4076
        %v4078 = vmul.f32 %v4066, 1.442695
        %v4079 = vpow.pop %v4078
        %v4080 = vmul.f32 %v4067, 1.442695
        %v4081 = vpow.pop %v4080
        %v4082 = vmul.f32 %v4068, 1.442695
        %v4083 = vpow.pop %v4082
        %v4084 = vmul.f32 %v4069, 1.442695
        %v4085 = vpow.pop %v4084
        %4086 = vadd.xlane.f32.xlu0 %v4071
        %v4087 = vpop.xlane.xlu0 %4086
        %4088 = vadd.xlane.f32.xlu0 %v4073
        %v4089 = vpop.xlane.xlu0 %4088
        %4090 = vadd.xlane.f32.xlu0 %v4075
        %v4091 = vpop.xlane.xlu0 %4090
        %4092 = vadd.xlane.f32.xlu0 %v4077
        %v4093 = vpop.xlane.xlu0 %4092
        %4094 = vadd.xlane.f32.xlu0 %v4079
        %v4095 = vpop.xlane.xlu0 %4094
        %4096 = vadd.xlane.f32.xlu0 %v4081
        %v4097 = vpop.xlane.xlu0 %4096
        %4098 = vadd.xlane.f32.xlu0 %v4083
        %v4099 = vpop.xlane.xlu0 %4098
        %4100 = vadd.xlane.f32.xlu0 %v4085
        %v4101 = vpop.xlane.xlu0 %4100
        %v4102 = vrcp.pop %v4087
        %v4103 = vrcp.pop %v4089
        %v4104 = vrcp.pop %v4091
        %v4105 = vrcp.pop %v4093
        %v4106 = vrcp.pop %v4095
        %v4107 = vrcp.pop %v4097
        %v4108 = vrcp.pop %v4099
        %v4109 = vrcp.pop %v4101
        %v4110 = vmul.f32 %v4071, %v4102
        %v4111 = vmul.f32 %v4073, %v4103
        %v4112 = vmul.f32 %v4075, %v4104
        %v4113 = vmul.f32 %v4077, %v4105
        %v4114 = vmul.f32 %v4079, %v4106
        %v4115 = vmul.f32 %v4081, %v4107
        %v4116 = vmul.f32 %v4083, %v4108
        %v4117 = vmul.f32 %v4085, %v4109
        %v4118 = vpack.c.bf16 %v4111, %v4110
        %v4119 = vpack.c.bf16 %v4113, %v4112
        %v4120 = vpack.c.bf16 %v4115, %v4114
        %v4121 = vpack.c.bf16 %v4117, %v4116
        %v4122 = vpack.c.bf16 %v3874, %v3871
        %v4123 = vpack.c.bf16 %v3882, %v3879
        %v4124 = vpack.c.bf16 %v3890, %v3887
        %v4125 = vpack.c.bf16 %v3898, %v3895
        %v4126 = vpack.c.bf16 %v3906, %v3903
        %v4127 = vpack.c.bf16 %v3914, %v3911
        %v4128 = vpack.c.bf16 %v3922, %v3919
        %v4129 = vpack.c.bf16 %v3930, %v3927
        %4130 = vmatprep.subr.bf16.mxu0 0
        %4131 = vmatpush1.bf16.msra.mxu0 %v4122
        %4132 = vmatprep.subr.bf16.mxu0 0
        %4133 = vmatpush1.bf16.msra.mxu0 %v4123
        %4134 = vmatprep.subr.bf16.mxu0 0
        %4135 = vmatpush1.bf16.msra.mxu0 %v4124
        %4136 = vmatprep.subr.bf16.mxu0 0
        %4137 = vmatpush1.bf16.msra.mxu0 %v4125
        %4138 = vmatprep.subr.bf16.mxu0 0
        %4139 = vmatpush1.bf16.msra.mxu0 %v4126
        %4140 = vmatprep.subr.bf16.mxu0 0
        %4141 = vmatpush1.bf16.msra.mxu0 %v4127
        %4142 = vmatprep.subr.bf16.mxu0 0
        %4143 = vmatpush1.bf16.msra.mxu0 %v4128
        %4144 = vmatprep.subr.bf16.mxu0 0
        %4145 = vmatpush1.bf16.msra.mxu0 %v4129
        %4146 = vmatprep.subr.bf16.mxu0 0
        %4147 = vmatpush1.bf16.msra.mxu0 0
        %4148 = vmatprep.subr.bf16.mxu0 0
        %4149 = vmatpush1.bf16.msra.mxu0 0
        %4150 = vmatprep.subr.bf16.mxu0 0
        %4151 = vmatpush1.bf16.msra.mxu0 0
        %4152 = vmatprep.subr.bf16.mxu0 0
        %4153 = vmatpush1.bf16.msra.mxu0 0
        %4154 = vmatprep.subr.bf16.mxu0 0
        %4155 = vmatpush1.bf16.msra.mxu0 0
        %4156 = vmatprep.subr.bf16.mxu0 0
        %4157 = vmatpush1.bf16.msra.mxu0 0
        %4158 = vmatprep.subr.bf16.mxu0 0
        %4159 = vmatpush1.bf16.msra.mxu0 0
        %4160 = vmatprep.subr.bf16.mxu0 0
        %4161 = vmatpush1.bf16.msra.mxu0 0
        %4162 = vmatprep.mubr.bf16.mxu0 0
        %4163 = vmatmul.mubr.bf16.gmra.mrb[0].mxu0 %v4118
        %v4164 = vpop.f32.mrb[0].mxu0
        %v4165 = vadd.f32 0.0, %v4164
        %v4166 = vpop.f32.mrb[0].mxu0
        %v4167 = vpop.f32.mrb[0].mxu0
        %v4168 = vadd.f32 0.0, %v4167
        %v4169 = vpop.f32.mrb[0].mxu0
        %4170 = vmatprep.mubr.bf16.mxu0 0
        %4171 = vmatmul.mubr.bf16.gmra.mrb[0].mxu0 %v4119
        %v4172 = vpop.f32.mrb[0].mxu0
        %v4173 = vadd.f32 0.0, %v4172
        %v4174 = vpop.f32.mrb[0].mxu0
        %v4175 = vpop.f32.mrb[0].mxu0
        %v4176 = vadd.f32 0.0, %v4175
        %v4177 = vpop.f32.mrb[0].mxu0
        %4178 = vmatprep.mubr.bf16.mxu0 0
        %4179 = vmatmul.mubr.bf16.gmra.mrb[0].mxu0 %v4120
        %v4180 = vpop.f32.mrb[0].mxu0
        %v4181 = vadd.f32 0.0, %v4180
        %v4182 = vpop.f32.mrb[0].mxu0
        %v4183 = vpop.f32.mrb[0].mxu0
        %v4184 = vadd.f32 0.0, %v4183
        %v4185 = vpop.f32.mrb[0].mxu0
        %4186 = vmatprep.mubr.bf16.mxu0 0
        %4187 = vmatmul.mubr.bf16.gmra.mrb[0].mxu0 %v4121
        %v4188 = vpop.f32.mrb[0].mxu0
        %v4189 = vadd.f32 0.0, %v4188
        %v4190 = vpop.f32.mrb[0].mxu0
        %v4191 = vpop.f32.mrb[0].mxu0
        %v4192 = vadd.f32 0.0, %v4191
        %v4193 = vpop.f32.mrb[0].mxu0
        %4194 = vdwg.mxu0
        %v4195 = vpack.c.bf16 %v4168, %v4165
        %v4196 = vpack.c.bf16 %v4176, %v4173
        %v4197 = vpack.c.bf16 %v4184, %v4181
        %v4198 = vpack.c.bf16 %v4192, %v4189
        %v4199 = vld [vmem:[#allocation11 + $0x30] sm:$0xf]
        %v4200 = vld [vmem:[#allocation11 + $0x34] sm:$0xf]
        %v4201 = vld [vmem:[#allocation11 + $0x38] sm:$0xf]
        %v4202 = vld [vmem:[#allocation11 + $0x3c] sm:$0xf]
        %v4207 = vunpack.c.l.b16 %v4199
        %v4208 = vunpack.c.l.b16 %v4200
        %v4209 = vunpack.c.l.b16 %v4201
        %v4210 = vunpack.c.l.b16 %v4202
        %v4211 = vpack.c.b16 %v4208, %v4207
        %v4212 = vpack.c.b16 %v4210, %v4209
        %v4216 = vsel %vm1815, %v4195, 0
        %v4219 = vsel %vm1815, %v4196, 0
        %v4222 = vsel %vm1815, %v4197, 0
        %v4225 = vsel %vm1815, %v4198, 0
        %4227 = vmatprep.subr.bf16.mxu0 0
        %4228 = vmatpush1.bf16.msra.mxu0 %v4211
        %4229 = vmatprep.subr.bf16.mxu0 0
        %4230 = vmatpush1.bf16.msra.mxu0 %v4212
        %4231 = vmatprep.subr.bf16.mxu0 0
        %4232 = vmatpush1.bf16.msra.mxu0 0
        %4233 = vmatprep.subr.bf16.mxu0 0
        %4234 = vmatpush1.bf16.msra.mxu0 0
        %4235 = vmatprep.subr.bf16.mxu0 0
        %4236 = vmatpush1.bf16.msra.mxu0 0
        %4237 = vmatprep.subr.bf16.mxu0 0
        %4238 = vmatpush1.bf16.msra.mxu0 0
        %4239 = vmatprep.subr.bf16.mxu0 0
        %4240 = vmatpush1.bf16.msra.mxu0 0
        %4241 = vmatprep.subr.bf16.mxu0 0
        %4242 = vmatpush1.bf16.msra.mxu0 0
        %4243 = vmatprep.subr.bf16.mxu0 0
        %4244 = vmatpush1.bf16.msra.mxu0 0
        %4245 = vmatprep.subr.bf16.mxu0 0
        %4246 = vmatpush1.bf16.msra.mxu0 0
        %4247 = vmatprep.subr.bf16.mxu0 0
        %4248 = vmatpush1.bf16.msra.mxu0 0
        %4249 = vmatprep.subr.bf16.mxu0 0
        %4250 = vmatpush1.bf16.msra.mxu0 0
        %4251 = vmatprep.subr.bf16.mxu0 0
        %4252 = vmatpush1.bf16.msra.mxu0 0
        %4253 = vmatprep.subr.bf16.mxu0 0
        %4254 = vmatpush1.bf16.msra.mxu0 0
        %4255 = vmatprep.subr.bf16.mxu0 0
        %4256 = vmatpush1.bf16.msra.mxu0 0
        %4257 = vmatprep.subr.bf16.mxu0 0
        %4258 = vmatpush1.bf16.msra.mxu0 0
        %4259 = vmatprep.mubr.bf16.mxu0 0
        %4260 = vmatmul.mubr.bf16.gmra.mrb[0].mxu0 %v4216
        %v4261 = vpop.f32.mrb[0].mxu0
        %v4262 = vadd.f32 0.0, %v4261
        %v4263 = vpop.f32.mrb[0].mxu0
        %v4264 = vpop.f32.mrb[0].mxu0
        %v4265 = vadd.f32 0.0, %v4264
        %v4266 = vpop.f32.mrb[0].mxu0
        %4267 = vmatprep.mubr.bf16.mxu0 0
        %4268 = vmatmul.mubr.bf16.gmra.mrb[0].mxu0 %v4219
        %v4269 = vpop.f32.mrb[0].mxu0
        %v4270 = vadd.f32 0.0, %v4269
        %v4271 = vpop.f32.mrb[0].mxu0
        %v4272 = vpop.f32.mrb[0].mxu0
        %v4273 = vadd.f32 0.0, %v4272
        %v4274 = vpop.f32.mrb[0].mxu0
        %4275 = vmatprep.mubr.bf16.mxu0 0
        %4276 = vmatmul.mubr.bf16.gmra.mrb[0].mxu0 %v4222
        %v4277 = vpop.f32.mrb[0].mxu0
        %v4278 = vadd.f32 0.0, %v4277
        %v4279 = vpop.f32.mrb[0].mxu0
        %v4280 = vpop.f32.mrb[0].mxu0
        %v4281 = vadd.f32 0.0, %v4280
        %v4282 = vpop.f32.mrb[0].mxu0
        %4283 = vmatprep.mubr.bf16.mxu0 0
        %4284 = vmatmul.mubr.bf16.gmra.mrb[0].mxu0 %v4225
        %v4285 = vpop.f32.mrb[0].mxu0
        %v4286 = vadd.f32 0.0, %v4285
        %v4287 = vpop.f32.mrb[0].mxu0
        %v4288 = vpop.f32.mrb[0].mxu0
        %v4289 = vadd.f32 0.0, %v4288
        %v4290 = vpop.f32.mrb[0].mxu0
        %4291 = vdwg.mxu0
        %v4292 = vadd.f32 %v3577, %v4262
        %v4293 = vadd.f32 %v3578, %v4265
        %v4294 = vadd.f32 %v3579, %v4270
        %v4295 = vadd.f32 %v3580, %v4273
        %v4296 = vadd.f32 %v3581, %v4278
        %v4297 = vadd.f32 %v3582, %v4281
        %v4298 = vadd.f32 %v3583, %v4286
        %v4299 = vadd.f32 %v3584, %v4289
        %v4300 = vadd.f32 %v783, %v4292
        %v4301 = vadd.f32 %v784, %v4293
        %v4302 = vadd.f32 %v785, %v4294
        %v4303 = vadd.f32 %v786, %v4295
        %v4304 = vadd.f32 %v787, %v4296
        %v4305 = vadd.f32 %v788, %v4297
        %v4306 = vadd.f32 %v789, %v4298
        %v4307 = vadd.f32 %v790, %v4299
        %v4308 = vld [vmem:[%s10] sm:$0x1]
        %v4310 = vlaneseq
        %v4311 = vshrl.u32 %v4310, 7
        %v4312 = vsub.s32 0, %v4311
        %v4313 = vrot.slane %v4308, %v4312
        %v4315 = vadd.f32 %v4300, %v4313
        %v4316 = vadd.f32 %v4301, %v4313
        %v4317 = vadd.f32 %v4302, %v4313
        %v4318 = vadd.f32 %v4303, %v4313
        %v4319 = vadd.f32 %v4304, %v4313
        %v4320 = vadd.f32 %v4305, %v4313
        %v4321 = vadd.f32 %v4306, %v4313
        %v4322 = vadd.f32 %v4307, %v4313
        %4323 = vadd.xlane.f32.xlu0 %v4315
        %v4324 = vpop.xlane.xlu0 %4323
        %4325 = vadd.xlane.f32.xlu0 %v4316
        %v4326 = vpop.xlane.xlu0 %4325
        %4327 = vadd.xlane.f32.xlu0 %v4317
        %v4328 = vpop.xlane.xlu0 %4327
        %4329 = vadd.xlane.f32.xlu0 %v4318
        %v4330 = vpop.xlane.xlu0 %4329
        %4331 = vadd.xlane.f32.xlu0 %v4319
        %v4332 = vpop.xlane.xlu0 %4331
        %4333 = vadd.xlane.f32.xlu0 %v4320
        %v4334 = vpop.xlane.xlu0 %4333
        %4335 = vadd.xlane.f32.xlu0 %v4321
        %v4336 = vpop.xlane.xlu0 %4335
        %4337 = vadd.xlane.f32.xlu0 %v4322
        %v4338 = vpop.xlane.xlu0 %4337
        %v4339 = vmul.f32 %v4324, %v824
        %v4340 = vmul.f32 %v4326, %v824
        %v4341 = vmul.f32 %v4328, %v824
        %v4342 = vmul.f32 %v4330, %v824
        %v4343 = vmul.f32 %v4332, %v824
        %v4344 = vmul.f32 %v4334, %v824
        %v4345 = vmul.f32 %v4336, %v824
        %v4346 = vmul.f32 %v4338, %v824
        %v4347 = vsub.f32 %v4315, %v4339
        %v4348 = vsub.f32 %v4316, %v4340
        %v4349 = vsub.f32 %v4317, %v4341
        %v4350 = vsub.f32 %v4318, %v4342
        %v4351 = vsub.f32 %v4319, %v4343
        %v4352 = vsub.f32 %v4320, %v4344
        %v4353 = vsub.f32 %v4321, %v4345
        %v4354 = vsub.f32 %v4322, %v4346
        %v4355 = vmul.f32 %v4347, %v4347
        %v4356 = vmul.f32 %v4348, %v4348
        %v4357 = vmul.f32 %v4349, %v4349
        %v4358 = vmul.f32 %v4350, %v4350
        %v4359 = vmul.f32 %v4351, %v4351
        %v4360 = vmul.f32 %v4352, %v4352
        %v4361 = vmul.f32 %v4353, %v4353
        %v4362 = vmul.f32 %v4354, %v4354
        %4363 = vadd.xlane.f32.xlu0 %v4355
        %v4364 = vpop.xlane.xlu0 %4363
        %4365 = vadd.xlane.f32.xlu0 %v4356
        %v4366 = vpop.xlane.xlu0 %4365
        %4367 = vadd.xlane.f32.xlu0 %v4357
        %v4368 = vpop.xlane.xlu0 %4367
        %4369 = vadd.xlane.f32.xlu0 %v4358
        %v4370 = vpop.xlane.xlu0 %4369
        %4371 = vadd.xlane.f32.xlu0 %v4359
        %v4372 = vpop.xlane.xlu0 %4371
        %4373 = vadd.xlane.f32.xlu0 %v4360
        %v4374 = vpop.xlane.xlu0 %4373
        %4375 = vadd.xlane.f32.xlu0 %v4361
        %v4376 = vpop.xlane.xlu0 %4375
        %4377 = vadd.xlane.f32.xlu0 %v4362
        %v4378 = vpop.xlane.xlu0 %4377
        %v4379 = vmul.f32 %v4364, 0.007874016
        %v4380 = vmul.f32 %v4366, 0.007874016
        %v4381 = vmul.f32 %v4368, 0.007874016
        %v4382 = vmul.f32 %v4370, 0.007874016
        %v4383 = vmul.f32 %v4372, 0.007874016
        %v4384 = vmul.f32 %v4374, 0.007874016
        %v4385 = vmul.f32 %v4376, 0.007874016
        %v4386 = vmul.f32 %v4378, 0.007874016
        %v4387 = vrsqrt.pop %v4379
        %v4388 = vmul.f32 %v4379, %v4387
        %vm4389 = vcmp.eq.f32.partialorder %v4379, inf
        %v4390 = vsel %vm4389, %v4379, %v4388
        %vm4391 = vcmp.eq.f32.partialorder %v4379, 0.0
        %v4392 = vand.u32 %v4379, 2147483648
        %v4393 = vsel %vm4391, %v4392, %v4390
        %v4394 = vrsqrt.pop %v4380
        %v4395 = vmul.f32 %v4380, %v4394
        %vm4396 = vcmp.eq.f32.partialorder %v4380, inf
        %v4397 = vsel %vm4396, %v4380, %v4395
        %vm4398 = vcmp.eq.f32.partialorder %v4380, 0.0
        %v4399 = vand.u32 %v4380, 2147483648
        %v4400 = vsel %vm4398, %v4399, %v4397
        %v4401 = vrsqrt.pop %v4381
        %v4402 = vmul.f32 %v4381, %v4401
        %vm4403 = vcmp.eq.f32.partialorder %v4381, inf
        %v4404 = vsel %vm4403, %v4381, %v4402
        %vm4405 = vcmp.eq.f32.partialorder %v4381, 0.0
        %v4406 = vand.u32 %v4381, 2147483648
        %v4407 = vsel %vm4405, %v4406, %v4404
        %v4408 = vrsqrt.pop %v4382
        %v4409 = vmul.f32 %v4382, %v4408
        %vm4410 = vcmp.eq.f32.partialorder %v4382, inf
        %v4411 = vsel %vm4410, %v4382, %v4409
        %vm4412 = vcmp.eq.f32.partialorder %v4382, 0.0
        %v4413 = vand.u32 %v4382, 2147483648
        %v4414 = vsel %vm4412, %v4413, %v4411
        %v4415 = vrsqrt.pop %v4383
        %v4416 = vmul.f32 %v4383, %v4415
        %vm4417 = vcmp.eq.f32.partialorder %v4383, inf
        %v4418 = vsel %vm4417, %v4383, %v4416
        %vm4419 = vcmp.eq.f32.partialorder %v4383, 0.0
        %v4420 = vand.u32 %v4383, 2147483648
        %v4421 = vsel %vm4419, %v4420, %v4418
        %v4422 = vrsqrt.pop %v4384
        %v4423 = vmul.f32 %v4384, %v4422
        %vm4424 = vcmp.eq.f32.partialorder %v4384, inf
        %v4425 = vsel %vm4424, %v4384, %v4423
        %vm4426 = vcmp.eq.f32.partialorder %v4384, 0.0
        %v4427 = vand.u32 %v4384, 2147483648
        %v4428 = vsel %vm4426, %v4427, %v4425
        %v4429 = vrsqrt.pop %v4385
        %v4430 = vmul.f32 %v4385, %v4429
        %vm4431 = vcmp.eq.f32.partialorder %v4385, inf
        %v4432 = vsel %vm4431, %v4385, %v4430
        %vm4433 = vcmp.eq.f32.partialorder %v4385, 0.0
        %v4434 = vand.u32 %v4385, 2147483648
        %v4435 = vsel %vm4433, %v4434, %v4432
        %v4436 = vrsqrt.pop %v4386
        %v4437 = vmul.f32 %v4386, %v4436
        %vm4438 = vcmp.eq.f32.partialorder %v4386, inf
        %v4439 = vsel %vm4438, %v4386, %v4437
        %vm4440 = vcmp.eq.f32.partialorder %v4386, 0.0
        %v4441 = vand.u32 %v4386, 2147483648
        %v4442 = vsel %vm4440, %v4441, %v4439
        %v4443 = vld [vmem:[%s17] sm:$0x1]
        %v4445 = vlaneseq
        %v4446 = vshrl.u32 %v4445, 7
        %v4447 = vsub.s32 0, %v4446
        %v4448 = vrot.slane %v4443, %v4447
        %v4450 = vmul.f32 %v4448, %v4347
        %v4451 = vmul.f32 %v4448, %v4348
        %v4452 = vmul.f32 %v4448, %v4349
        %v4453 = vmul.f32 %v4448, %v4350
        %v4454 = vmul.f32 %v4448, %v4351
        %v4455 = vmul.f32 %v4448, %v4352
        %v4456 = vmul.f32 %v4448, %v4353
        %v4457 = vmul.f32 %v4448, %v4354
        %v4458 = vadd.f32 %v4393, 1e-06
        %v4459 = vadd.f32 %v4400, 1e-06
        %v4460 = vadd.f32 %v4407, 1e-06
        %v4461 = vadd.f32 %v4414, 1e-06
        %v4462 = vadd.f32 %v4421, 1e-06
        %v4463 = vadd.f32 %v4428, 1e-06
        %v4464 = vadd.f32 %v4435, 1e-06
        %v4465 = vadd.f32 %v4442, 1e-06
        %v4466 = vrcp.pop %v4458
        %v4467 = vrcp.pop %v4459
        %v4468 = vrcp.pop %v4460
        %v4469 = vrcp.pop %v4461
        %v4470 = vrcp.pop %v4462
        %v4471 = vrcp.pop %v4463
        %v4472 = vrcp.pop %v4464
        %v4473 = vrcp.pop %v4465
        %v4474 = vmul.f32 %v4450, %v4466
        %v4475 = vmul.f32 %v4451, %v4467
        %v4476 = vmul.f32 %v4452, %v4468
        %v4477 = vmul.f32 %v4453, %v4469
        %v4478 = vmul.f32 %v4454, %v4470
        %v4479 = vmul.f32 %v4455, %v4471
        %v4480 = vmul.f32 %v4456, %v4472
        %v4481 = vmul.f32 %v4457, %v4473
        %v4482 = vld [vmem:[%s18] sm:$0x1]
        %v4484 = vlaneseq
        %v4485 = vshrl.u32 %v4484, 7
        %v4486 = vsub.s32 0, %v4485
        %v4487 = vrot.slane %v4482, %v4486
        %v4489 = vadd.f32 %v4474, %v4487
        %v4490 = vadd.f32 %v4475, %v4487
        %v4491 = vadd.f32 %v4476, %v4487
        %v4492 = vadd.f32 %v4477, %v4487
        %v4493 = vadd.f32 %v4478, %v4487
        %v4494 = vadd.f32 %v4479, %v4487
        %v4495 = vadd.f32 %v4480, %v4487
        %v4496 = vadd.f32 %v4481, %v4487
        %v4497 = vpack.c.bf16 %v4490, %v4489
        %v4498 = vpack.c.bf16 %v4492, %v4491
        %v4499 = vpack.c.bf16 %v4494, %v4493
        %v4500 = vpack.c.bf16 %v4496, %v4495
        %v4501 = vld [vmem:[#allocation13] sm:$0xff]
        %v4502 = vld [vmem:[#allocation13 + $0x8] sm:$0xff]
        %v4503 = vld [vmem:[#allocation13 + $0x10] sm:$0xff]
        %v4504 = vld [vmem:[#allocation13 + $0x18] sm:$0xff]
        %v4505 = vld [vmem:[#allocation13 + $0x20] sm:$0xff]
        %v4506 = vld [vmem:[#allocation13 + $0x28] sm:$0xff]
        %v4507 = vld [vmem:[#allocation13 + $0x30] sm:$0xff]
        %v4508 = vld [vmem:[#allocation13 + $0x38] sm:$0xff]
        %v4509 = vld [vmem:[#allocation13 + $0x40] sm:$0xff]
        %v4510 = vld [vmem:[#allocation13 + $0x48] sm:$0xff]
        %v4511 = vld [vmem:[#allocation13 + $0x50] sm:$0xff]
        %v4512 = vld [vmem:[#allocation13 + $0x58] sm:$0xff]
        %v4513 = vld [vmem:[#allocation13 + $0x60] sm:$0xff]
        %v4514 = vld [vmem:[#allocation13 + $0x68] sm:$0xff]
        %v4515 = vld [vmem:[#allocation13 + $0x70] sm:$0xff]
        %v4516 = vld [vmem:[#allocation13 + $0x78] sm:$0xff]
        %v4517 = vld [vmem:[%s12] sm:$0x3]
        %v4519 = vlaneseq
        %v4520 = vshrl.u32 %v4519, 7
        %v4521 = vsub.s32 0, %v4520
        %v4522 = vrot.slane %v4517, %v4521
        %v4523 = vlaneseq
        %v4524 = vshrl.u32 %v4523, 7
        %v4525 = vsub.s32 1, %v4524
        %v4526 = vrot.slane %v4517, %v4525
        %v4545 = vunpack.c.l.b16 %v4501
        %v4546 = vunpack.c.h.b16 %v4501
        %v4547 = vunpack.c.l.b16 %v4502
        %v4548 = vunpack.c.h.b16 %v4502
        %v4549 = vunpack.c.l.b16 %v4503
        %v4550 = vunpack.c.h.b16 %v4503
        %v4551 = vunpack.c.l.b16 %v4504
        %v4552 = vunpack.c.h.b16 %v4504
        %v4553 = vunpack.c.l.b16 %v4505
        %v4554 = vunpack.c.h.b16 %v4505
        %v4555 = vunpack.c.l.b16 %v4506
        %v4556 = vunpack.c.h.b16 %v4506
        %v4557 = vunpack.c.l.b16 %v4507
        %v4558 = vunpack.c.h.b16 %v4507
        %v4559 = vunpack.c.l.b16 %v4508
        %v4560 = vunpack.c.h.b16 %v4508
        %v4561 = vunpack.c.l.b16 %v4509
        %v4562 = vunpack.c.h.b16 %v4509
        %v4563 = vunpack.c.l.b16 %v4510
        %v4564 = vunpack.c.h.b16 %v4510
        %v4565 = vunpack.c.l.b16 %v4511
        %v4566 = vunpack.c.h.b16 %v4511
        %v4567 = vunpack.c.l.b16 %v4512
        %v4568 = vunpack.c.h.b16 %v4512
        %v4569 = vunpack.c.l.b16 %v4513
        %v4570 = vunpack.c.h.b16 %v4513
        %v4571 = vunpack.c.l.b16 %v4514
        %v4572 = vunpack.c.h.b16 %v4514
        %v4573 = vunpack.c.l.b16 %v4515
        %v4574 = vunpack.c.h.b16 %v4515
        %v4575 = vunpack.c.l.b16 %v4516
        %v4576 = vunpack.c.h.b16 %v4516
        %v4577 = vpack.c.b16 %v4547, %v4545
        %v4578 = vpack.c.b16 %v4548, %v4546
        %v4579 = vpack.c.b16 %v4551, %v4549
        %v4580 = vpack.c.b16 %v4552, %v4550
        %v4581 = vpack.c.b16 %v4555, %v4553
        %v4582 = vpack.c.b16 %v4556, %v4554
        %v4583 = vpack.c.b16 %v4559, %v4557
        %v4584 = vpack.c.b16 %v4560, %v4558
        %v4585 = vpack.c.b16 %v4563, %v4561
        %v4586 = vpack.c.b16 %v4564, %v4562
        %v4587 = vpack.c.b16 %v4567, %v4565
        %v4588 = vpack.c.b16 %v4568, %v4566
        %v4589 = vpack.c.b16 %v4571, %v4569
        %v4590 = vpack.c.b16 %v4572, %v4570
        %v4591 = vpack.c.b16 %v4575, %v4573
        %v4592 = vpack.c.b16 %v4576, %v4574
        %4609 = vmatprep.subr.bf16.mxu0 %v4578
        %4610 = vmatpush1.bf16.msra.mxu0 %v4577
        %4611 = vmatprep.subr.bf16.mxu0 %v4580
        %4612 = vmatpush1.bf16.msra.mxu0 %v4579
        %4613 = vmatprep.subr.bf16.mxu0 %v4582
        %4614 = vmatpush1.bf16.msra.mxu0 %v4581
        %4615 = vmatprep.subr.bf16.mxu0 %v4584
        %4616 = vmatpush1.bf16.msra.mxu0 %v4583
        %4617 = vmatprep.subr.bf16.mxu0 %v4586
        %4618 = vmatpush1.bf16.msra.mxu0 %v4585
        %4619 = vmatprep.subr.bf16.mxu0 %v4588
        %4620 = vmatpush1.bf16.msra.mxu0 %v4587
        %4621 = vmatprep.subr.bf16.mxu0 %v4590
        %4622 = vmatpush1.bf16.msra.mxu0 %v4589
        %4623 = vmatprep.subr.bf16.mxu0 %v4592
        %4624 = vmatpush1.bf16.msra.mxu0 %v4591
        %4625 = vmatprep.subr.bf16.mxu0 0
        %4626 = vmatpush1.bf16.msra.mxu0 0
        %4627 = vmatprep.subr.bf16.mxu0 0
        %4628 = vmatpush1.bf16.msra.mxu0 0
        %4629 = vmatprep.subr.bf16.mxu0 0
        %4630 = vmatpush1.bf16.msra.mxu0 0
        %4631 = vmatprep.subr.bf16.mxu0 0
        %4632 = vmatpush1.bf16.msra.mxu0 0
        %4633 = vmatprep.subr.bf16.mxu0 0
        %4634 = vmatpush1.bf16.msra.mxu0 0
        %4635 = vmatprep.subr.bf16.mxu0 0
        %4636 = vmatpush1.bf16.msra.mxu0 0
        %4637 = vmatprep.subr.bf16.mxu0 0
        %4638 = vmatpush1.bf16.msra.mxu0 0
        %4639 = vmatprep.subr.bf16.mxu0 0
        %4640 = vmatpush1.bf16.msra.mxu0 0
        %4641 = vmatprep.mubr.bf16.mxu0 0
        %4642 = vmatmul.mubr.bf16.gmra.mrb[0].mxu0 %v4497
        %v4643 = vpop.f32.mrb[0].mxu0
        %v4644 = vadd.f32 %v4522, %v4643
        %v4645 = vpop.f32.mrb[0].mxu0
        %v4646 = vadd.f32 %v4526, %v4645
        %v4647 = vpop.f32.mrb[0].mxu0
        %v4648 = vadd.f32 %v4522, %v4647
        %v4649 = vpop.f32.mrb[0].mxu0
        %v4650 = vadd.f32 %v4526, %v4649
        %4651 = vmatprep.mubr.bf16.mxu0 0
        %4652 = vmatmul.mubr.bf16.gmra.mrb[0].mxu0 %v4498
        %v4653 = vpop.f32.mrb[0].mxu0
        %v4654 = vadd.f32 %v4522, %v4653
        %v4655 = vpop.f32.mrb[0].mxu0
        %v4656 = vadd.f32 %v4526, %v4655
        %v4657 = vpop.f32.mrb[0].mxu0
        %v4658 = vadd.f32 %v4522, %v4657
        %v4659 = vpop.f32.mrb[0].mxu0
        %v4660 = vadd.f32 %v4526, %v4659
        %4661 = vmatprep.mubr.bf16.mxu0 0
        %4662 = vmatmul.mubr.bf16.gmra.mrb[0].mxu0 %v4499
        %v4663 = vpop.f32.mrb[0].mxu0
        %v4664 = vadd.f32 %v4522, %v4663
        %v4665 = vpop.f32.mrb[0].mxu0
        %v4666 = vadd.f32 %v4526, %v4665
        %v4667 = vpop.f32.mrb[0].mxu0
        %v4668 = vadd.f32 %v4522, %v4667
        %v4669 = vpop.f32.mrb[0].mxu0
        %v4670 = vadd.f32 %v4526, %v4669
        %4671 = vmatprep.mubr.bf16.mxu0 0
        %4672 = vmatmul.mubr.bf16.gmra.mrb[0].mxu0 %v4500
        %v4673 = vpop.f32.mrb[0].mxu0
        %v4674 = vadd.f32 %v4522, %v4673
        %v4675 = vpop.f32.mrb[0].mxu0
        %v4676 = vadd.f32 %v4526, %v4675
        %v4677 = vpop.f32.mrb[0].mxu0
        %v4678 = vadd.f32 %v4522, %v4677
        %v4679 = vpop.f32.mrb[0].mxu0
        %v4680 = vadd.f32 %v4526, %v4679
        %4681 = vdwg.mxu0
        %v4682 = vmax.f32 %v4644, 0.0
        %v4683 = vmax.f32 %v4646, 0.0
        %v4684 = vmax.f32 %v4648, 0.0
        %v4685 = vmax.f32 %v4650, 0.0
        %v4686 = vmax.f32 %v4654, 0.0
        %v4687 = vmax.f32 %v4656, 0.0
        %v4688 = vmax.f32 %v4658, 0.0
        %v4689 = vmax.f32 %v4660, 0.0
        %v4690 = vmax.f32 %v4664, 0.0
        %v4691 = vmax.f32 %v4666, 0.0
        %v4692 = vmax.f32 %v4668, 0.0
        %v4693 = vmax.f32 %v4670, 0.0
        %v4694 = vmax.f32 %v4674, 0.0
        %v4695 = vmax.f32 %v4676, 0.0
        %v4696 = vmax.f32 %v4678, 0.0
        %v4697 = vmax.f32 %v4680, 0.0
        %v4698 = vpack.c.bf16 %v4684, %v4682
        %v4699 = vpack.c.bf16 %v4685, %v4683
        %v4700 = vpack.c.bf16 %v4688, %v4686
        %v4701 = vpack.c.bf16 %v4689, %v4687
        %v4702 = vpack.c.bf16 %v4692, %v4690
        %v4703 = vpack.c.bf16 %v4693, %v4691
        %v4704 = vpack.c.bf16 %v4696, %v4694
        %v4705 = vpack.c.bf16 %v4697, %v4695
        %v4706 = vld [vmem:[#allocation14] sm:$0xf]
        %v4707 = vld [vmem:[#allocation14 + $0x4] sm:$0xf]
        %v4708 = vld [vmem:[#allocation14 + $0x8] sm:$0xf]
        %v4709 = vld [vmem:[#allocation14 + $0xc] sm:$0xf]
        %v4710 = vld [vmem:[#allocation14 + $0x10] sm:$0xf]
        %v4711 = vld [vmem:[#allocation14 + $0x14] sm:$0xf]
        %v4712 = vld [vmem:[#allocation14 + $0x18] sm:$0xf]
        %v4713 = vld [vmem:[#allocation14 + $0x1c] sm:$0xf]
        %v4714 = vld [vmem:[#allocation14 + $0x20] sm:$0xf]
        %v4715 = vld [vmem:[#allocation14 + $0x24] sm:$0xf]
        %v4716 = vld [vmem:[#allocation14 + $0x28] sm:$0xf]
        %v4717 = vld [vmem:[#allocation14 + $0x2c] sm:$0xf]
        %v4718 = vld [vmem:[#allocation14 + $0x30] sm:$0xf]
        %v4719 = vld [vmem:[#allocation14 + $0x34] sm:$0xf]
        %v4720 = vld [vmem:[#allocation14 + $0x38] sm:$0xf]
        %v4721 = vld [vmem:[#allocation14 + $0x3c] sm:$0xf]
        %v4722 = vld [vmem:[#allocation14 + $0x40] sm:$0xf]
        %v4723 = vld [vmem:[#allocation14 + $0x44] sm:$0xf]
        %v4724 = vld [vmem:[#allocation14 + $0x48] sm:$0xf]
        %v4725 = vld [vmem:[#allocation14 + $0x4c] sm:$0xf]
        %v4726 = vld [vmem:[#allocation14 + $0x50] sm:$0xf]
        %v4727 = vld [vmem:[#allocation14 + $0x54] sm:$0xf]
        %v4728 = vld [vmem:[#allocation14 + $0x58] sm:$0xf]
        %v4729 = vld [vmem:[#allocation14 + $0x5c] sm:$0xf]
        %v4730 = vld [vmem:[#allocation14 + $0x60] sm:$0xf]
        %v4731 = vld [vmem:[#allocation14 + $0x64] sm:$0xf]
        %v4732 = vld [vmem:[#allocation14 + $0x68] sm:$0xf]
        %v4733 = vld [vmem:[#allocation14 + $0x6c] sm:$0xf]
        %v4734 = vld [vmem:[#allocation14 + $0x70] sm:$0xf]
        %v4735 = vld [vmem:[#allocation14 + $0x74] sm:$0xf]
        %v4736 = vld [vmem:[#allocation14 + $0x78] sm:$0xf]
        %v4737 = vld [vmem:[#allocation14 + $0x7c] sm:$0xf]
        %v4738 = vld [vmem:[%s14] sm:$0x1]
        %v4740 = vlaneseq
        %v4741 = vshrl.u32 %v4740, 7
        %v4742 = vsub.s32 0, %v4741
        %v4743 = vrot.slane %v4738, %v4742
        %v4777 = vunpack.c.l.b16 %v4706
        %v4778 = vunpack.c.l.b16 %v4707
        %v4779 = vunpack.c.l.b16 %v4708
        %v4780 = vunpack.c.l.b16 %v4709
        %v4781 = vunpack.c.l.b16 %v4710
        %v4782 = vunpack.c.l.b16 %v4711
        %v4783 = vunpack.c.l.b16 %v4712
        %v4784 = vunpack.c.l.b16 %v4713
        %v4785 = vunpack.c.l.b16 %v4714
        %v4786 = vunpack.c.l.b16 %v4715
        %v4787 = vunpack.c.l.b16 %v4716
        %v4788 = vunpack.c.l.b16 %v4717
        %v4789 = vunpack.c.l.b16 %v4718
        %v4790 = vunpack.c.l.b16 %v4719
        %v4791 = vunpack.c.l.b16 %v4720
        %v4792 = vunpack.c.l.b16 %v4721
        %v4793 = vunpack.c.l.b16 %v4722
        %v4794 = vunpack.c.l.b16 %v4723
        %v4795 = vunpack.c.l.b16 %v4724
        %v4796 = vunpack.c.l.b16 %v4725
        %v4797 = vunpack.c.l.b16 %v4726
        %v4798 = vunpack.c.l.b16 %v4727
        %v4799 = vunpack.c.l.b16 %v4728
        %v4800 = vunpack.c.l.b16 %v4729
        %v4801 = vunpack.c.l.b16 %v4730
        %v4802 = vunpack.c.l.b16 %v4731
        %v4803 = vunpack.c.l.b16 %v4732
        %v4804 = vunpack.c.l.b16 %v4733
        %v4805 = vunpack.c.l.b16 %v4734
        %v4806 = vunpack.c.l.b16 %v4735
        %v4807 = vunpack.c.l.b16 %v4736
        %v4808 = vunpack.c.l.b16 %v4737
        %v4809 = vpack.c.b16 %v4778, %v4777
        %v4810 = vpack.c.b16 %v4780, %v4779
        %v4811 = vpack.c.b16 %v4782, %v4781
        %v4812 = vpack.c.b16 %v4784, %v4783
        %v4813 = vpack.c.b16 %v4786, %v4785
        %v4814 = vpack.c.b16 %v4788, %v4787
        %v4815 = vpack.c.b16 %v4790, %v4789
        %v4816 = vpack.c.b16 %v4792, %v4791
        %v4817 = vpack.c.b16 %v4794, %v4793
        %v4818 = vpack.c.b16 %v4796, %v4795
        %v4819 = vpack.c.b16 %v4798, %v4797
        %v4820 = vpack.c.b16 %v4800, %v4799
        %v4821 = vpack.c.b16 %v4802, %v4801
        %v4822 = vpack.c.b16 %v4804, %v4803
        %v4823 = vpack.c.b16 %v4806, %v4805
        %v4824 = vpack.c.b16 %v4808, %v4807
        %4841 = vmatprep.subr.bf16.mxu0 0
        %4842 = vmatpush1.bf16.msra.mxu0 %v4809
        %4843 = vmatprep.subr.bf16.mxu0 0
        %4844 = vmatpush1.bf16.msra.mxu0 %v4810
        %4845 = vmatprep.subr.bf16.mxu0 0
        %4846 = vmatpush1.bf16.msra.mxu0 %v4811
        %4847 = vmatprep.subr.bf16.mxu0 0
        %4848 = vmatpush1.bf16.msra.mxu0 %v4812
        %4849 = vmatprep.subr.bf16.mxu0 0
        %4850 = vmatpush1.bf16.msra.mxu0 %v4813
        %4851 = vmatprep.subr.bf16.mxu0 0
        %4852 = vmatpush1.bf16.msra.mxu0 %v4814
        %4853 = vmatprep.subr.bf16.mxu0 0
        %4854 = vmatpush1.bf16.msra.mxu0 %v4815
        %4855 = vmatprep.subr.bf16.mxu0 0
        %4856 = vmatpush1.bf16.msra.mxu0 %v4816
        %4857 = vmatprep.subr.bf16.mxu0 0
        %4858 = vmatpush1.bf16.msra.mxu0 %v4817
        %4859 = vmatprep.subr.bf16.mxu0 0
        %4860 = vmatpush1.bf16.msra.mxu0 %v4818
        %4861 = vmatprep.subr.bf16.mxu0 0
        %4862 = vmatpush1.bf16.msra.mxu0 %v4819
        %4863 = vmatprep.subr.bf16.mxu0 0
        %4864 = vmatpush1.bf16.msra.mxu0 %v4820
        %4865 = vmatprep.subr.bf16.mxu0 0
        %4866 = vmatpush1.bf16.msra.mxu0 %v4821
        %4867 = vmatprep.subr.bf16.mxu0 0
        %4868 = vmatpush1.bf16.msra.mxu0 %v4822
        %4869 = vmatprep.subr.bf16.mxu0 0
        %4870 = vmatpush1.bf16.msra.mxu0 %v4823
        %4871 = vmatprep.subr.bf16.mxu0 0
        %4872 = vmatpush1.bf16.msra.mxu0 %v4824
        %4873 = vmatprep.mubr.bf16.mxu0 %v4699
        %4874 = vmatmul.mubr.bf16.gmra.mrb[0].mxu0 %v4698
        %v4875 = vpop.f32.mrb[0].mxu0
        %v4876 = vadd.f32 %v4743, %v4875
        %v4877 = vpop.f32.mrb[0].mxu0
        %v4878 = vpop.f32.mrb[0].mxu0
        %v4879 = vadd.f32 %v4743, %v4878
        %v4880 = vpop.f32.mrb[0].mxu0
        %4881 = vmatprep.mubr.bf16.mxu0 %v4701
        %4882 = vmatmul.mubr.bf16.gmra.mrb[0].mxu0 %v4700
        %v4883 = vpop.f32.mrb[0].mxu0
        %v4884 = vadd.f32 %v4743, %v4883
        %v4885 = vpop.f32.mrb[0].mxu0
        %v4886 = vpop.f32.mrb[0].mxu0
        %v4887 = vadd.f32 %v4743, %v4886
        %v4888 = vpop.f32.mrb[0].mxu0
        %4889 = vmatprep.mubr.bf16.mxu0 %v4703
        %4890 = vmatmul.mubr.bf16.gmra.mrb[0].mxu0 %v4702
        %v4891 = vpop.f32.mrb[0].mxu0
        %v4892 = vadd.f32 %v4743, %v4891
        %v4893 = vpop.f32.mrb[0].mxu0
        %v4894 = vpop.f32.mrb[0].mxu0
        %v4895 = vadd.f32 %v4743, %v4894
        %v4896 = vpop.f32.mrb[0].mxu0
        %4897 = vmatprep.mubr.bf16.mxu0 %v4705
        %4898 = vmatmul.mubr.bf16.gmra.mrb[0].mxu0 %v4704
        %v4899 = vpop.f32.mrb[0].mxu0
        %v4900 = vadd.f32 %v4743, %v4899
        %v4901 = vpop.f32.mrb[0].mxu0
        %v4902 = vpop.f32.mrb[0].mxu0
        %v4903 = vadd.f32 %v4743, %v4902
        %v4904 = vpop.f32.mrb[0].mxu0
        %4905 = vdwg.mxu0
        %v4906 = vadd.f32 %v4315, %v4876
        %v4907 = vadd.f32 %v4316, %v4879
        %v4908 = vadd.f32 %v4317, %v4884
        %v4909 = vadd.f32 %v4318, %v4887
        %v4910 = vadd.f32 %v4319, %v4892
        %v4911 = vadd.f32 %v4320, %v4895
        %v4912 = vadd.f32 %v4321, %v4900
        %v4913 = vadd.f32 %v4322, %v4903
        %4914 = vst [vmem:[%s776] sm:$0xff] %v4906
        %4915 = vst [vmem:[%s776 + $0x8] sm:$0xff] %v4907
        %4916 = vst [vmem:[%s776 + $0x10] sm:$0xff] %v4908
        %4917 = vst [vmem:[%s776 + $0x18] sm:$0xff] %v4909
        %4918 = vst [vmem:[%s776 + $0x20] sm:$0xff] %v4910
        %4919 = vst [vmem:[%s776 + $0x28] sm:$0xff] %v4911
        %4920 = vst [vmem:[%s776 + $0x30] sm:$0xff] %v4912
        %4921 = vst [vmem:[%s776 + $0x38] sm:$0xff] %v4913
        %s4922 = sand.u32 %s480, 1
        %s4923 = scalar_lea.sflag [#allocation4], %s4922
        %s4924 = sand.u32 %s480, 1
        %s4925 = smul.addr %s4924, 64
        %s4926 = scalar_lea.vmem [#allocation16], %s4925
        // Predicated region
        $region129: #{tpu_custom_call.1} parent=95 // pred_check
          %p4927 = pneg %p490
        $region130: #{tpu_custom_call.1} parent=95 // pred_check_branch
          %4929 = sbr.rel (%p4927) target = $region132
        $region131: #{tpu_custom_call.1} parent=95 // pred_region
          %s4930 = smul.u32 8, %s47
          %s4932 = ssub.s32 1024, 1024
          %4933 = vsyncadd %s4923, %s4932
          %s4934 = smul.addr %s46, 16
          %s4935 = sadd.s32 %s4930, %s4934
          %s4936 = smul.addr %s4935, 128
          %s4937 = scalar_lea.hbm %s19, %s4936
          %s4938 = sshll.u32 %s4926, 4
          %s4939 = int_to_ptr.vmem [resolvable:$true] %s4938
          %4944 = dma.vmem_to_hbm [thread:$0]  %s4939, 1024, %s4937, %s4923, 128, 128, 8
        $region132: #{tpu_custom_call.1} parent=95 // pred_fallthru
          _
      $region96: #{tpu_custom_call.1} parent=5 // pred_fallthru
        _
      %p4945 = scmp.le.s32.totalorder 2, %s37
      // Predicated region
      $region133: #{tpu_custom_call.1} parent=5 // pred_check
        %p4946 = pneg %p4945
      $region134: #{tpu_custom_call.1} parent=5 // pred_check_branch
        %4948 = sbr.rel (%p4946) target = $region136
      $region135: #{tpu_custom_call.1} parent=5 // pred_region
        %s4949 = ssub.s32 %s37, 2
        // Predicated region
        $region137: #{tpu_custom_call.1} parent=135 // pred_check
          %p4950 = pneg %p496
        $region138: #{tpu_custom_call.1} parent=135 // pred_check_branch
          %4952 = sbr.rel (%p4950) target = $region140
        $region139: #{tpu_custom_call.1} parent=135 // pred_region
          %s4953 = sand.u32 %s481, 1
          %s4954 = scalar_lea.sflag [#allocation4], %s4953
          %s4955 = sand.u32 %s481, 1
          %s4956 = smul.addr %s4955, 64
          %s4957 = scalar_lea.vmem [#allocation16], %s4956
          %4958 = dma.done %s4954, 1024
        $region140: #{tpu_custom_call.1} parent=135 // pred_fallthru
          _
      $region136: #{tpu_custom_call.1} parent=5 // pred_fallthru
        _
    $region6: #{tpu_custom_call.1} parent=1 // loop_footer
      %s41 = sadd.s32 1, %s37
    $region7: #{tpu_custom_call.1} parent=1 // loop_footer_branch
      %36 = sbr.rel target = $region3
    $region8: #{tpu_custom_call.1} parent=1 // loop_exit
      _
    %4959 = vsyncpa [#allocation3], 1
    %s4960 = scalar_lea.sflag [#allocation3], 1
    %4961 = vsyncpa %s4960, 1
    %4962 = vsyncpa [#allocation6], 1
    %s4963 = scalar_lea.sflag [#allocation6], 1
    %4964 = vsyncpa %s4963, 1
    %4965 = vsyncpa [#allocation9], 1
    %4966 = vsyncpa [#allocation12], 1
    %4967 = vsyncpa [#allocation15], 1
    %4968 = vsyncpa [#allocation4], 1
    %s4969 = scalar_lea.sflag [#allocation4], 1
    %4970 = vsyncpa %s4969, 1

</llo_original>
